<compile_context>
chip_gen: v5e
topology: v5e:2x2
jax: 0.10.0
libtpu: 0.0.40
codegen_flags: <defaults>
</compile_context>

<pallas_src>
import functools

import jax
import jax.numpy as jnp
from jax.experimental import pallas as pl
from jax.experimental.pallas import tpu as pltpu


def _round_up(x, m):
    return (x + m - 1) // m * m


# ---------------------------------------------------------------------------
# Kernel body
# ---------------------------------------------------------------------------

def _conv_bn_impl(top_ref, body_ref, bot_ref, w_ref, scale_ref, bias_ref,
                  res_ref, o_ref, slab_ref, *, TH, Wp, Cin, TCout, W_valid):
    r = pl.program_id(1)           # row-tile index; grid = (n, r, c)
    nr = pl.num_programs(1)

    # ---- (TH+2, Wp, Cin) row-halo slab; clamped halo rows masked to zero.
    t = top_ref[0]                                      # (1, Wp, Cin)
    b = bot_ref[0]                                      # (1, Wp, Cin)
    top = jnp.where(r > 0, t, jnp.zeros_like(t))
    bot = jnp.where(r < nr - 1, b, jnp.zeros_like(b))
    center = jnp.concatenate([top, body_ref[0], bot], axis=0)   # (TH+2, Wp, Cin)

    # ---- K-fused slab: three column-shifted (kw) variants adjacent along
    # lanes so the conv becomes 3 matmuls with K = 3*Cin.  Shifts go through
    # the XLU (pltpu.roll, done in f32 for lowering robustness); the edge
    # columns (zero padding / roll wrap-around) are zeroed with a (1, Wp, 1)
    # column mask instead of a full-tile iota.
    col = jax.lax.broadcasted_iota(jnp.int32, (1, Wp, 1), 1)
    c32 = center.astype(jnp.float32)
    left = pltpu.roll(c32, shift=1, axis=1)             # left[w]  = center[w-1]
    right = pltpu.roll(c32, shift=Wp - 1, axis=1)       # right[w] = center[w+1]
    slab_ref[:, :, 0:Cin] = jnp.where(col > 0, left, 0.0).astype(center.dtype)
    slab_ref[:, :, Cin:2 * Cin] = center
    slab_ref[:, :, 2 * Cin:3 * Cin] = (
        jnp.where(col < Wp - 1, right, 0.0).astype(center.dtype))

    # ---- conv: 3 bf16 MXU matmuls of (TH*Wp, 3*Cin) x (3*Cin, TCout) with a
    # value-level f32 accumulation chain (no accumulator VMEM round trips).
    K = 3 * Cin
    acc = None
    for kh in range(3):
        patch = slab_ref[kh:kh + TH].reshape(TH * Wp, K)   # free reshape (Wp % 8 == 0)
        d = jnp.dot(patch, w_ref[kh], preferred_element_type=jnp.float32)
        acc = d if acc is None else acc + d

    # ---- epilogue: folded-BN affine (+ residual) + ReLU, single store.
    out = acc * scale_ref[...] + bias_ref[...]
    if res_ref is not None:
        out = out + res_ref[0].reshape(TH * Wp, TCout).astype(jnp.float32)
    out = jnp.maximum(out, 0.0).reshape(TH, Wp, TCout)
    if W_valid is not None and W_valid != Wp:
        # keep right-padding columns exactly zero (they feed the next conv)
        out = jnp.where(col < W_valid, out, 0.0)
    o_ref[0] = out.astype(o_ref.dtype)


def _conv_bn_relu_kernel(top_ref, body_ref, bot_ref, w_ref, scale_ref,
                         bias_ref, o_ref, slab_ref, **kw):
    _conv_bn_impl(top_ref, body_ref, bot_ref, w_ref, scale_ref, bias_ref,
                  None, o_ref, slab_ref, **kw)


def _conv_bn_add_relu_kernel(top_ref, body_ref, bot_ref, w_ref, scale_ref,
                             bias_ref, res_ref, o_ref, slab_ref, **kw):
    _conv_bn_impl(top_ref, body_ref, bot_ref, w_ref, scale_ref, bias_ref,
                  res_ref, o_ref, slab_ref, **kw)


# ---------------------------------------------------------------------------
# Generation-aware tile / VMEM sizing
# ---------------------------------------------------------------------------

def _vmem_budget():
    try:
        cap = int(pltpu.get_tpu_info().vmem_capacity_bytes)
    except Exception:
        cap = 64 << 20                     # conservative (v7x per-core) fallback
    # ~96 MiB usable on v5e/v6e (128 MiB), ~40 MiB on v7x (64 MiB).
    return max(24 << 20, min(int(cap * 0.65), 96 << 20))


def _ws_bytes(TH, Wp, Cinp, TCout, out_isize, has_res):
    """Per-step VMEM working set: double-buffered ins/outs + scratch + temps."""
    halo_in = (TH + 2) * Wp * Cinp * 2                  # top + body + bot, bf16
    w_b = 9 * Cinp * TCout * 2                           # weights, bf16
    vec_b = 2 * TCout * 4                                # scale + bias, f32
    res_b = TH * Wp * TCout * 2 if has_res else 0        # bf16 residual
    out_b = TH * Wp * TCout * out_isize
    scratch = (TH + 2) * Wp * 3 * Cinp * 2               # K-fused slab, bf16
    temps = TH * Wp * 3 * Cinp * 2 + 2 * TH * Wp * TCout * 4  # slices + f32 partials
    return 2 * (halo_in + w_b + vec_b + res_b + out_b) + scratch + temps


def _choose_tiles(H, Wp, Cinp, Coutp, out_isize, has_res, budget):
    """Pick (TH, TCout): biggest MXU M near target that fits the VMEM budget."""
    m_target = 1024 if budget >= (80 << 20) else 512 if budget >= (40 << 20) else 256
    divs = sorted({d for d in range(1, H + 1) if H % d == 0}, reverse=True)
    cands = []
    for c in (Coutp, 256, 128):
        if c <= Coutp and Coutp % c == 0 and c not in cands:
            cands.append(c)                 # prefer all of Cout in one tile
    for tcout in cands:
        fitting = [d for d in divs
                   if _ws_bytes(d, Wp, Cinp, tcout, out_isize, has_res) <= budget]
        if fitting:
            th = min(fitting, key=lambda d: (abs(d * Wp - m_target), -d))
            return th, tcout
    return 1, cands[-1]


# ---------------------------------------------------------------------------
# pallas_call wrapper for one fused stage
# ---------------------------------------------------------------------------

def _conv_bn_stage(x, w_k, scale, bias, *, residual, out_dtype, w_valid):
    """x: (N, H, Wp, Cinp) bf16; w_k: (3, 3*Cinp, Coutp) bf16 (K-fused);
    scale/bias: (1, Coutp) f32; residual: (N, H, Wp, Coutp) bf16 or None."""
    N, H, Wp, Cin = x.shape
    Coutp = w_k.shape[-1]
    out_isize = jnp.dtype(out_dtype).itemsize
    has_res = residual is not None

    budget = _vmem_budget()
    TH, TCout = _choose_tiles(H, Wp, Cin, Coutp, out_isize, has_res, budget)
    # Cout tile innermost: activation (and residual) blocks are not re-fetched
    # across it; only the small weight block changes per inner step.
    grid = (N, H // TH, Coutp // TCout)

    top_spec = pl.BlockSpec(
        (1, 1, Wp, Cin), lambda n, r, c: (n, jnp.maximum(r * TH - 1, 0), 0, 0))
    body_spec = pl.BlockSpec((1, TH, Wp, Cin), lambda n, r, c: (n, r, 0, 0))
    bot_spec = pl.BlockSpec(
        (1, 1, Wp, Cin), lambda n, r, c: (n, jnp.minimum(r * TH + TH, H - 1), 0, 0))
    w_spec = pl.BlockSpec((3, 3 * Cin, TCout), lambda n, r, c: (0, 0, c))
    vec_spec = pl.BlockSpec((1, TCout), lambda n, r, c: (0, c))
    io_spec = pl.BlockSpec((1, TH, Wp, TCout), lambda n, r, c: (n, r, 0, c))

    in_specs = [top_spec, body_spec, bot_spec, w_spec, vec_spec, vec_spec]
    args = [x, x, x, w_k, scale, bias]
    kw = dict(TH=TH, Wp=Wp, Cin=Cin, TCout=TCout, W_valid=w_valid)
    if has_res:
        kernel = functools.partial(_conv_bn_add_relu_kernel, **kw)
        in_specs.append(io_spec)
        args.append(residual)
    else:
        kernel = functools.partial(_conv_bn_relu_kernel, **kw)

    vmem_limit = int(max(32 << 20, min(
        budget, _ws_bytes(TH, Wp, Cin, TCout, out_isize, has_res) + (8 << 20))))

    return pl.pallas_call(
        kernel,
        out_shape=jax.ShapeDtypeStruct((N, H, Wp, Coutp), out_dtype),
        grid_spec=pltpu.PrefetchScalarGridSpec(
            num_scalar_prefetch=0,
            grid=grid,
            in_specs=in_specs,
            out_specs=io_spec,
            scratch_shapes=[pltpu.VMEM((TH + 2, Wp, 3 * Cin), x.dtype)],
        ),
        compiler_params=pltpu.CompilerParams(
            # megacore split lands on batch/row axes; the Cout-tile axis is
            # serial so both v7x cores don't duplicate the weight block.
            dimension_semantics=("parallel", "parallel", "arbitrary"),
            vmem_limit_bytes=vmem_limit,
        ),
    )(*args)


# ---------------------------------------------------------------------------
# ResidualBlock forward
# ---------------------------------------------------------------------------

def _fold_bn(gamma, beta, mean, var, conv_bias, eps=1e-5):
    """Fold BatchNorm (eval mode) + conv bias into per-channel scale/bias."""
    inv_std = 1.0 / jnp.sqrt(var + eps)
    scale = gamma * inv_std
    bias = beta + scale * (conv_bias - mean)
    return scale, bias


def _pad_to(a, shape):
    return jnp.pad(a, [(0, t - s) for s, t in zip(a.shape, shape)])


def residual_block_forward(x_nchw, params):
    """Mirrors ResidualBlock.forward.  Input NCHW (PyTorch convention)."""
    # TODO(synk): the NCHW<->NHWC transposes exist only to honour the PyTorch
    #             interface; in a real model keep activations NHWC end-to-end.
    x = jnp.transpose(x_nchw, (0, 2, 3, 1)).astype(jnp.float32)   # NCHW -> NHWC
    N, H, W, C = x.shape
    Cout = params["conv1_w"].shape[-1]
    assert C == Cout, "residual add requires in_channels == out_channels"

    Cp = _round_up(C, 128)          # lane-dense channels
    Wp = _round_up(W, 8)            # sublane-aligned width

    x_bf = _pad_to(x, (N, H, Wp, Cp)).astype(jnp.bfloat16)   # bf16 MXU / residual

    def prep_w(w):   # (3,3,Cin,Cout) -> padded, bf16, K-fused (3, 3*Cp, Cp)
        return _pad_to(w, (3, 3, Cp, Cp)).astype(jnp.bfloat16).reshape(3, 3 * Cp, Cp)

    w1 = prep_w(params["conv1_w"])
    w2 = prep_w(params["conv2_w"])

    s1, b1 = _fold_bn(params["bn1_gamma"], params["bn1_beta"],
                      params["bn1_mean"], params["bn1_var"], params["conv1_b"])
    s2, b2 = _fold_bn(params["bn2_gamma"], params["bn2_beta"],
                      params["bn2_mean"], params["bn2_var"], params["conv2_b"])
    s1 = _pad_to(s1.astype(jnp.float32), (Cp,)).reshape(1, Cp)
    b1 = _pad_to(b1.astype(jnp.float32), (Cp,)).reshape(1, Cp)
    s2 = _pad_to(s2.astype(jnp.float32), (Cp,)).reshape(1, Cp)
    b2 = _pad_to(b2.astype(jnp.float32), (Cp,)).reshape(1, Cp)

    # stage 1: relu(bn1(conv1(x)))  -> bf16, feeds stage-2 MXU directly
    h = _conv_bn_stage(x_bf, w1, s1, b1, residual=None,
                       out_dtype=jnp.bfloat16, w_valid=W)
    # stage 2: relu(bn2(conv2(h)) + x)   (residual streamed in bf16)
    # TODO(synk): on v5e the two stages could be fused into one kernel so the
    #             intermediate h never hits HBM (at ~2/TH row recompute cost).
    y = _conv_bn_stage(h, w2, s2, b2, residual=x_bf,
                       out_dtype=jnp.float32, w_valid=None)

    y = y[:, :, :W, :C]
    return jnp.transpose(y, (0, 3, 1, 2)).astype(x_nchw.dtype)    # NHWC -> NCHW


# ---------------------------------------------------------------------------
# Pure-JAX reference + demo
# ---------------------------------------------------------------------------

def _reference_forward(x_nchw, params):
    x = jnp.transpose(x_nchw, (0, 2, 3, 1))
    dn = jax.lax.conv_dimension_numbers(x.shape, params["conv1_w"].shape,
                                        ("NHWC", "HWIO", "NHWC"))

    def conv(inp, w, b):
        y = jax.lax.conv_general_dilated(inp, w, (1, 1), ((1, 1), (1, 1)),
                                         dimension_numbers=dn)
        return y + b

    def bn(y, g, be, m, v, eps=1e-5):
        return (y - m) / jnp.sqrt(v + eps) * g + be

    out = jax.nn.relu(bn(conv(x, params["conv1_w"], params["conv1_b"]),
                         params["bn1_gamma"], params["bn1_beta"],
                         params["bn1_mean"], params["bn1_var"]))
    out = bn(conv(out, params["conv2_w"], params["conv2_b"]),
             params["bn2_gamma"], params["bn2_beta"],
             params["bn2_mean"], params["bn2_var"])
    out = jax.nn.relu(out + x)
    return jnp.transpose(out, (0, 3, 1, 2))


def make_params(key, in_channels, out_channels):
    ks = jax.random.split(key, 10)
    return {
        "conv1_w": 0.1 * jax.random.normal(ks[0], (3, 3, in_channels, out_channels), jnp.float32),
        "conv1_b": 0.1 * jax.random.normal(ks[1], (out_channels,), jnp.float32),
        "conv2_w": 0.1 * jax.random.normal(ks[2], (3, 3, out_channels, out_channels), jnp.float32),
        "conv2_b": 0.1 * jax.random.normal(ks[3], (out_channels,), jnp.float32),
        "bn1_gamma": 1.0 + 0.1 * jax.random.normal(ks[4], (out_channels,), jnp.float32),
        "bn1_beta": 0.1 * jax.random.normal(ks[5], (out_channels,), jnp.float32),
        "bn1_mean": 0.1 * jax.random.normal(ks[6], (out_channels,), jnp.float32),
        "bn1_var": jnp.abs(1.0 + 0.1 * jax.random.normal(ks[7], (out_channels,), jnp.float32)),
        "bn2_gamma": 1.0 + 0.1 * jax.random.normal(ks[8], (out_channels,), jnp.float32),
        "bn2_beta": 0.1 * jax.random.normal(ks[9], (out_channels,), jnp.float32),
        "bn2_mean": jnp.zeros((out_channels,), jnp.float32),
        "bn2_var": jnp.ones((out_channels,), jnp.float32),
    }


if __name__ == "__main__":
    N, C, H, W = 2, 4, 16, 16   # in_channels == out_channels (residual requirement)
    key = jax.random.PRNGKey(0)
    kx, kp = jax.random.split(key)
    x = jax.random.normal(kx, (N, C, H, W), jnp.float32)   # NCHW, PyTorch convention
    params = make_params(kp, C, C)

    out = jax.block_until_ready(residual_block_forward(x, params))
    ref = jax.block_until_ready(_reference_forward(x, params))

    assert out.shape == (N, C, H, W), out.shape
    err = float(jnp.max(jnp.abs(out - ref)))
    # bf16 MXU operands + bf16-streamed residual vs f32 reference -> loose tol
    assert err < 6e-2, err
    print("KERNEL_OK")
</pallas_src>

<mosaic_0001>
module attributes {stable_mosaic.version = 11 : i64} {
  func.func @_conv_bn_relu_kernel(%arg0: i32, %arg1: i32, %arg2: i32, %arg3: memref<1x1x16x128xbf16, #tpu.memory_space<vmem>>, %arg4: memref<1x16x16x128xbf16, #tpu.memory_space<vmem>>, %arg5: memref<1x1x16x128xbf16, #tpu.memory_space<vmem>>, %arg6: memref<3x384x128xbf16, #tpu.memory_space<vmem>>, %arg7: memref<1x128xf32, #tpu.memory_space<vmem>>, %arg8: memref<1x128xf32, #tpu.memory_space<vmem>>, %arg9: memref<1x16x16x128xbf16, #tpu.memory_space<vmem>>, %arg10: memref<18x16x384xbf16, #tpu.memory_space<vmem>>) attributes {dimension_semantics = [#tpu.dimension_semantics<parallel>, #tpu.dimension_semantics<parallel>, #tpu.dimension_semantics<arbitrary>], iteration_bounds = array<i64: 2, 1, 1>, scalar_prefetch = 0 : i64, scratch_operands = 1 : i64, tpu.core_type = #tpu.core_type<tc>, window_params = [{transform_indices = @transform_0, window_bounds = array<i64: 1, 1, 16, 128>}, {transform_indices = @transform_1, window_bounds = array<i64: 1, 16, 16, 128>}, {transform_indices = @transform_2, window_bounds = array<i64: 1, 1, 16, 128>}, {transform_indices = @transform_3, window_bounds = array<i64: 3, 384, 128>}, {transform_indices = @transform_4, window_bounds = array<i64: 1, 128>}, {transform_indices = @transform_5, window_bounds = array<i64: 1, 128>}, {transform_indices = @transform_6, window_bounds = array<i64: 1, 16, 16, 128>}]} {
    %c0 = arith.constant 0 : index
    %c0_0 = arith.constant 0 : index
    %c0_1 = arith.constant 0 : index
    %c0_2 = arith.constant 0 : index
    %0 = vector.load %arg3[%c0, %c0_0, %c0_1, %c0_2] : memref<1x1x16x128xbf16, #tpu.memory_space<vmem>>, vector<1x1x16x128xbf16>
    %1 = vector.shape_cast %0 : vector<1x1x16x128xbf16> to vector<1x16x128xbf16>
    %c0_3 = arith.constant 0 : index
    %c0_4 = arith.constant 0 : index
    %c0_5 = arith.constant 0 : index
    %c0_6 = arith.constant 0 : index
    %2 = vector.load %arg5[%c0_3, %c0_4, %c0_5, %c0_6] : memref<1x1x16x128xbf16, #tpu.memory_space<vmem>>, vector<1x1x16x128xbf16>
    %3 = vector.shape_cast %2 : vector<1x1x16x128xbf16> to vector<1x16x128xbf16>
    %c0_i32 = arith.constant 0 : i32
    %4 = arith.cmpi sgt, %arg1, %c0_i32 : i32
    %cst = arith.constant 0.000000e+00 : bf16
    %5 = vector.broadcast %cst : bf16 to vector<1x16x128xbf16>
    %6 = arith.select %4, %1, %5 : vector<1x16x128xbf16>
    %c0_i32_7 = arith.constant 0 : i32
    %7 = arith.cmpi slt, %arg1, %c0_i32_7 : i32
    %cst_8 = arith.constant 0.000000e+00 : bf16
    %8 = vector.broadcast %cst_8 : bf16 to vector<1x16x128xbf16>
    %9 = arith.select %7, %3, %8 : vector<1x16x128xbf16>
    %c0_9 = arith.constant 0 : index
    %c0_10 = arith.constant 0 : index
    %c0_11 = arith.constant 0 : index
    %c0_12 = arith.constant 0 : index
    %10 = vector.load %arg4[%c0_9, %c0_10, %c0_11, %c0_12] : memref<1x16x16x128xbf16, #tpu.memory_space<vmem>>, vector<1x16x16x128xbf16>
    %11 = vector.shape_cast %10 : vector<1x16x16x128xbf16> to vector<16x16x128xbf16>
    %12 = tpu.concatenate %6, %11, %9 in 0 : vector<1x16x128xbf16>, vector<16x16x128xbf16>, vector<1x16x128xbf16> -> vector<18x16x128xbf16>
    %13 = tpu.iota {dimensions = array<i32: 1>} : vector<1x16x1xi32>
    %14 = arith.extf %12 : vector<18x16x128xbf16> to vector<18x16x128xf32>
    %c1_i32 = arith.constant 1 : i32
    %15 = tpu.dynamic_rotate %14 by %c1_i32 dim 1 : vector<18x16x128xf32>, i32 -> vector<18x16x128xf32>
    %c15_i32 = arith.constant 15 : i32
    %16 = tpu.dynamic_rotate %14 by %c15_i32 dim 1 : vector<18x16x128xf32>, i32 -> vector<18x16x128xf32>
    %c0_i32_13 = arith.constant 0 : i32
    %17 = vector.broadcast %c0_i32_13 : i32 to vector<1x16x1xi32>
    %18 = arith.cmpi sgt, %13, %17 : vector<1x16x1xi32>
    %cst_14 = arith.constant 0.000000e+00 : f32
    %19 = vector.shape_cast %18 : vector<1x16x1xi1> to vector<1x16x1xi1>
    %20 = vector.broadcast %19 : vector<1x16x1xi1> to vector<18x16x128xi1>
    %21 = vector.broadcast %cst_14 : f32 to vector<18x16x128xf32>
    %22 = arith.select %20, %15, %21 : vector<18x16x128xi1>, vector<18x16x128xf32>
    %23 = arith.truncf %22 : vector<18x16x128xf32> to vector<18x16x128xbf16>
    %c0_15 = arith.constant 0 : index
    %c0_16 = arith.constant 0 : index
    %c0_17 = arith.constant 0 : index
    %24 = vector.load %arg10[%c0_15, %c0_16, %c0_17] : memref<18x16x384xbf16, #tpu.memory_space<vmem>>, vector<18x16x128xbf16>
    tpu.vector_store %arg10[%c0_15, %c0_16, %c0_17], %23 {strides = array<i32>} : memref<18x16x384xbf16, #tpu.memory_space<vmem>>, vector<18x16x128xbf16>,
    %c0_18 = arith.constant 0 : index
    %c0_19 = arith.constant 0 : index
    %c128 = arith.constant 128 : index
    %25 = vector.load %arg10[%c0_18, %c0_19, %c128] : memref<18x16x384xbf16, #tpu.memory_space<vmem>>, vector<18x16x128xbf16>
    tpu.vector_store %arg10[%c0_18, %c0_19, %c128], %12 {strides = array<i32>} : memref<18x16x384xbf16, #tpu.memory_space<vmem>>, vector<18x16x128xbf16>,
    %c15_i32_20 = arith.constant 15 : i32
    %26 = vector.broadcast %c15_i32_20 : i32 to vector<1x16x1xi32>
    %27 = arith.cmpi slt, %13, %26 : vector<1x16x1xi32>
    %cst_21 = arith.constant 0.000000e+00 : f32
    %28 = vector.shape_cast %27 : vector<1x16x1xi1> to vector<1x16x1xi1>
    %29 = vector.broadcast %28 : vector<1x16x1xi1> to vector<18x16x128xi1>
    %30 = vector.broadcast %cst_21 : f32 to vector<18x16x128xf32>
    %31 = arith.select %29, %16, %30 : vector<18x16x128xi1>, vector<18x16x128xf32>
    %32 = arith.truncf %31 : vector<18x16x128xf32> to vector<18x16x128xbf16>
    %c0_22 = arith.constant 0 : index
    %c0_23 = arith.constant 0 : index
    %c256 = arith.constant 256 : index
    %33 = vector.load %arg10[%c0_22, %c0_23, %c256] : memref<18x16x384xbf16, #tpu.memory_space<vmem>>, vector<18x16x128xbf16>
    tpu.vector_store %arg10[%c0_22, %c0_23, %c256], %32 {strides = array<i32>} : memref<18x16x384xbf16, #tpu.memory_space<vmem>>, vector<18x16x128xbf16>,
    %c0_24 = arith.constant 0 : index
    %c0_25 = arith.constant 0 : index
    %c0_26 = arith.constant 0 : index
    %34 = vector.load %arg10[%c0_24, %c0_25, %c0_26] : memref<18x16x384xbf16, #tpu.memory_space<vmem>>, vector<16x16x384xbf16>
    %35 = vector.shape_cast %34 : vector<16x16x384xbf16> to vector<256x384xbf16>
    %c0_27 = arith.constant 0 : index
    %c0_28 = arith.constant 0 : index
    %c0_29 = arith.constant 0 : index
    %36 = vector.load %arg6[%c0_27, %c0_28, %c0_29] : memref<3x384x128xbf16, #tpu.memory_space<vmem>>, vector<1x384x128xbf16>
    %37 = vector.shape_cast %36 : vector<1x384x128xbf16> to vector<384x128xbf16>
    %cst_30 = arith.constant dense<0.000000e+00> : vector<256x128xf32>
    %38 = tpu.matmul %35, %37, %cst_30 {dimension_numbers = #tpu.dot_dimension_numbers<[1], [0], [0], [1], [0, 0, 1, 1], [], []>} : vector<256x384xbf16>, vector<384x128xbf16>, vector<256x128xf32> -> vector<256x128xf32>
    %c1 = arith.constant 1 : index
    %c0_31 = arith.constant 0 : index
    %c0_32 = arith.constant 0 : index
    %39 = vector.load %arg10[%c1, %c0_31, %c0_32] : memref<18x16x384xbf16, #tpu.memory_space<vmem>>, vector<16x16x384xbf16>
    %40 = vector.shape_cast %39 : vector<16x16x384xbf16> to vector<256x384xbf16>
    %c1_33 = arith.constant 1 : index
    %c0_34 = arith.constant 0 : index
    %c0_35 = arith.constant 0 : index
    %41 = vector.load %arg6[%c1_33, %c0_34, %c0_35] : memref<3x384x128xbf16, #tpu.memory_space<vmem>>, vector<1x384x128xbf16>
    %42 = vector.shape_cast %41 : vector<1x384x128xbf16> to vector<384x128xbf16>
    %cst_36 = arith.constant dense<0.000000e+00> : vector<256x128xf32>
    %43 = tpu.matmul %40, %42, %cst_36 {dimension_numbers = #tpu.dot_dimension_numbers<[1], [0], [0], [1], [0, 0, 1, 1], [], []>} : vector<256x384xbf16>, vector<384x128xbf16>, vector<256x128xf32> -> vector<256x128xf32>
    %44 = arith.addf %38, %43 : vector<256x128xf32>
    %c2 = arith.constant 2 : index
    %c0_37 = arith.constant 0 : index
    %c0_38 = arith.constant 0 : index
    %45 = vector.load %arg10[%c2, %c0_37, %c0_38] : memref<18x16x384xbf16, #tpu.memory_space<vmem>>, vector<16x16x384xbf16>
    %46 = vector.shape_cast %45 : vector<16x16x384xbf16> to vector<256x384xbf16>
    %c2_39 = arith.constant 2 : index
    %c0_40 = arith.constant 0 : index
    %c0_41 = arith.constant 0 : index
    %47 = vector.load %arg6[%c2_39, %c0_40, %c0_41] : memref<3x384x128xbf16, #tpu.memory_space<vmem>>, vector<1x384x128xbf16>
    %48 = vector.shape_cast %47 : vector<1x384x128xbf16> to vector<384x128xbf16>
    %cst_42 = arith.constant dense<0.000000e+00> : vector<256x128xf32>
    %49 = tpu.matmul %46, %48, %cst_42 {dimension_numbers = #tpu.dot_dimension_numbers<[1], [0], [0], [1], [0, 0, 1, 1], [], []>} : vector<256x384xbf16>, vector<384x128xbf16>, vector<256x128xf32> -> vector<256x128xf32>
    %50 = arith.addf %44, %49 : vector<256x128xf32>
    %c0_43 = arith.constant 0 : index
    %c0_44 = arith.constant 0 : index
    %51 = vector.load %arg7[%c0_43, %c0_44] : memref<1x128xf32, #tpu.memory_space<vmem>>, vector<1x128xf32>
    %52 = vector.broadcast %51 : vector<1x128xf32> to vector<256x128xf32>
    %53 = arith.mulf %50, %52 : vector<256x128xf32>
    %c0_45 = arith.constant 0 : index
    %c0_46 = arith.constant 0 : index
    %54 = vector.load %arg8[%c0_45, %c0_46] : memref<1x128xf32, #tpu.memory_space<vmem>>, vector<1x128xf32>
    %55 = vector.broadcast %54 : vector<1x128xf32> to vector<256x128xf32>
    %56 = arith.addf %53, %55 : vector<256x128xf32>
    %cst_47 = arith.constant 0.000000e+00 : f32
    %57 = vector.broadcast %cst_47 : f32 to vector<256x128xf32>
    %58 = arith.maximumf %56, %57 : vector<256x128xf32>
    %59 = vector.shape_cast %58 : vector<256x128xf32> to vector<16x16x128xf32>
    %60 = arith.truncf %59 : vector<16x16x128xf32> to vector<16x16x128xbf16>
    %c0_48 = arith.constant 0 : index
    %c0_49 = arith.constant 0 : index
    %c0_50 = arith.constant 0 : index
    %c0_51 = arith.constant 0 : index
    %61 = vector.load %arg9[%c0_48, %c0_49, %c0_50, %c0_51] : memref<1x16x16x128xbf16, #tpu.memory_space<vmem>>, vector<1x16x16x128xbf16>
    %62 = vector.shape_cast %61 : vector<1x16x16x128xbf16> to vector<16x16x128xbf16>
    %63 = vector.shape_cast %60 : vector<16x16x128xbf16> to vector<1x16x16x128xbf16>
    tpu.vector_store %arg9[%c0_48, %c0_49, %c0_50, %c0_51], %63 {strides = array<i32>} : memref<1x16x16x128xbf16, #tpu.memory_space<vmem>>, vector<1x16x16x128xbf16>,
    return
  }
  func.func @transform_0(%arg0: i32, %arg1: i32, %arg2: i32) -> (i32, i32, i32, i32) {
    %c16_i32 = arith.constant 16 : i32
    %0 = arith.muli %arg1, %c16_i32 : i32
    %c1_i32 = arith.constant 1 : i32
    %1 = arith.subi %0, %c1_i32 : i32
    %c0_i32 = arith.constant 0 : i32
    %2 = arith.maxsi %1, %c0_i32 : i32
    %c0_i32_0 = arith.constant 0 : i32
    %c0_i32_1 = arith.constant 0 : i32
    %c0_i32_2 = arith.constant 0 : i32
    return %arg0, %2, %c0_i32_0, %c0_i32_1 : i32, i32, i32, i32
  }
  func.func @transform_1(%arg0: i32, %arg1: i32, %arg2: i32) -> (i32, i32, i32, i32) {
    %c0_i32 = arith.constant 0 : i32
    %c0_i32_0 = arith.constant 0 : i32
    %c0_i32_1 = arith.constant 0 : i32
    return %arg0, %arg1, %c0_i32, %c0_i32_0 : i32, i32, i32, i32
  }
  func.func @transform_2(%arg0: i32, %arg1: i32, %arg2: i32) -> (i32, i32, i32, i32) {
    %c16_i32 = arith.constant 16 : i32
    %0 = arith.muli %arg1, %c16_i32 : i32
    %c16_i32_0 = arith.constant 16 : i32
    %1 = arith.addi %0, %c16_i32_0 : i32
    %c15_i32 = arith.constant 15 : i32
    %2 = arith.minsi %1, %c15_i32 : i32
    %c0_i32 = arith.constant 0 : i32
    %c0_i32_1 = arith.constant 0 : i32
    %c0_i32_2 = arith.constant 0 : i32
    return %arg0, %2, %c0_i32, %c0_i32_1 : i32, i32, i32, i32
  }
  func.func @transform_3(%arg0: i32, %arg1: i32, %arg2: i32) -> (i32, i32, i32) {
    %c0_i32 = arith.constant 0 : i32
    %c0_i32_0 = arith.constant 0 : i32
    %c0_i32_1 = arith.constant 0 : i32
    return %c0_i32, %c0_i32_0, %arg2 : i32, i32, i32
  }
  func.func @transform_4(%arg0: i32, %arg1: i32, %arg2: i32) -> (i32, i32) {
    %c0_i32 = arith.constant 0 : i32
    %c0_i32_0 = arith.constant 0 : i32
    return %c0_i32, %arg2 : i32, i32
  }
  func.func @transform_5(%arg0: i32, %arg1: i32, %arg2: i32) -> (i32, i32) {
    %c0_i32 = arith.constant 0 : i32
    %c0_i32_0 = arith.constant 0 : i32
    return %c0_i32, %arg2 : i32, i32
  }
  func.func @transform_6(%arg0: i32, %arg1: i32, %arg2: i32) -> (i32, i32, i32, i32) {
    %c0_i32 = arith.constant 0 : i32
    %c0_i32_0 = arith.constant 0 : i32
    return %arg0, %arg1, %c0_i32, %arg2 : i32, i32, i32, i32
  }
}

</mosaic_0001>

<llo_original>
// kernel: tpu_custom_call.1
$region0: #{tpu_custom_call.1}
  #allocation0 [shape = 'u32[]', space=smem, size = 0x4, offset = 0x4, fixed_abs, tag = 'smem constant byte address 0x4 - core index']
  #allocation1 [shape = 'u32[72,128]{1,0:T(1,128)}', space=vmem, size = 0x9000, scoped, tag = 'internal scratch']
  #allocation2 [shape = 'bf16[18,16,384]{2,1,0:T(8,128)(2,1)}', space=vmem, size = 0x36000, scoped, tag = 'scratch operand']
  %s0 = inlined_call_operand.hbm [shape: bf16[2,16,16,128], index: 0, kind: input, shape index: {}]
  %s1 = inlined_call_operand.hbm [shape: bf16[2,16,16,128], index: 1, kind: input, shape index: {}]
  %s2 = inlined_call_operand.hbm [shape: bf16[2,16,16,128], index: 2, kind: input, shape index: {}]
  %s3 = inlined_call_operand.hbm [shape: bf16[3,384,128], index: 3, kind: input, shape index: {}]
  %s4 = inlined_call_operand.vmem [shape: f32[1,128], index: 4, kind: input, shape index: {}]
  %s5 = inlined_call_operand.vmem [shape: f32[1,128], index: 5, kind: input, shape index: {}]
  %s6 = inlined_call_operand.hbm [shape: bf16[2,16,16,128], index: 6, kind: output, shape index: {}]
  %s7 = sld [smem:[#allocation0]]
  $region73: #{tpu_custom_call.1} parent=0
    _
  %s9 = ssub.s32 1, %s7
  %s10 = scalar_select 0, %s9, %s7
  $region1: #{tpu_custom_call.1} parent=0
    #allocation3 [shape = 'u8[8192]{0}', space=vmem, size = 0x2000, scoped, tag = 'input window, operand 0']
    #allocation4 [shape = 's32[2]{0}', space=sflag, size = 0x8, scoped, tag = 'scoped memory for tpu_custom_call.1']
    #allocation5 [shape = 's32[2]{0}', space=sflag, size = 0x8, scoped, tag = 'scoped memory for tpu_custom_call.1']
    #allocation6 [shape = 'u8[131072]{0}', space=vmem, size = 0x20000, scoped, tag = 'input window, operand 1']
    #allocation7 [shape = 's32[2]{0}', space=sflag, size = 0x8, scoped, tag = 'scoped memory for tpu_custom_call.1']
    #allocation8 [shape = 'u8[8192]{0}', space=vmem, size = 0x2000, scoped, tag = 'input window, operand 2']
    #allocation9 [shape = 'u8[294912]{0}', space=vmem, size = 0x48000, scoped, tag = 'input window, operand 3, single buffered']
    #allocation10 [shape = 's32[1]{0}', space=sflag, size = 0x4, scoped, tag = 'scoped memory for tpu_custom_call.1']
    #allocation11 [shape = 'u8[131072]{0}', space=vmem, size = 0x20000, scoped, tag = 'output window, operand 0']
    %11 = vsyncpa [#allocation4], 0
    %s12 = scalar_lea.sflag [#allocation4], 1
    %13 = vsyncpa %s12, 0
    %14 = vsyncpa [#allocation7], 0
    %s15 = scalar_lea.sflag [#allocation7], 1
    %16 = vsyncpa %s15, 0
    %17 = vsyncpa [#allocation10], 0
    %18 = vsyncpa [#allocation5], 0
    %s19 = scalar_lea.sflag [#allocation5], 1
    %20 = vsyncpa %s19, 0
    loop: start=0, step=1, limit=4
    $region2: #{tpu_custom_call.1} parent=1 // loop_pre_header
      _
    $region3: #{tpu_custom_call.1} parent=1 // loop_header
      %s22 = sphi 0, %s26
      %p23 = scmp.ge.s32.totalorder %s22, 4
      %s29 = sphi 0, %s48
      %s30 = sphi 0, %s44
      %s31 = sphi 0, %s40
      %s32 = sphi 0, %s29
      %s33 = sphi 0, %s30
      %s34 = sphi 0, %s31
      %s35 = sphi 0, %s32
      %s36 = sphi 0, %s33
      %s37 = sphi 0, %s34
      %s61 = sphi 0, %s63
      %s64 = sphi 0, %s61
      %s65 = sphi 0, %s64
      %s81 = sphi 0, %s65
      %s89 = sphi 0, %s91
      %s92 = sphi 0, %s89
      %s93 = sphi 0, %s92
      %s109 = sphi 0, %s93
      %s125 = sphi 0, %s127
      %s128 = sphi 0, %s125
      %s129 = sphi 0, %s128
      %s145 = sphi 0, %s129
      %s151 = sphi 0, %s153
      %s154 = sphi 0, %s151
      %s155 = sphi 0, %s154
      %s171 = sphi 0, %s155
      %s177 = sphi 0, %s179
      %s180 = sphi 0, %s177
      %s181 = sphi 0, %s180
      %s197 = sphi 0, %s181
      %s203 = sphi 0, %s205
      %s206 = sphi 0, %s203
      %s207 = sphi 0, %s206
      %s223 = sphi 0, %s207
      %s233 = sphi 0, %s235
      %s236 = sphi 0, %s233
      %s237 = sphi 0, %s236
      %s253 = sphi 0, %s237
    $region4: #{tpu_custom_call.1} parent=1 // loop_header_branch
      %25 = sbr.rel (%p23) target = $region8
    $region5: #{tpu_custom_call.1} parent=1 // loop_body
      %s27 = ssub.s32 %s22, 1
      %s28 = ssub.s32 %s22, 2
      %s38 = sadd.s32 1, %s31
      %p39 = scmp.ge.s32.totalorder %s38, 1
      %s40 = scalar_select %p39, 0, %s38
      %s41 = sadd.s32 1, %s30
      %s42 = scalar_select %p39, %s41, %s30
      %p43 = scmp.ge.s32.totalorder %s42, 1
      %s44 = scalar_select %p43, 0, %s42
      %s45 = sadd.s32 1, %s29
      %s46 = scalar_select %p43, %s45, %s29
      %p47 = scmp.ge.s32.totalorder %s46, 2
      %s48 = scalar_select %p47, 0, %s46
      %s49 = smul.u32 %s30, 16
      %s50 = ssub.s32 %s49, 1
      %p51 = scmp.gt.s32.totalorder %s50, 0
      %s52 = scalar_select %p51, %s50, 0
      %s53 = smul.u32 %s44, 16
      %s54 = ssub.s32 %s53, 1
      %p55 = scmp.gt.s32.totalorder %s54, 0
      %s56 = scalar_select %p55, %s54, 0
      %s57 = ssub.s32 %s29, %s48
      %s58 = ssub.s32 %s52, %s56
      %s59 = sor.u32 %s57, %s58
      %p60 = scmp.eq.s32.totalorder %s59, 0
      %s62 = sadd.s32 %s61, 1
      %s63 = scalar_select %p60, %s61, %s62
      %p66 = pneg %p60
      %p67 = scmp.eq.s32.totalorder %s22, 1
      %p68 = por %p66, %p67
      %p69 = scmp.ne.s32.totalorder %s61, %s64
      %p70 = scmp.eq.s32.totalorder %s22, 0
      %p71 = por %p69, %p70
      %p72 = scmp.ne.s32.totalorder %s61, %s64
      %p73 = scmp.eq.s32.totalorder %s27, 1
      %p74 = por %p72, %p73
      %p75 = scmp.ne.s32.totalorder %s64, %s65
      %p76 = scmp.eq.s32.totalorder %s27, 0
      %p77 = por %p75, %p76
      %p78 = scmp.ne.s32.totalorder %s64, %s65
      %p79 = scmp.eq.s32.totalorder %s28, 1
      %p80 = por %p78, %p79
      %p82 = scmp.ne.s32.totalorder %s65, %s81
      %p83 = scmp.eq.s32.totalorder %s28, 0
      %p84 = por %p82, %p83
      %s85 = ssub.s32 %s29, %s48
      %s86 = ssub.s32 %s30, %s44
      %s87 = sor.u32 %s85, %s86
      %p88 = scmp.eq.s32.totalorder %s87, 0
      %s90 = sadd.s32 %s89, 1
      %s91 = scalar_select %p88, %s89, %s90
      %p94 = pneg %p88
      %p95 = scmp.eq.s32.totalorder %s22, 1
      %p96 = por %p94, %p95
      %p97 = scmp.ne.s32.totalorder %s89, %s92
      %p98 = scmp.eq.s32.totalorder %s22, 0
      %p99 = por %p97, %p98
      %p100 = scmp.ne.s32.totalorder %s89, %s92
      %p101 = scmp.eq.s32.totalorder %s27, 1
      %p102 = por %p100, %p101
      %p103 = scmp.ne.s32.totalorder %s92, %s93
      %p104 = scmp.eq.s32.totalorder %s27, 0
      %p105 = por %p103, %p104
      %p106 = scmp.ne.s32.totalorder %s92, %s93
      %p107 = scmp.eq.s32.totalorder %s28, 1
      %p108 = por %p106, %p107
      %p110 = scmp.ne.s32.totalorder %s93, %s109
      %p111 = scmp.eq.s32.totalorder %s28, 0
      %p112 = por %p110, %p111
      %s113 = smul.u32 %s30, 16
      %s114 = sadd.s32 %s113, 16
      %p115 = scmp.lt.s32.totalorder %s114, 15
      %s116 = scalar_select %p115, %s114, 15
      %s117 = smul.u32 %s44, 16
      %s118 = sadd.s32 %s117, 16
      %p119 = scmp.lt.s32.totalorder %s118, 15
      %s120 = scalar_select %p119, %s118, 15
      %s121 = ssub.s32 %s29, %s48
      %s122 = ssub.s32 %s116, %s120
      %s123 = sor.u32 %s121, %s122
      %p124 = scmp.eq.s32.totalorder %s123, 0
      %s126 = sadd.s32 %s125, 1
      %s127 = scalar_select %p124, %s125, %s126
      %p130 = pneg %p124
      %p131 = scmp.eq.s32.totalorder %s22, 1
      %p132 = por %p130, %p131
      %p133 = scmp.ne.s32.totalorder %s125, %s128
      %p134 = scmp.eq.s32.totalorder %s22, 0
      %p135 = por %p133, %p134
      %p136 = scmp.ne.s32.totalorder %s125, %s128
      %p137 = scmp.eq.s32.totalorder %s27, 1
      %p138 = por %p136, %p137
      %p139 = scmp.ne.s32.totalorder %s128, %s129
      %p140 = scmp.eq.s32.totalorder %s27, 0
      %p141 = por %p139, %p140
      %p142 = scmp.ne.s32.totalorder %s128, %s129
      %p143 = scmp.eq.s32.totalorder %s28, 1
      %p144 = por %p142, %p143
      %p146 = scmp.ne.s32.totalorder %s129, %s145
      %p147 = scmp.eq.s32.totalorder %s28, 0
      %p148 = por %p146, %p147
      %s149 = ssub.s32 %s31, %s40
      %p150 = scmp.eq.s32.totalorder %s149, 0
      %s152 = sadd.s32 %s151, 1
      %s153 = scalar_select %p150, %s151, %s152
      %p156 = pneg %p150
      %p157 = scmp.eq.s32.totalorder %s22, 1
      %p158 = por %p156, %p157
      %p159 = scmp.ne.s32.totalorder %s151, %s154
      %p160 = scmp.eq.s32.totalorder %s22, 0
      %p161 = por %p159, %p160
      %p162 = scmp.ne.s32.totalorder %s151, %s154
      %p163 = scmp.eq.s32.totalorder %s27, 1
      %p164 = por %p162, %p163
      %p165 = scmp.ne.s32.totalorder %s154, %s155
      %p166 = scmp.eq.s32.totalorder %s27, 0
      %p167 = por %p165, %p166
      %p168 = scmp.ne.s32.totalorder %s154, %s155
      %p169 = scmp.eq.s32.totalorder %s28, 1
      %p170 = por %p168, %p169
      %p172 = scmp.ne.s32.totalorder %s155, %s171
      %p173 = scmp.eq.s32.totalorder %s28, 0
      %p174 = por %p172, %p173
      %s175 = ssub.s32 %s31, %s40
      %p176 = scmp.eq.s32.totalorder %s175, 0
      %s178 = sadd.s32 %s177, 1
      %s179 = scalar_select %p176, %s177, %s178
      %p182 = pneg %p176
      %p183 = scmp.eq.s32.totalorder %s22, 1
      %p184 = por %p182, %p183
      %p185 = scmp.ne.s32.totalorder %s177, %s180
      %p186 = scmp.eq.s32.totalorder %s22, 0
      %p187 = por %p185, %p186
      %p188 = scmp.ne.s32.totalorder %s177, %s180
      %p189 = scmp.eq.s32.totalorder %s27, 1
      %p190 = por %p188, %p189
      %p191 = scmp.ne.s32.totalorder %s180, %s181
      %p192 = scmp.eq.s32.totalorder %s27, 0
      %p193 = por %p191, %p192
      %p194 = scmp.ne.s32.totalorder %s180, %s181
      %p195 = scmp.eq.s32.totalorder %s28, 1
      %p196 = por %p194, %p195
      %p198 = scmp.ne.s32.totalorder %s181, %s197
      %p199 = scmp.eq.s32.totalorder %s28, 0
      %p200 = por %p198, %p199
      %s201 = ssub.s32 %s31, %s40
      %p202 = scmp.eq.s32.totalorder %s201, 0
      %s204 = sadd.s32 %s203, 1
      %s205 = scalar_select %p202, %s203, %s204
      %p208 = pneg %p202
      %p209 = scmp.eq.s32.totalorder %s22, 1
      %p210 = por %p208, %p209
      %p211 = scmp.ne.s32.totalorder %s203, %s206
      %p212 = scmp.eq.s32.totalorder %s22, 0
      %p213 = por %p211, %p212
      %p214 = scmp.ne.s32.totalorder %s203, %s206
      %p215 = scmp.eq.s32.totalorder %s27, 1
      %p216 = por %p214, %p215
      %p217 = scmp.ne.s32.totalorder %s206, %s207
      %p218 = scmp.eq.s32.totalorder %s27, 0
      %p219 = por %p217, %p218
      %p220 = scmp.ne.s32.totalorder %s206, %s207
      %p221 = scmp.eq.s32.totalorder %s28, 1
      %p222 = por %p220, %p221
      %p224 = scmp.ne.s32.totalorder %s207, %s223
      %p225 = scmp.eq.s32.totalorder %s28, 0
      %p226 = por %p224, %p225
      %s227 = ssub.s32 %s29, %s48
      %s228 = ssub.s32 %s30, %s44
      %s229 = sor.u32 %s227, %s228
      %s230 = ssub.s32 %s31, %s40
      %s231 = sor.u32 %s229, %s230
      %p232 = scmp.eq.s32.totalorder %s231, 0
      %s234 = sadd.s32 %s233, 1
      %s235 = scalar_select %p232, %s233, %s234
      %p238 = pneg %p232
      %p239 = scmp.eq.s32.totalorder %s22, 1
      %p240 = por %p238, %p239
      %p241 = scmp.ne.s32.totalorder %s233, %s236
      %p242 = scmp.eq.s32.totalorder %s22, 0
      %p243 = por %p241, %p242
      %p244 = scmp.ne.s32.totalorder %s233, %s236
      %p245 = scmp.eq.s32.totalorder %s27, 1
      %p246 = por %p244, %p245
      %p247 = scmp.ne.s32.totalorder %s236, %s237
      %p248 = scmp.eq.s32.totalorder %s27, 0
      %p249 = por %p247, %p248
      %p250 = scmp.ne.s32.totalorder %s236, %s237
      %p251 = scmp.eq.s32.totalorder %s28, 1
      %p252 = por %p250, %p251
      %p254 = scmp.ne.s32.totalorder %s237, %s253
      %p255 = scmp.eq.s32.totalorder %s28, 0
      %p256 = por %p254, %p255
      %p257 = scmp.le.s32.totalorder 1, %s22
      %p258 = scmp.lt.s32.totalorder %s22, 3
      %p259 = pnand %p257, %p258
      %p260 = pneg %p259
      // Predicated region
      $region9: #{tpu_custom_call.1} parent=5 // pred_check
        _
      $region10: #{tpu_custom_call.1} parent=5 // pred_check_branch
        %262 = sbr.rel (%p259) target = $region12
      $region11: #{tpu_custom_call.1} parent=5 // pred_region
        %s263 = ssub.s32 %s22, 1
        // Predicated region
        $region13: #{tpu_custom_call.1} parent=11 // pred_check
          %p264 = pneg %p167
        $region14: #{tpu_custom_call.1} parent=11 // pred_check_branch
          %266 = sbr.rel (%p264) target = $region16
        $region15: #{tpu_custom_call.1} parent=11 // pred_region
          %268 = vsyncadd [#allocation10], 0
          %s269 = smul.addr %s34, 4
          %s270 = scalar_lea.hbm %s3, %s269
          %s271 = sshll.u32 %s270, 4
          %s272 = int_to_ptr.hbm [resolvable:$true] %s271
          %s273 = sshll.u32 [#allocation9], 4
          %s274 = int_to_ptr.vmem [resolvable:$true] %s273
          %279 = dma.hbm_to_vmem [thread:$0]  %s272, 9216, %s274, [#allocation10], 64, 64, 4
        $region16: #{tpu_custom_call.1} parent=11 // pred_fallthru
          _
        // Predicated region
        $region17: #{tpu_custom_call.1} parent=11 // pred_check
          %p280 = pneg %p193
        $region18: #{tpu_custom_call.1} parent=11 // pred_check_branch
          %282 = sbr.rel (%p280) target = $region20
        $region19: #{tpu_custom_call.1} parent=11 // pred_region
          %p283 = scmp.lt.s32.totalorder %s34, 0
          %s284 = scalar_select %p283, %s34, 0
          %s285 = scalar_lea.vmem %s4, %s284
        $region20: #{tpu_custom_call.1} parent=11 // pred_fallthru
          _
        // Predicated region
        $region21: #{tpu_custom_call.1} parent=11 // pred_check
          %p286 = pneg %p219
        $region22: #{tpu_custom_call.1} parent=11 // pred_check_branch
          %288 = sbr.rel (%p286) target = $region24
        $region23: #{tpu_custom_call.1} parent=11 // pred_region
          %p289 = scmp.lt.s32.totalorder %s34, 0
          %s290 = scalar_select %p289, %s34, 0
          %s291 = scalar_lea.vmem %s5, %s290
        $region24: #{tpu_custom_call.1} parent=11 // pred_fallthru
          _
      $region12: #{tpu_custom_call.1} parent=5 // pred_fallthru
        _
      %p292 = scmp.lt.s32.totalorder %s22, 2
      // Predicated region
      $region25: #{tpu_custom_call.1} parent=5 // pred_check
        %p293 = pneg %p292
      $region26: #{tpu_custom_call.1} parent=5 // pred_check_branch
        %295 = sbr.rel (%p293) target = $region28
      $region27: #{tpu_custom_call.1} parent=5 // pred_region
        // Predicated region
        $region29: #{tpu_custom_call.1} parent=27 // pred_check
          %p296 = pneg %p71
        $region30: #{tpu_custom_call.1} parent=27 // pred_check_branch
          %298 = sbr.rel (%p296) target = $region32
        $region31: #{tpu_custom_call.1} parent=27 // pred_region
          %s299 = sand.u32 %s61, 1
          %s300 = scalar_lea.sflag [#allocation4], %s299
          %s301 = sand.u32 %s61, 1
          %s302 = smul.addr %s301, 8
          %s303 = scalar_lea.vmem [#allocation3], %s302
          %s304 = smul.u32 %s30, 16
          %s305 = ssub.s32 %s304, 1
          %p306 = scmp.gt.s32.totalorder %s305, 0
          %s307 = scalar_select %p306, %s305, 0
          %309 = vsyncadd %s300, 0
          %s310 = smul.addr %s307, 2
          %s311 = smul.addr %s29, 32
          %s312 = sadd.s32 %s310, %s311
          %s313 = smul.addr %s312, 4
          %s314 = scalar_lea.hbm %s0, %s313
          %s315 = sshll.u32 %s314, 4
          %s316 = int_to_ptr.hbm [resolvable:$true] %s315
          %s317 = sshll.u32 %s303, 4
          %s318 = int_to_ptr.vmem [resolvable:$true] %s317
          %323 = dma.hbm_to_vmem [thread:$0]  %s316, 128, %s318, %s300, 64, 64, 4
        $region32: #{tpu_custom_call.1} parent=27 // pred_fallthru
          _
        // Predicated region
        $region33: #{tpu_custom_call.1} parent=27 // pred_check
          %p324 = pneg %p99
        $region34: #{tpu_custom_call.1} parent=27 // pred_check_branch
          %326 = sbr.rel (%p324) target = $region36
        $region35: #{tpu_custom_call.1} parent=27 // pred_region
          %s327 = sand.u32 %s22, 1
          %s328 = scalar_lea.sflag [#allocation7], %s327
          %s329 = sand.u32 %s89, 1
          %s330 = smul.addr %s329, 128
          %s331 = scalar_lea.vmem [#allocation6], %s330
          %s332 = smul.u32 16, %s30
          %334 = vsyncadd %s328, 0
          %s335 = smul.addr %s332, 2
          %s336 = smul.addr %s29, 32
          %s337 = sadd.s32 %s335, %s336
          %s338 = smul.addr %s337, 4
          %s339 = scalar_lea.hbm %s1, %s338
          %s340 = sshll.u32 %s339, 4
          %s341 = int_to_ptr.hbm [resolvable:$true] %s340
          %s342 = sshll.u32 %s331, 4
          %s343 = int_to_ptr.vmem [resolvable:$true] %s342
          %348 = dma.hbm_to_vmem [thread:$0]  %s341, 2048, %s343, %s328, 64, 64, 4
        $region36: #{tpu_custom_call.1} parent=27 // pred_fallthru
          _
        // Predicated region
        $region37: #{tpu_custom_call.1} parent=27 // pred_check
          %p349 = pneg %p135
        $region38: #{tpu_custom_call.1} parent=27 // pred_check_branch
          %351 = sbr.rel (%p349) target = $region40
        $region39: #{tpu_custom_call.1} parent=27 // pred_region
          %s352 = sand.u32 %s22, 1
          %s353 = scalar_lea.sflag [#allocation7], %s352
          %s354 = sand.u32 %s125, 1
          %s355 = smul.addr %s354, 8
          %s356 = scalar_lea.vmem [#allocation8], %s355
          %s357 = smul.u32 %s30, 16
          %s358 = sadd.s32 %s357, 16
          %p359 = scmp.lt.s32.totalorder %s358, 15
          %s360 = scalar_select %p359, %s358, 15
          %362 = vsyncadd %s353, 0
          %s363 = smul.addr %s360, 2
          %s364 = smul.addr %s29, 32
          %s365 = sadd.s32 %s363, %s364
          %s366 = smul.addr %s365, 4
          %s367 = scalar_lea.hbm %s2, %s366
          %s368 = sshll.u32 %s367, 4
          %s369 = int_to_ptr.hbm [resolvable:$true] %s368
          %s370 = sshll.u32 %s356, 4
          %s371 = int_to_ptr.vmem [resolvable:$true] %s370
          %376 = dma.hbm_to_vmem [thread:$0]  %s369, 128, %s371, %s353, 64, 64, 4
        $region40: #{tpu_custom_call.1} parent=27 // pred_fallthru
          _
      $region28: #{tpu_custom_call.1} parent=5 // pred_fallthru
        _
      %p377 = scmp.le.s32.totalorder 1, %s22
      %p378 = scmp.lt.s32.totalorder %s22, 3
      %p379 = pnand %p377, %p378
      %p380 = pneg %p379
      // Predicated region
      $region41: #{tpu_custom_call.1} parent=5 // pred_check
        _
      $region42: #{tpu_custom_call.1} parent=5 // pred_check_branch
        %382 = sbr.rel (%p379) target = $region44
      $region43: #{tpu_custom_call.1} parent=5 // pred_region
        %s383 = ssub.s32 %s22, 1
        %s384 = sand.u32 %s64, 1
        %s385 = scalar_lea.sflag [#allocation4], %s384
        %s386 = sand.u32 %s64, 1
        %s387 = smul.addr %s386, 8
        %s388 = scalar_lea.vmem [#allocation3], %s387
        // Predicated region
        $region45: #{tpu_custom_call.1} parent=43 // pred_check
          %p389 = pneg %p77
        $region46: #{tpu_custom_call.1} parent=43 // pred_check_branch
          %391 = sbr.rel (%p389) target = $region48
        $region47: #{tpu_custom_call.1} parent=43 // pred_region
          %393 = dma.done %s385, 128
        $region48: #{tpu_custom_call.1} parent=43 // pred_fallthru
          _
        %s394 = sand.u32 %s27, 1
        %s395 = scalar_lea.sflag [#allocation7], %s394
        %s396 = sand.u32 %s92, 1
        %s397 = smul.addr %s396, 128
        %s398 = scalar_lea.vmem [#allocation6], %s397
        // Predicated region
        $region49: #{tpu_custom_call.1} parent=43 // pred_check
          %p399 = pneg %p105
        $region50: #{tpu_custom_call.1} parent=43 // pred_check_branch
          %401 = sbr.rel (%p399) target = $region52
        $region51: #{tpu_custom_call.1} parent=43 // pred_region
          %403 = dma.done %s395, 2048
        $region52: #{tpu_custom_call.1} parent=43 // pred_fallthru
          _
        %s404 = sand.u32 %s27, 1
        %s405 = scalar_lea.sflag [#allocation7], %s404
        %s406 = sand.u32 %s128, 1
        %s407 = smul.addr %s406, 8
        %s408 = scalar_lea.vmem [#allocation8], %s407
        // Predicated region
        $region53: #{tpu_custom_call.1} parent=43 // pred_check
          %p409 = pneg %p141
        $region54: #{tpu_custom_call.1} parent=43 // pred_check_branch
          %411 = sbr.rel (%p409) target = $region56
        $region55: #{tpu_custom_call.1} parent=43 // pred_region
          %413 = dma.done %s405, 128
        $region56: #{tpu_custom_call.1} parent=43 // pred_fallthru
          _
        // Predicated region
        $region57: #{tpu_custom_call.1} parent=43 // pred_check
          %p414 = pneg %p167
        $region58: #{tpu_custom_call.1} parent=43 // pred_check_branch
          %416 = sbr.rel (%p414) target = $region60
        $region59: #{tpu_custom_call.1} parent=43 // pred_region
          %418 = dma.done [#allocation10], 9216
        $region60: #{tpu_custom_call.1} parent=43 // pred_fallthru
          _
        %s419 = sand.u32 %s64, 1
        %s420 = scalar_lea.sflag [#allocation4], %s419
        %s421 = sand.u32 %s64, 1
        %s422 = smul.addr %s421, 8
        %s423 = scalar_lea.vmem [#allocation3], %s422
        %p424 = pneg %p77
        %p425 = pneg %p74
        %s426 = sand.u32 %s27, 1
        %s427 = scalar_lea.sflag [#allocation7], %s426
        %s428 = sand.u32 %s92, 1
        %s429 = smul.addr %s428, 128
        %s430 = scalar_lea.vmem [#allocation6], %s429
        %p431 = pneg %p105
        %p432 = pneg %p102
        %s433 = sand.u32 %s27, 1
        %s434 = scalar_lea.sflag [#allocation7], %s433
        %s435 = sand.u32 %s128, 1
        %s436 = smul.addr %s435, 8
        %s437 = scalar_lea.vmem [#allocation8], %s436
        %p438 = pneg %p141
        %p439 = pneg %p138
        %p440 = pneg %p167
        %p441 = pneg %p164
        %p442 = scmp.lt.s32.totalorder %s34, 0
        %s443 = scalar_select %p442, %s34, 0
        %s444 = scalar_lea.vmem %s4, %s443
        %p445 = pneg %p193
        %p446 = pneg %p190
        %p447 = scmp.lt.s32.totalorder %s34, 0
        %s448 = scalar_select %p447, %s34, 0
        %s449 = scalar_lea.vmem %s5, %s448
        %p450 = pneg %p219
        %p451 = pneg %p216
        %p452 = pneg %p249
        %p453 = pneg %p246
        %s454 = sand.u32 %s236, 1
        %s455 = scalar_lea.sflag [#allocation5], %s454
        %s456 = sand.u32 %s236, 1
        %s457 = smul.addr %s456, 128
        %s458 = scalar_lea.vmem [#allocation11], %s457
        %s459 = smul.u32 %s33, 16
        %s460 = ssub.s32 %s459, 1
        %p461 = scmp.gt.s32.totalorder %s460, 0
        %s462 = scalar_select %p461, %s460, 0
        %s463 = smul.u32 16, %s33
        %s464 = smul.u32 %s33, 16
        %s465 = sadd.s32 %s464, 16
        %p466 = scmp.lt.s32.totalorder %s465, 15
        %s467 = scalar_select %p466, %s465, 15
        %p468 = scmp.lt.s32.totalorder %s34, 0
        %s469 = scalar_select %p468, %s34, 0
        %s470 = scalar_lea.vmem %s4, %s469
        %p471 = scmp.lt.s32.totalorder %s34, 0
        %s472 = scalar_select %p471, %s34, 0
        %s473 = scalar_lea.vmem %s5, %s472
        %s474 = smul.u32 16, %s33
        %v476 = vld [vmem:[%s388] sm:$0xf]
        %v477 = vld [vmem:[%s388 + $0x4] sm:$0xf]
        %v478 = vld [vmem:[%s408] sm:$0xf]
        %v479 = vld [vmem:[%s408 + $0x4] sm:$0xf]
        %p480 = scmp.gt.s32.totalorder %s33, 0
        %s481 = scalar_select %p480, 1, 0
        %v482 = vstv %s481
        %vm483 = vcmp.eq.s32.totalorder %v482, 1
        %v484 = vsel %vm483, %v476, 0
        %v485 = vsel %vm483, %v477, 0
        %p486 = scmp.lt.s32.totalorder %s33, 0
        %s487 = scalar_select %p486, 1, 0
        %v488 = vstv %s487
        %vm489 = vcmp.eq.s32.totalorder %v488, 1
        %v490 = vsel %vm489, %v478, 0
        %v491 = vsel %vm489, %v479, 0
        %v492 = vld [vmem:[%s398] sm:$0xf]
        %v493 = vld [vmem:[%s398 + $0x4] sm:$0xf]
        %v494 = vld [vmem:[%s398 + $0x8] sm:$0xf]
        %v495 = vld [vmem:[%s398 + $0xc] sm:$0xf]
        %v496 = vld [vmem:[%s398 + $0x10] sm:$0xf]
        %v497 = vld [vmem:[%s398 + $0x14] sm:$0xf]
        %v498 = vld [vmem:[%s398 + $0x18] sm:$0xf]
        %v499 = vld [vmem:[%s398 + $0x1c] sm:$0xf]
        %v500 = vld [vmem:[%s398 + $0x20] sm:$0xf]
        %v501 = vld [vmem:[%s398 + $0x24] sm:$0xf]
        %v502 = vld [vmem:[%s398 + $0x28] sm:$0xf]
        %v503 = vld [vmem:[%s398 + $0x2c] sm:$0xf]
        %v504 = vld [vmem:[%s398 + $0x30] sm:$0xf]
        %v505 = vld [vmem:[%s398 + $0x34] sm:$0xf]
        %v506 = vld [vmem:[%s398 + $0x38] sm:$0xf]
        %v507 = vld [vmem:[%s398 + $0x3c] sm:$0xf]
        %v508 = vld [vmem:[%s398 + $0x40] sm:$0xf]
        %v509 = vld [vmem:[%s398 + $0x44] sm:$0xf]
        %v510 = vld [vmem:[%s398 + $0x48] sm:$0xf]
        %v511 = vld [vmem:[%s398 + $0x4c] sm:$0xf]
        %v512 = vld [vmem:[%s398 + $0x50] sm:$0xf]
        %v513 = vld [vmem:[%s398 + $0x54] sm:$0xf]
        %v514 = vld [vmem:[%s398 + $0x58] sm:$0xf]
        %v515 = vld [vmem:[%s398 + $0x5c] sm:$0xf]
        %v516 = vld [vmem:[%s398 + $0x60] sm:$0xf]
        %v517 = vld [vmem:[%s398 + $0x64] sm:$0xf]
        %v518 = vld [vmem:[%s398 + $0x68] sm:$0xf]
        %v519 = vld [vmem:[%s398 + $0x6c] sm:$0xf]
        %v520 = vld [vmem:[%s398 + $0x70] sm:$0xf]
        %v521 = vld [vmem:[%s398 + $0x74] sm:$0xf]
        %v522 = vld [vmem:[%s398 + $0x78] sm:$0xf]
        %v523 = vld [vmem:[%s398 + $0x7c] sm:$0xf]
        %v524 = vlaneseq
        %v525 = vshrl.u32 %v524, 7
        %v526 = vadd.s32 %v525, 8
        %v527 = vunpack.c.l.bf16 %v484
        %v528 = vunpack.c.l.bf16 %v485
        %v529 = vunpack.c.l.bf16 %v492
        %v530 = vunpack.c.l.bf16 %v493
        %v531 = vunpack.c.l.bf16 %v494
        %v532 = vunpack.c.l.bf16 %v495
        %v533 = vunpack.c.l.bf16 %v496
        %v534 = vunpack.c.l.bf16 %v497
        %v535 = vunpack.c.l.bf16 %v498
        %v536 = vunpack.c.l.bf16 %v499
        %v537 = vunpack.c.l.bf16 %v500
        %v538 = vunpack.c.l.bf16 %v501
        %v539 = vunpack.c.l.bf16 %v502
        %v540 = vunpack.c.l.bf16 %v503
        %v541 = vunpack.c.l.bf16 %v504
        %v542 = vunpack.c.l.bf16 %v505
        %v543 = vunpack.c.l.bf16 %v506
        %v544 = vunpack.c.l.bf16 %v507
        %v545 = vunpack.c.l.bf16 %v508
        %v546 = vunpack.c.l.bf16 %v509
        %v547 = vunpack.c.l.bf16 %v510
        %v548 = vunpack.c.l.bf16 %v511
        %v549 = vunpack.c.l.bf16 %v512
        %v550 = vunpack.c.l.bf16 %v513
        %v551 = vunpack.c.l.bf16 %v514
        %v552 = vunpack.c.l.bf16 %v515
        %v553 = vunpack.c.l.bf16 %v516
        %v554 = vunpack.c.l.bf16 %v517
        %v555 = vunpack.c.l.bf16 %v518
        %v556 = vunpack.c.l.bf16 %v519
        %v557 = vunpack.c.l.bf16 %v520
        %v558 = vunpack.c.l.bf16 %v521
        %v559 = vunpack.c.l.bf16 %v522
        %v560 = vunpack.c.l.bf16 %v523
        %v561 = vunpack.c.l.bf16 %v490
        %v562 = vunpack.c.l.bf16 %v491
        %v563 = vrot.slane %v527, 7
        %v564 = vrot.slane %v529, 7
        %v565 = vrot.slane %v531, 7
        %v566 = vrot.slane %v533, 7
        %v567 = vrot.slane %v535, 7
        %v568 = vrot.slane %v537, 7
        %v569 = vrot.slane %v539, 7
        %v570 = vrot.slane %v541, 7
        %v571 = vrot.slane %v543, 7
        %v572 = vrot.slane %v545, 7
        %v573 = vrot.slane %v547, 7
        %v574 = vrot.slane %v549, 7
        %v575 = vrot.slane %v551, 7
        %v576 = vrot.slane %v553, 7
        %v577 = vrot.slane %v555, 7
        %v578 = vrot.slane %v557, 7
        %v579 = vrot.slane %v559, 7
        %v580 = vrot.slane %v561, 7
        %v581 = vrot.slane %v528, 7
        %v582 = vrot.slane %v530, 7
        %v583 = vrot.slane %v532, 7
        %v584 = vrot.slane %v534, 7
        %v585 = vrot.slane %v536, 7
        %v586 = vrot.slane %v538, 7
        %v587 = vrot.slane %v540, 7
        %v588 = vrot.slane %v542, 7
        %v589 = vrot.slane %v544, 7
        %v590 = vrot.slane %v546, 7
        %v591 = vrot.slane %v548, 7
        %v592 = vrot.slane %v550, 7
        %v593 = vrot.slane %v552, 7
        %v594 = vrot.slane %v554, 7
        %v595 = vrot.slane %v556, 7
        %v596 = vrot.slane %v558, 7
        %v597 = vrot.slane %v560, 7
        %v598 = vrot.slane %v562, 7
        %vm599 = vcmp.lt.s32.totalorder %v525, 1
        %v600 = vsel %vm599, %v563, %v581
        %v601 = vsel %vm599, %v564, %v582
        %v602 = vsel %vm599, %v565, %v583
        %v603 = vsel %vm599, %v566, %v584
        %v604 = vsel %vm599, %v567, %v585
        %v605 = vsel %vm599, %v568, %v586
        %v606 = vsel %vm599, %v569, %v587
        %v607 = vsel %vm599, %v570, %v588
        %v608 = vsel %vm599, %v571, %v589
        %v609 = vsel %vm599, %v572, %v590
        %v610 = vsel %vm599, %v573, %v591
        %v611 = vsel %vm599, %v574, %v592
        %v612 = vsel %vm599, %v575, %v593
        %v613 = vsel %vm599, %v576, %v594
        %v614 = vsel %vm599, %v577, %v595
        %v615 = vsel %vm599, %v578, %v596
        %v616 = vsel %vm599, %v579, %v597
        %v617 = vsel %vm599, %v580, %v598
        %v618 = vsel %vm599, %v581, %v563
        %v619 = vsel %vm599, %v582, %v564
        %v620 = vsel %vm599, %v583, %v565
        %v621 = vsel %vm599, %v584, %v566
        %v622 = vsel %vm599, %v585, %v567
        %v623 = vsel %vm599, %v586, %v568
        %v624 = vsel %vm599, %v587, %v569
        %v625 = vsel %vm599, %v588, %v570
        %v626 = vsel %vm599, %v589, %v571
        %v627 = vsel %vm599, %v590, %v572
        %v628 = vsel %vm599, %v591, %v573
        %v629 = vsel %vm599, %v592, %v574
        %v630 = vsel %vm599, %v593, %v575
        %v631 = vsel %vm599, %v594, %v576
        %v632 = vsel %vm599, %v595, %v577
        %v633 = vsel %vm599, %v596, %v578
        %v634 = vsel %vm599, %v597, %v579
        %v635 = vsel %vm599, %v598, %v580
        %v636 = vrot.slane %v527, 1
        %v637 = vrot.slane %v529, 1
        %v638 = vrot.slane %v531, 1
        %v639 = vrot.slane %v533, 1
        %v640 = vrot.slane %v535, 1
        %v641 = vrot.slane %v537, 1
        %v642 = vrot.slane %v539, 1
        %v643 = vrot.slane %v541, 1
        %v644 = vrot.slane %v543, 1
        %v645 = vrot.slane %v545, 1
        %v646 = vrot.slane %v547, 1
        %v647 = vrot.slane %v549, 1
        %v648 = vrot.slane %v551, 1
        %v649 = vrot.slane %v553, 1
        %v650 = vrot.slane %v555, 1
        %v651 = vrot.slane %v557, 1
        %v652 = vrot.slane %v559, 1
        %v653 = vrot.slane %v561, 1
        %v654 = vrot.slane %v528, 1
        %v655 = vrot.slane %v530, 1
        %v656 = vrot.slane %v532, 1
        %v657 = vrot.slane %v534, 1
        %v658 = vrot.slane %v536, 1
        %v659 = vrot.slane %v538, 1
        %v660 = vrot.slane %v540, 1
        %v661 = vrot.slane %v542, 1
        %v662 = vrot.slane %v544, 1
        %v663 = vrot.slane %v546, 1
        %v664 = vrot.slane %v548, 1
        %v665 = vrot.slane %v550, 1
        %v666 = vrot.slane %v552, 1
        %v667 = vrot.slane %v554, 1
        %v668 = vrot.slane %v556, 1
        %v669 = vrot.slane %v558, 1
        %v670 = vrot.slane %v560, 1
        %v671 = vrot.slane %v562, 1
        %vm672 = vcmp.lt.s32.totalorder %v525, 7
        %v673 = vsel %vm672, %v636, %v654
        %v674 = vsel %vm672, %v637, %v655
        %v675 = vsel %vm672, %v638, %v656
        %v676 = vsel %vm672, %v639, %v657
        %v677 = vsel %vm672, %v640, %v658
        %v678 = vsel %vm672, %v641, %v659
        %v679 = vsel %vm672, %v642, %v660
        %v680 = vsel %vm672, %v643, %v661
        %v681 = vsel %vm672, %v644, %v662
        %v682 = vsel %vm672, %v645, %v663
        %v683 = vsel %vm672, %v646, %v664
        %v684 = vsel %vm672, %v647, %v665
        %v685 = vsel %vm672, %v648, %v666
        %v686 = vsel %vm672, %v649, %v667
        %v687 = vsel %vm672, %v650, %v668
        %v688 = vsel %vm672, %v651, %v669
        %v689 = vsel %vm672, %v652, %v670
        %v690 = vsel %vm672, %v653, %v671
        %v691 = vsel %vm672, %v654, %v636
        %v692 = vsel %vm672, %v655, %v637
        %v693 = vsel %vm672, %v656, %v638
        %v694 = vsel %vm672, %v657, %v639
        %v695 = vsel %vm672, %v658, %v640
        %v696 = vsel %vm672, %v659, %v641
        %v697 = vsel %vm672, %v660, %v642
        %v698 = vsel %vm672, %v661, %v643
        %v699 = vsel %vm672, %v662, %v644
        %v700 = vsel %vm672, %v663, %v645
        %v701 = vsel %vm672, %v664, %v646
        %v702 = vsel %vm672, %v665, %v647
        %v703 = vsel %vm672, %v666, %v648
        %v704 = vsel %vm672, %v667, %v649
        %v705 = vsel %vm672, %v668, %v650
        %v706 = vsel %vm672, %v669, %v651
        %v707 = vsel %vm672, %v670, %v652
        %v708 = vsel %vm672, %v671, %v653
        %vm709 = vcmp.gt.s32.totalorder %v525, 0
        %vm710 = vcmp.gt.s32.totalorder %v526, 0
        %v711 = vsel %vm709, 1, 0
        %v712 = vsel %vm710, 1, 0
        %vm713 = vcmp.eq.s32.totalorder %v711, 1
        %vm714 = vcmp.eq.s32.totalorder %v712, 1
        %v715 = vsel %vm713, %v618, 0.0
        %v716 = vsel %vm714, %v600, 0.0
        %v717 = vsel %vm713, %v619, 0.0
        %v718 = vsel %vm714, %v601, 0.0
        %v719 = vsel %vm713, %v620, 0.0
        %v720 = vsel %vm714, %v602, 0.0
        %v721 = vsel %vm713, %v621, 0.0
        %v722 = vsel %vm714, %v603, 0.0
        %v723 = vsel %vm713, %v622, 0.0
        %v724 = vsel %vm714, %v604, 0.0
        %v725 = vsel %vm713, %v623, 0.0
        %v726 = vsel %vm714, %v605, 0.0
        %v727 = vsel %vm713, %v624, 0.0
        %v728 = vsel %vm714, %v606, 0.0
        %v729 = vsel %vm713, %v625, 0.0
        %v730 = vsel %vm714, %v607, 0.0
        %v731 = vsel %vm713, %v626, 0.0
        %v732 = vsel %vm714, %v608, 0.0
        %v733 = vsel %vm713, %v627, 0.0
        %v734 = vsel %vm714, %v609, 0.0
        %v735 = vsel %vm713, %v628, 0.0
        %v736 = vsel %vm714, %v610, 0.0
        %v737 = vsel %vm713, %v629, 0.0
        %v738 = vsel %vm714, %v611, 0.0
        %v739 = vsel %vm713, %v630, 0.0
        %v740 = vsel %vm714, %v612, 0.0
        %v741 = vsel %vm713, %v631, 0.0
        %v742 = vsel %vm714, %v613, 0.0
        %v743 = vsel %vm713, %v632, 0.0
        %v744 = vsel %vm714, %v614, 0.0
        %v745 = vsel %vm713, %v633, 0.0
        %v746 = vsel %vm714, %v615, 0.0
        %v747 = vsel %vm713, %v634, 0.0
        %v748 = vsel %vm714, %v616, 0.0
        %v749 = vsel %vm713, %v635, 0.0
        %v750 = vsel %vm714, %v617, 0.0
        %v751 = vpack.c.bf16 %v715, %v715
        %v752 = vpack.c.bf16 %v716, %v716
        %v753 = vpack.c.bf16 %v717, %v717
        %v754 = vpack.c.bf16 %v718, %v718
        %v755 = vpack.c.bf16 %v719, %v719
        %v756 = vpack.c.bf16 %v720, %v720
        %v757 = vpack.c.bf16 %v721, %v721
        %v758 = vpack.c.bf16 %v722, %v722
        %v759 = vpack.c.bf16 %v723, %v723
        %v760 = vpack.c.bf16 %v724, %v724
        %v761 = vpack.c.bf16 %v725, %v725
        %v762 = vpack.c.bf16 %v726, %v726
        %v763 = vpack.c.bf16 %v727, %v727
        %v764 = vpack.c.bf16 %v728, %v728
        %v765 = vpack.c.bf16 %v729, %v729
        %v766 = vpack.c.bf16 %v730, %v730
        %v767 = vpack.c.bf16 %v731, %v731
        %v768 = vpack.c.bf16 %v732, %v732
        %v769 = vpack.c.bf16 %v733, %v733
        %v770 = vpack.c.bf16 %v734, %v734
        %v771 = vpack.c.bf16 %v735, %v735
        %v772 = vpack.c.bf16 %v736, %v736
        %v773 = vpack.c.bf16 %v737, %v737
        %v774 = vpack.c.bf16 %v738, %v738
        %v775 = vpack.c.bf16 %v739, %v739
        %v776 = vpack.c.bf16 %v740, %v740
        %v777 = vpack.c.bf16 %v741, %v741
        %v778 = vpack.c.bf16 %v742, %v742
        %v779 = vpack.c.bf16 %v743, %v743
        %v780 = vpack.c.bf16 %v744, %v744
        %v781 = vpack.c.bf16 %v745, %v745
        %v782 = vpack.c.bf16 %v746, %v746
        %v783 = vpack.c.bf16 %v747, %v747
        %v784 = vpack.c.bf16 %v748, %v748
        %v785 = vpack.c.bf16 %v749, %v749
        %v786 = vpack.c.bf16 %v750, %v750
        %787 = vst [vmem:[#allocation2] sm:$0xf] %v751
        %788 = vst [vmem:[#allocation2 + $0xc] sm:$0xf] %v752
        %789 = vst [vmem:[#allocation2 + $0x18] sm:$0xf] %v753
        %790 = vst [vmem:[#allocation2 + $0x24] sm:$0xf] %v754
        %791 = vst [vmem:[#allocation2 + $0x30] sm:$0xf] %v755
        %792 = vst [vmem:[#allocation2 + $0x3c] sm:$0xf] %v756
        %793 = vst [vmem:[#allocation2 + $0x48] sm:$0xf] %v757
        %794 = vst [vmem:[#allocation2 + $0x54] sm:$0xf] %v758
        %795 = vst [vmem:[#allocation2 + $0x60] sm:$0xf] %v759
        %796 = vst [vmem:[#allocation2 + $0x6c] sm:$0xf] %v760
        %797 = vst [vmem:[#allocation2 + $0x78] sm:$0xf] %v761
        %798 = vst [vmem:[#allocation2 + $0x84] sm:$0xf] %v762
        %799 = vst [vmem:[#allocation2 + $0x90] sm:$0xf] %v763
        %800 = vst [vmem:[#allocation2 + $0x9c] sm:$0xf] %v764
        %801 = vst [vmem:[#allocation2 + $0xa8] sm:$0xf] %v765
        %802 = vst [vmem:[#allocation2 + $0xb4] sm:$0xf] %v766
        %803 = vst [vmem:[#allocation2 + $0xc0] sm:$0xf] %v767
        %804 = vst [vmem:[#allocation2 + $0xcc] sm:$0xf] %v768
        %805 = vst [vmem:[#allocation2 + $0xd8] sm:$0xf] %v769
        %806 = vst [vmem:[#allocation2 + $0xe4] sm:$0xf] %v770
        %807 = vst [vmem:[#allocation2 + $0xf0] sm:$0xf] %v771
        %808 = vst [vmem:[#allocation2 + $0xfc] sm:$0xf] %v772
        %809 = vst [vmem:[#allocation2 + $0x108] sm:$0xf] %v773
        %810 = vst [vmem:[#allocation2 + $0x114] sm:$0xf] %v774
        %811 = vst [vmem:[#allocation2 + $0x120] sm:$0xf] %v775
        %812 = vst [vmem:[#allocation2 + $0x12c] sm:$0xf] %v776
        %813 = vst [vmem:[#allocation2 + $0x138] sm:$0xf] %v777
        %814 = vst [vmem:[#allocation2 + $0x144] sm:$0xf] %v778
        %815 = vst [vmem:[#allocation2 + $0x150] sm:$0xf] %v779
        %816 = vst [vmem:[#allocation2 + $0x15c] sm:$0xf] %v780
        %817 = vst [vmem:[#allocation2 + $0x168] sm:$0xf] %v781
        %818 = vst [vmem:[#allocation2 + $0x174] sm:$0xf] %v782
        %819 = vst [vmem:[#allocation2 + $0x180] sm:$0xf] %v783
        %820 = vst [vmem:[#allocation2 + $0x18c] sm:$0xf] %v784
        %821 = vst [vmem:[#allocation2 + $0x198] sm:$0xf] %v785
        %822 = vst [vmem:[#allocation2 + $0x1a4] sm:$0xf] %v786
        %823 = vst [vmem:[#allocation2 + $0x4] sm:$0xf] %v484
        %824 = vst [vmem:[#allocation2 + $0x10] sm:$0xf] %v485
        %825 = vst [vmem:[#allocation2 + $0x1c] sm:$0xf] %v492
        %826 = vst [vmem:[#allocation2 + $0x28] sm:$0xf] %v493
        %827 = vst [vmem:[#allocation2 + $0x34] sm:$0xf] %v494
        %828 = vst [vmem:[#allocation2 + $0x40] sm:$0xf] %v495
        %829 = vst [vmem:[#allocation2 + $0x4c] sm:$0xf] %v496
        %830 = vst [vmem:[#allocation2 + $0x58] sm:$0xf] %v497
        %831 = vst [vmem:[#allocation2 + $0x64] sm:$0xf] %v498
        %832 = vst [vmem:[#allocation2 + $0x70] sm:$0xf] %v499
        %833 = vst [vmem:[#allocation2 + $0x7c] sm:$0xf] %v500
        %834 = vst [vmem:[#allocation2 + $0x88] sm:$0xf] %v501
        %835 = vst [vmem:[#allocation2 + $0x94] sm:$0xf] %v502
        %836 = vst [vmem:[#allocation2 + $0xa0] sm:$0xf] %v503
        %837 = vst [vmem:[#allocation2 + $0xac] sm:$0xf] %v504
        %838 = vst [vmem:[#allocation2 + $0xb8] sm:$0xf] %v505
        %839 = vst [vmem:[#allocation2 + $0xc4] sm:$0xf] %v506
        %840 = vst [vmem:[#allocation2 + $0xd0] sm:$0xf] %v507
        %841 = vst [vmem:[#allocation2 + $0xdc] sm:$0xf] %v508
        %842 = vst [vmem:[#allocation2 + $0xe8] sm:$0xf] %v509
        %843 = vst [vmem:[#allocation2 + $0xf4] sm:$0xf] %v510
        %844 = vst [vmem:[#allocation2 + $0x100] sm:$0xf] %v511
        %845 = vst [vmem:[#allocation2 + $0x10c] sm:$0xf] %v512
        %846 = vst [vmem:[#allocation2 + $0x118] sm:$0xf] %v513
        %847 = vst [vmem:[#allocation2 + $0x124] sm:$0xf] %v514
        %848 = vst [vmem:[#allocation2 + $0x130] sm:$0xf] %v515
        %849 = vst [vmem:[#allocation2 + $0x13c] sm:$0xf] %v516
        %850 = vst [vmem:[#allocation2 + $0x148] sm:$0xf] %v517
        %851 = vst [vmem:[#allocation2 + $0x154] sm:$0xf] %v518
        %852 = vst [vmem:[#allocation2 + $0x160] sm:$0xf] %v519
        %853 = vst [vmem:[#allocation2 + $0x16c] sm:$0xf] %v520
        %854 = vst [vmem:[#allocation2 + $0x178] sm:$0xf] %v521
        %855 = vst [vmem:[#allocation2 + $0x184] sm:$0xf] %v522
        %856 = vst [vmem:[#allocation2 + $0x190] sm:$0xf] %v523
        %857 = vst [vmem:[#allocation2 + $0x19c] sm:$0xf] %v490
        %858 = vst [vmem:[#allocation2 + $0x1a8] sm:$0xf] %v491
        %vm859 = vcmp.lt.s32.totalorder %v525, 15
        %vm860 = vcmp.lt.s32.totalorder %v526, 15
        %v861 = vsel %vm859, 1, 0
        %v862 = vsel %vm860, 1, 0
        %vm863 = vcmp.eq.s32.totalorder %v861, 1
        %vm864 = vcmp.eq.s32.totalorder %v862, 1
        %v865 = vsel %vm863, %v673, 0.0
        %v866 = vsel %vm864, %v691, 0.0
        %v867 = vsel %vm863, %v674, 0.0
        %v868 = vsel %vm864, %v692, 0.0
        %v869 = vsel %vm863, %v675, 0.0
        %v870 = vsel %vm864, %v693, 0.0
        %v871 = vsel %vm863, %v676, 0.0
        %v872 = vsel %vm864, %v694, 0.0
        %v873 = vsel %vm863, %v677, 0.0
        %v874 = vsel %vm864, %v695, 0.0
        %v875 = vsel %vm863, %v678, 0.0
        %v876 = vsel %vm864, %v696, 0.0
        %v877 = vsel %vm863, %v679, 0.0
        %v878 = vsel %vm864, %v697, 0.0
        %v879 = vsel %vm863, %v680, 0.0
        %v880 = vsel %vm864, %v698, 0.0
        %v881 = vsel %vm863, %v681, 0.0
        %v882 = vsel %vm864, %v699, 0.0
        %v883 = vsel %vm863, %v682, 0.0
        %v884 = vsel %vm864, %v700, 0.0
        %v885 = vsel %vm863, %v683, 0.0
        %v886 = vsel %vm864, %v701, 0.0
        %v887 = vsel %vm863, %v684, 0.0
        %v888 = vsel %vm864, %v702, 0.0
        %v889 = vsel %vm863, %v685, 0.0
        %v890 = vsel %vm864, %v703, 0.0
        %v891 = vsel %vm863, %v686, 0.0
        %v892 = vsel %vm864, %v704, 0.0
        %v893 = vsel %vm863, %v687, 0.0
        %v894 = vsel %vm864, %v705, 0.0
        %v895 = vsel %vm863, %v688, 0.0
        %v896 = vsel %vm864, %v706, 0.0
        %v897 = vsel %vm863, %v689, 0.0
        %v898 = vsel %vm864, %v707, 0.0
        %v899 = vsel %vm863, %v690, 0.0
        %v900 = vsel %vm864, %v708, 0.0
        %v901 = vpack.c.bf16 %v865, %v865
        %v902 = vpack.c.bf16 %v866, %v866
        %v903 = vpack.c.bf16 %v867, %v867
        %v904 = vpack.c.bf16 %v868, %v868
        %v905 = vpack.c.bf16 %v869, %v869
        %v906 = vpack.c.bf16 %v870, %v870
        %v907 = vpack.c.bf16 %v871, %v871
        %v908 = vpack.c.bf16 %v872, %v872
        %v909 = vpack.c.bf16 %v873, %v873
        %v910 = vpack.c.bf16 %v874, %v874
        %v911 = vpack.c.bf16 %v875, %v875
        %v912 = vpack.c.bf16 %v876, %v876
        %v913 = vpack.c.bf16 %v877, %v877
        %v914 = vpack.c.bf16 %v878, %v878
        %v915 = vpack.c.bf16 %v879, %v879
        %v916 = vpack.c.bf16 %v880, %v880
        %v917 = vpack.c.bf16 %v881, %v881
        %v918 = vpack.c.bf16 %v882, %v882
        %v919 = vpack.c.bf16 %v883, %v883
        %v920 = vpack.c.bf16 %v884, %v884
        %v921 = vpack.c.bf16 %v885, %v885
        %v922 = vpack.c.bf16 %v886, %v886
        %v923 = vpack.c.bf16 %v887, %v887
        %v924 = vpack.c.bf16 %v888, %v888
        %v925 = vpack.c.bf16 %v889, %v889
        %v926 = vpack.c.bf16 %v890, %v890
        %v927 = vpack.c.bf16 %v891, %v891
        %v928 = vpack.c.bf16 %v892, %v892
        %v929 = vpack.c.bf16 %v893, %v893
        %v930 = vpack.c.bf16 %v894, %v894
        %v931 = vpack.c.bf16 %v895, %v895
        %v932 = vpack.c.bf16 %v896, %v896
        %v933 = vpack.c.bf16 %v897, %v897
        %v934 = vpack.c.bf16 %v898, %v898
        %v935 = vpack.c.bf16 %v899, %v899
        %v936 = vpack.c.bf16 %v900, %v900
        %937 = vst [vmem:[#allocation2 + $0x8] sm:$0xf] %v901
        %938 = vst [vmem:[#allocation2 + $0x14] sm:$0xf] %v902
        %939 = vst [vmem:[#allocation2 + $0x20] sm:$0xf] %v903
        %940 = vst [vmem:[#allocation2 + $0x2c] sm:$0xf] %v904
        %941 = vst [vmem:[#allocation2 + $0x38] sm:$0xf] %v905
        %942 = vst [vmem:[#allocation2 + $0x44] sm:$0xf] %v906
        %943 = vst [vmem:[#allocation2 + $0x50] sm:$0xf] %v907
        %944 = vst [vmem:[#allocation2 + $0x5c] sm:$0xf] %v908
        %945 = vst [vmem:[#allocation2 + $0x68] sm:$0xf] %v909
        %946 = vst [vmem:[#allocation2 + $0x74] sm:$0xf] %v910
        %947 = vst [vmem:[#allocation2 + $0x80] sm:$0xf] %v911
        %948 = vst [vmem:[#allocation2 + $0x8c] sm:$0xf] %v912
        %949 = vst [vmem:[#allocation2 + $0x98] sm:$0xf] %v913
        %950 = vst [vmem:[#allocation2 + $0xa4] sm:$0xf] %v914
        %951 = vst [vmem:[#allocation2 + $0xb0] sm:$0xf] %v915
        %952 = vst [vmem:[#allocation2 + $0xbc] sm:$0xf] %v916
        %953 = vst [vmem:[#allocation2 + $0xc8] sm:$0xf] %v917
        %954 = vst [vmem:[#allocation2 + $0xd4] sm:$0xf] %v918
        %955 = vst [vmem:[#allocation2 + $0xe0] sm:$0xf] %v919
        %956 = vst [vmem:[#allocation2 + $0xec] sm:$0xf] %v920
        %957 = vst [vmem:[#allocation2 + $0xf8] sm:$0xf] %v921
        %958 = vst [vmem:[#allocation2 + $0x104] sm:$0xf] %v922
        %959 = vst [vmem:[#allocation2 + $0x110] sm:$0xf] %v923
        %960 = vst [vmem:[#allocation2 + $0x11c] sm:$0xf] %v924
        %961 = vst [vmem:[#allocation2 + $0x128] sm:$0xf] %v925
        %962 = vst [vmem:[#allocation2 + $0x134] sm:$0xf] %v926
        %963 = vst [vmem:[#allocation2 + $0x140] sm:$0xf] %v927
        %964 = vst [vmem:[#allocation2 + $0x14c] sm:$0xf] %v928
        %965 = vst [vmem:[#allocation2 + $0x158] sm:$0xf] %v929
        %966 = vst [vmem:[#allocation2 + $0x164] sm:$0xf] %v930
        %967 = vst [vmem:[#allocation2 + $0x170] sm:$0xf] %v931
        %968 = vst [vmem:[#allocation2 + $0x17c] sm:$0xf] %v932
        %969 = vst [vmem:[#allocation2 + $0x188] sm:$0xf] %v933
        %970 = vst [vmem:[#allocation2 + $0x194] sm:$0xf] %v934
        %971 = vst [vmem:[#allocation2 + $0x1a0] sm:$0xf] %v935
        %972 = vst [vmem:[#allocation2 + $0x1ac] sm:$0xf] %v936
        %v973 = vld [vmem:[#allocation2] sm:$0xff]
        %v974 = vld [vmem:[#allocation2 + $0x8] sm:$0xf]
        %v975 = vld [vmem:[#allocation2 + $0xc] sm:$0xff]
        %v976 = vld [vmem:[#allocation2 + $0x14] sm:$0xf]
        %v977 = vld [vmem:[#allocation2 + $0x18] sm:$0xff]
        %v978 = vld [vmem:[#allocation2 + $0x20] sm:$0xf]
        %v979 = vld [vmem:[#allocation2 + $0x24] sm:$0xff]
        %v980 = vld [vmem:[#allocation2 + $0x2c] sm:$0xf]
        %v981 = vld [vmem:[#allocation2 + $0x30] sm:$0xff]
        %v982 = vld [vmem:[#allocation2 + $0x38] sm:$0xf]
        %v983 = vld [vmem:[#allocation2 + $0x3c] sm:$0xff]
        %v984 = vld [vmem:[#allocation2 + $0x44] sm:$0xf]
        %v985 = vld [vmem:[#allocation2 + $0x48] sm:$0xff]
        %v986 = vld [vmem:[#allocation2 + $0x50] sm:$0xf]
        %v987 = vld [vmem:[#allocation2 + $0x54] sm:$0xff]
        %v988 = vld [vmem:[#allocation2 + $0x5c] sm:$0xf]
        %v989 = vld [vmem:[#allocation2 + $0x60] sm:$0xff]
        %v990 = vld [vmem:[#allocation2 + $0x68] sm:$0xf]
        %v991 = vld [vmem:[#allocation2 + $0x6c] sm:$0xff]
        %v992 = vld [vmem:[#allocation2 + $0x74] sm:$0xf]
        %v993 = vld [vmem:[#allocation2 + $0x78] sm:$0xff]
        %v994 = vld [vmem:[#allocation2 + $0x80] sm:$0xf]
        %v995 = vld [vmem:[#allocation2 + $0x84] sm:$0xff]
        %v996 = vld [vmem:[#allocation2 + $0x8c] sm:$0xf]
        %v997 = vld [vmem:[#allocation2 + $0x90] sm:$0xff]
        %v998 = vld [vmem:[#allocation2 + $0x98] sm:$0xf]
        %v999 = vld [vmem:[#allocation2 + $0x9c] sm:$0xff]
        %v1000 = vld [vmem:[#allocation2 + $0xa4] sm:$0xf]
        %v1001 = vld [vmem:[#allocation2 + $0xa8] sm:$0xff]
        %v1002 = vld [vmem:[#allocation2 + $0xb0] sm:$0xf]
        %v1003 = vld [vmem:[#allocation2 + $0xb4] sm:$0xff]
        %v1004 = vld [vmem:[#allocation2 + $0xbc] sm:$0xf]
        %v1005 = vld [vmem:[#allocation2 + $0xc0] sm:$0xff]
        %v1006 = vld [vmem:[#allocation2 + $0xc8] sm:$0xf]
        %v1007 = vld [vmem:[#allocation2 + $0xcc] sm:$0xff]
        %v1008 = vld [vmem:[#allocation2 + $0xd4] sm:$0xf]
        %v1009 = vld [vmem:[#allocation2 + $0xd8] sm:$0xff]
        %v1010 = vld [vmem:[#allocation2 + $0xe0] sm:$0xf]
        %v1011 = vld [vmem:[#allocation2 + $0xe4] sm:$0xff]
        %v1012 = vld [vmem:[#allocation2 + $0xec] sm:$0xf]
        %v1013 = vld [vmem:[#allocation2 + $0xf0] sm:$0xff]
        %v1014 = vld [vmem:[#allocation2 + $0xf8] sm:$0xf]
        %v1015 = vld [vmem:[#allocation2 + $0xfc] sm:$0xff]
        %v1016 = vld [vmem:[#allocation2 + $0x104] sm:$0xf]
        %v1017 = vld [vmem:[#allocation2 + $0x108] sm:$0xff]
        %v1018 = vld [vmem:[#allocation2 + $0x110] sm:$0xf]
        %v1019 = vld [vmem:[#allocation2 + $0x114] sm:$0xff]
        %v1020 = vld [vmem:[#allocation2 + $0x11c] sm:$0xf]
        %v1021 = vld [vmem:[#allocation2 + $0x120] sm:$0xff]
        %v1022 = vld [vmem:[#allocation2 + $0x128] sm:$0xf]
        %v1023 = vld [vmem:[#allocation2 + $0x12c] sm:$0xff]
        %v1024 = vld [vmem:[#allocation2 + $0x134] sm:$0xf]
        %v1025 = vld [vmem:[#allocation2 + $0x138] sm:$0xff]
        %v1026 = vld [vmem:[#allocation2 + $0x140] sm:$0xf]
        %v1027 = vld [vmem:[#allocation2 + $0x144] sm:$0xff]
        %v1028 = vld [vmem:[#allocation2 + $0x14c] sm:$0xf]
        %v1029 = vld [vmem:[#allocation2 + $0x150] sm:$0xff]
        %v1030 = vld [vmem:[#allocation2 + $0x158] sm:$0xf]
        %v1031 = vld [vmem:[#allocation2 + $0x15c] sm:$0xff]
        %v1032 = vld [vmem:[#allocation2 + $0x164] sm:$0xf]
        %v1033 = vld [vmem:[#allocation2 + $0x168] sm:$0xff]
        %v1034 = vld [vmem:[#allocation2 + $0x170] sm:$0xf]
        %v1035 = vld [vmem:[#allocation2 + $0x174] sm:$0xff]
        %v1036 = vld [vmem:[#allocation2 + $0x17c] sm:$0xf]
        %v1037 = vld [vmem:[#allocation9] sm:$0xf]
        %v1038 = vld [vmem:[#allocation9 + $0x4] sm:$0xf]
        %v1039 = vld [vmem:[#allocation9 + $0x8] sm:$0xf]
        %v1040 = vld [vmem:[#allocation9 + $0xc] sm:$0xf]
        %v1041 = vld [vmem:[#allocation9 + $0x10] sm:$0xf]
        %v1042 = vld [vmem:[#allocation9 + $0x14] sm:$0xf]
        %v1043 = vld [vmem:[#allocation9 + $0x18] sm:$0xf]
        %v1044 = vld [vmem:[#allocation9 + $0x1c] sm:$0xf]
        %v1045 = vld [vmem:[#allocation9 + $0x20] sm:$0xf]
        %v1046 = vld [vmem:[#allocation9 + $0x24] sm:$0xf]
        %v1047 = vld [vmem:[#allocation9 + $0x28] sm:$0xf]
        %v1048 = vld [vmem:[#allocation9 + $0x2c] sm:$0xf]
        %v1049 = vld [vmem:[#allocation9 + $0x30] sm:$0xf]
        %v1050 = vld [vmem:[#allocation9 + $0x34] sm:$0xf]
        %v1051 = vld [vmem:[#allocation9 + $0x38] sm:$0xf]
        %v1052 = vld [vmem:[#allocation9 + $0x3c] sm:$0xf]
        %v1053 = vld [vmem:[#allocation9 + $0x40] sm:$0xf]
        %v1054 = vld [vmem:[#allocation9 + $0x44] sm:$0xf]
        %v1055 = vld [vmem:[#allocation9 + $0x48] sm:$0xf]
        %v1056 = vld [vmem:[#allocation9 + $0x4c] sm:$0xf]
        %v1057 = vld [vmem:[#allocation9 + $0x50] sm:$0xf]
        %v1058 = vld [vmem:[#allocation9 + $0x54] sm:$0xf]
        %v1059 = vld [vmem:[#allocation9 + $0x58] sm:$0xf]
        %v1060 = vld [vmem:[#allocation9 + $0x5c] sm:$0xf]
        %v1061 = vld [vmem:[#allocation9 + $0x60] sm:$0xf]
        %v1062 = vld [vmem:[#allocation9 + $0x64] sm:$0xf]
        %v1063 = vld [vmem:[#allocation9 + $0x68] sm:$0xf]
        %v1064 = vld [vmem:[#allocation9 + $0x6c] sm:$0xf]
        %v1065 = vld [vmem:[#allocation9 + $0x70] sm:$0xf]
        %v1066 = vld [vmem:[#allocation9 + $0x74] sm:$0xf]
        %v1067 = vld [vmem:[#allocation9 + $0x78] sm:$0xf]
        %v1068 = vld [vmem:[#allocation9 + $0x7c] sm:$0xf]
        %v1069 = vld [vmem:[#allocation9 + $0x80] sm:$0xf]
        %v1070 = vld [vmem:[#allocation9 + $0x84] sm:$0xf]
        %v1071 = vld [vmem:[#allocation9 + $0x88] sm:$0xf]
        %v1072 = vld [vmem:[#allocation9 + $0x8c] sm:$0xf]
        %v1073 = vld [vmem:[#allocation9 + $0x90] sm:$0xf]
        %v1074 = vld [vmem:[#allocation9 + $0x94] sm:$0xf]
        %v1075 = vld [vmem:[#allocation9 + $0x98] sm:$0xf]
        %v1076 = vld [vmem:[#allocation9 + $0x9c] sm:$0xf]
        %v1077 = vld [vmem:[#allocation9 + $0xa0] sm:$0xf]
        %v1078 = vld [vmem:[#allocation9 + $0xa4] sm:$0xf]
        %v1079 = vld [vmem:[#allocation9 + $0xa8] sm:$0xf]
        %v1080 = vld [vmem:[#allocation9 + $0xac] sm:$0xf]
        %v1081 = vld [vmem:[#allocation9 + $0xb0] sm:$0xf]
        %v1082 = vld [vmem:[#allocation9 + $0xb4] sm:$0xf]
        %v1083 = vld [vmem:[#allocation9 + $0xb8] sm:$0xf]
        %v1084 = vld [vmem:[#allocation9 + $0xbc] sm:$0xf]
        %s1085 = scalar_lea.vmem [#allocation2], 24
        %v1086 = vld [vmem:[%s1085] sm:$0xff]
        %v1087 = vld [vmem:[%s1085 + $0x8] sm:$0xf]
        %v1088 = vld [vmem:[%s1085 + $0xc] sm:$0xff]
        %v1089 = vld [vmem:[%s1085 + $0x14] sm:$0xf]
        %v1090 = vld [vmem:[%s1085 + $0x18] sm:$0xff]
        %v1091 = vld [vmem:[%s1085 + $0x20] sm:$0xf]
        %v1092 = vld [vmem:[%s1085 + $0x24] sm:$0xff]
        %v1093 = vld [vmem:[%s1085 + $0x2c] sm:$0xf]
        %v1094 = vld [vmem:[%s1085 + $0x30] sm:$0xff]
        %v1095 = vld [vmem:[%s1085 + $0x38] sm:$0xf]
        %v1096 = vld [vmem:[%s1085 + $0x3c] sm:$0xff]
        %v1097 = vld [vmem:[%s1085 + $0x44] sm:$0xf]
        %v1098 = vld [vmem:[%s1085 + $0x48] sm:$0xff]
        %v1099 = vld [vmem:[%s1085 + $0x50] sm:$0xf]
        %v1100 = vld [vmem:[%s1085 + $0x54] sm:$0xff]
        %v1101 = vld [vmem:[%s1085 + $0x5c] sm:$0xf]
        %v1102 = vld [vmem:[%s1085 + $0x60] sm:$0xff]
        %v1103 = vld [vmem:[%s1085 + $0x68] sm:$0xf]
        %v1104 = vld [vmem:[%s1085 + $0x6c] sm:$0xff]
        %v1105 = vld [vmem:[%s1085 + $0x74] sm:$0xf]
        %v1106 = vld [vmem:[%s1085 + $0x78] sm:$0xff]
        %v1107 = vld [vmem:[%s1085 + $0x80] sm:$0xf]
        %v1108 = vld [vmem:[%s1085 + $0x84] sm:$0xff]
        %v1109 = vld [vmem:[%s1085 + $0x8c] sm:$0xf]
        %v1110 = vld [vmem:[%s1085 + $0x90] sm:$0xff]
        %v1111 = vld [vmem:[%s1085 + $0x98] sm:$0xf]
        %v1112 = vld [vmem:[%s1085 + $0x9c] sm:$0xff]
        %v1113 = vld [vmem:[%s1085 + $0xa4] sm:$0xf]
        %v1114 = vld [vmem:[%s1085 + $0xa8] sm:$0xff]
        %v1115 = vld [vmem:[%s1085 + $0xb0] sm:$0xf]
        %v1116 = vld [vmem:[%s1085 + $0xb4] sm:$0xff]
        %v1117 = vld [vmem:[%s1085 + $0xbc] sm:$0xf]
        %v1118 = vld [vmem:[%s1085 + $0xc0] sm:$0xff]
        %v1119 = vld [vmem:[%s1085 + $0xc8] sm:$0xf]
        %v1120 = vld [vmem:[%s1085 + $0xcc] sm:$0xff]
        %v1121 = vld [vmem:[%s1085 + $0xd4] sm:$0xf]
        %v1122 = vld [vmem:[%s1085 + $0xd8] sm:$0xff]
        %v1123 = vld [vmem:[%s1085 + $0xe0] sm:$0xf]
        %v1124 = vld [vmem:[%s1085 + $0xe4] sm:$0xff]
        %v1125 = vld [vmem:[%s1085 + $0xec] sm:$0xf]
        %v1126 = vld [vmem:[%s1085 + $0xf0] sm:$0xff]
        %v1127 = vld [vmem:[%s1085 + $0xf8] sm:$0xf]
        %v1128 = vld [vmem:[%s1085 + $0xfc] sm:$0xff]
        %v1129 = vld [vmem:[%s1085 + $0x104] sm:$0xf]
        %v1130 = vld [vmem:[%s1085 + $0x108] sm:$0xff]
        %v1131 = vld [vmem:[%s1085 + $0x110] sm:$0xf]
        %v1132 = vld [vmem:[%s1085 + $0x114] sm:$0xff]
        %v1133 = vld [vmem:[%s1085 + $0x11c] sm:$0xf]
        %v1134 = vld [vmem:[%s1085 + $0x120] sm:$0xff]
        %v1135 = vld [vmem:[%s1085 + $0x128] sm:$0xf]
        %v1136 = vld [vmem:[%s1085 + $0x12c] sm:$0xff]
        %v1137 = vld [vmem:[%s1085 + $0x134] sm:$0xf]
        %v1138 = vld [vmem:[%s1085 + $0x138] sm:$0xff]
        %v1139 = vld [vmem:[%s1085 + $0x140] sm:$0xf]
        %v1140 = vld [vmem:[%s1085 + $0x144] sm:$0xff]
        %v1141 = vld [vmem:[%s1085 + $0x14c] sm:$0xf]
        %v1142 = vld [vmem:[%s1085 + $0x150] sm:$0xff]
        %v1143 = vld [vmem:[%s1085 + $0x158] sm:$0xf]
        %v1144 = vld [vmem:[%s1085 + $0x15c] sm:$0xff]
        %v1145 = vld [vmem:[%s1085 + $0x164] sm:$0xf]
        %v1146 = vld [vmem:[%s1085 + $0x168] sm:$0xff]
        %v1147 = vld [vmem:[%s1085 + $0x170] sm:$0xf]
        %v1148 = vld [vmem:[%s1085 + $0x174] sm:$0xff]
        %v1149 = vld [vmem:[%s1085 + $0x17c] sm:$0xf]
        %s1150 = scalar_lea.vmem [#allocation9], 192
        %v1151 = vld [vmem:[%s1150] sm:$0xf]
        %v1152 = vld [vmem:[%s1150 + $0x4] sm:$0xf]
        %v1153 = vld [vmem:[%s1150 + $0x8] sm:$0xf]
        %v1154 = vld [vmem:[%s1150 + $0xc] sm:$0xf]
        %v1155 = vld [vmem:[%s1150 + $0x10] sm:$0xf]
        %v1156 = vld [vmem:[%s1150 + $0x14] sm:$0xf]
        %v1157 = vld [vmem:[%s1150 + $0x18] sm:$0xf]
        %v1158 = vld [vmem:[%s1150 + $0x1c] sm:$0xf]
        %v1159 = vld [vmem:[%s1150 + $0x20] sm:$0xf]
        %v1160 = vld [vmem:[%s1150 + $0x24] sm:$0xf]
        %v1161 = vld [vmem:[%s1150 + $0x28] sm:$0xf]
        %v1162 = vld [vmem:[%s1150 + $0x2c] sm:$0xf]
        %v1163 = vld [vmem:[%s1150 + $0x30] sm:$0xf]
        %v1164 = vld [vmem:[%s1150 + $0x34] sm:$0xf]
        %v1165 = vld [vmem:[%s1150 + $0x38] sm:$0xf]
        %v1166 = vld [vmem:[%s1150 + $0x3c] sm:$0xf]
        %v1167 = vld [vmem:[%s1150 + $0x40] sm:$0xf]
        %v1168 = vld [vmem:[%s1150 + $0x44] sm:$0xf]
        %v1169 = vld [vmem:[%s1150 + $0x48] sm:$0xf]
        %v1170 = vld [vmem:[%s1150 + $0x4c] sm:$0xf]
        %v1171 = vld [vmem:[%s1150 + $0x50] sm:$0xf]
        %v1172 = vld [vmem:[%s1150 + $0x54] sm:$0xf]
        %v1173 = vld [vmem:[%s1150 + $0x58] sm:$0xf]
        %v1174 = vld [vmem:[%s1150 + $0x5c] sm:$0xf]
        %v1175 = vld [vmem:[%s1150 + $0x60] sm:$0xf]
        %v1176 = vld [vmem:[%s1150 + $0x64] sm:$0xf]
        %v1177 = vld [vmem:[%s1150 + $0x68] sm:$0xf]
        %v1178 = vld [vmem:[%s1150 + $0x6c] sm:$0xf]
        %v1179 = vld [vmem:[%s1150 + $0x70] sm:$0xf]
        %v1180 = vld [vmem:[%s1150 + $0x74] sm:$0xf]
        %v1181 = vld [vmem:[%s1150 + $0x78] sm:$0xf]
        %v1182 = vld [vmem:[%s1150 + $0x7c] sm:$0xf]
        %v1183 = vld [vmem:[%s1150 + $0x80] sm:$0xf]
        %v1184 = vld [vmem:[%s1150 + $0x84] sm:$0xf]
        %v1185 = vld [vmem:[%s1150 + $0x88] sm:$0xf]
        %v1186 = vld [vmem:[%s1150 + $0x8c] sm:$0xf]
        %v1187 = vld [vmem:[%s1150 + $0x90] sm:$0xf]
        %v1188 = vld [vmem:[%s1150 + $0x94] sm:$0xf]
        %v1189 = vld [vmem:[%s1150 + $0x98] sm:$0xf]
        %v1190 = vld [vmem:[%s1150 + $0x9c] sm:$0xf]
        %v1191 = vld [vmem:[%s1150 + $0xa0] sm:$0xf]
        %v1192 = vld [vmem:[%s1150 + $0xa4] sm:$0xf]
        %v1193 = vld [vmem:[%s1150 + $0xa8] sm:$0xf]
        %v1194 = vld [vmem:[%s1150 + $0xac] sm:$0xf]
        %v1195 = vld [vmem:[%s1150 + $0xb0] sm:$0xf]
        %v1196 = vld [vmem:[%s1150 + $0xb4] sm:$0xf]
        %v1197 = vld [vmem:[%s1150 + $0xb8] sm:$0xf]
        %v1198 = vld [vmem:[%s1150 + $0xbc] sm:$0xf]
        %v1263 = vunpack.c.l.b16 %v1086
        %v1264 = vunpack.c.h.b16 %v1086
        %v1265 = vunpack.c.l.b16 %v1087
        %v1266 = vunpack.c.l.b16 %v1088
        %v1267 = vunpack.c.h.b16 %v1088
        %v1268 = vunpack.c.l.b16 %v1089
        %v1269 = vunpack.c.l.b16 %v1090
        %v1270 = vunpack.c.h.b16 %v1090
        %v1271 = vunpack.c.l.b16 %v1091
        %v1272 = vunpack.c.l.b16 %v1092
        %v1273 = vunpack.c.h.b16 %v1092
        %v1274 = vunpack.c.l.b16 %v1093
        %v1275 = vunpack.c.l.b16 %v1094
        %v1276 = vunpack.c.h.b16 %v1094
        %v1277 = vunpack.c.l.b16 %v1095
        %v1278 = vunpack.c.l.b16 %v1096
        %v1279 = vunpack.c.h.b16 %v1096
        %v1280 = vunpack.c.l.b16 %v1097
        %v1281 = vunpack.c.l.b16 %v1098
        %v1282 = vunpack.c.h.b16 %v1098
        %v1283 = vunpack.c.l.b16 %v1099
        %v1284 = vunpack.c.l.b16 %v1100
        %v1285 = vunpack.c.h.b16 %v1100
        %v1286 = vunpack.c.l.b16 %v1101
        %v1287 = vunpack.c.l.b16 %v1102
        %v1288 = vunpack.c.h.b16 %v1102
        %v1289 = vunpack.c.l.b16 %v1103
        %v1290 = vunpack.c.l.b16 %v1104
        %v1291 = vunpack.c.h.b16 %v1104
        %v1292 = vunpack.c.l.b16 %v1105
        %v1293 = vunpack.c.l.b16 %v1106
        %v1294 = vunpack.c.h.b16 %v1106
        %v1295 = vunpack.c.l.b16 %v1107
        %v1296 = vunpack.c.l.b16 %v1108
        %v1297 = vunpack.c.h.b16 %v1108
        %v1298 = vunpack.c.l.b16 %v1109
        %v1299 = vunpack.c.l.b16 %v1110
        %v1300 = vunpack.c.h.b16 %v1110
        %v1301 = vunpack.c.l.b16 %v1111
        %v1302 = vunpack.c.l.b16 %v1112
        %v1303 = vunpack.c.h.b16 %v1112
        %v1304 = vunpack.c.l.b16 %v1113
        %v1305 = vunpack.c.l.b16 %v1114
        %v1306 = vunpack.c.h.b16 %v1114
        %v1307 = vunpack.c.l.b16 %v1115
        %v1308 = vunpack.c.l.b16 %v1116
        %v1309 = vunpack.c.h.b16 %v1116
        %v1310 = vunpack.c.l.b16 %v1117
        %v1311 = vunpack.c.l.b16 %v1118
        %v1312 = vunpack.c.h.b16 %v1118
        %v1313 = vunpack.c.l.b16 %v1119
        %v1314 = vunpack.c.l.b16 %v1120
        %v1315 = vunpack.c.h.b16 %v1120
        %v1316 = vunpack.c.l.b16 %v1121
        %v1317 = vunpack.c.l.b16 %v1122
        %v1318 = vunpack.c.h.b16 %v1122
        %v1319 = vunpack.c.l.b16 %v1123
        %v1320 = vunpack.c.l.b16 %v1124
        %v1321 = vunpack.c.h.b16 %v1124
        %v1322 = vunpack.c.l.b16 %v1125
        %v1323 = vunpack.c.l.b16 %v1126
        %v1324 = vunpack.c.h.b16 %v1126
        %v1325 = vunpack.c.l.b16 %v1127
        %v1326 = vunpack.c.l.b16 %v1128
        %v1327 = vunpack.c.h.b16 %v1128
        %v1328 = vunpack.c.l.b16 %v1129
        %v1329 = vunpack.c.l.b16 %v1130
        %v1330 = vunpack.c.h.b16 %v1130
        %v1331 = vunpack.c.l.b16 %v1131
        %v1332 = vunpack.c.l.b16 %v1132
        %v1333 = vunpack.c.h.b16 %v1132
        %v1334 = vunpack.c.l.b16 %v1133
        %v1335 = vunpack.c.l.b16 %v1134
        %v1336 = vunpack.c.h.b16 %v1134
        %v1337 = vunpack.c.l.b16 %v1135
        %v1338 = vunpack.c.l.b16 %v1136
        %v1339 = vunpack.c.h.b16 %v1136
        %v1340 = vunpack.c.l.b16 %v1137
        %v1341 = vunpack.c.l.b16 %v1138
        %v1342 = vunpack.c.h.b16 %v1138
        %v1343 = vunpack.c.l.b16 %v1139
        %v1344 = vunpack.c.l.b16 %v1140
        %v1345 = vunpack.c.h.b16 %v1140
        %v1346 = vunpack.c.l.b16 %v1141
        %v1347 = vunpack.c.l.b16 %v1142
        %v1348 = vunpack.c.h.b16 %v1142
        %v1349 = vunpack.c.l.b16 %v1143
        %v1350 = vunpack.c.l.b16 %v1144
        %v1351 = vunpack.c.h.b16 %v1144
        %v1352 = vunpack.c.l.b16 %v1145
        %v1353 = vunpack.c.l.b16 %v1146
        %v1354 = vunpack.c.h.b16 %v1146
        %v1355 = vunpack.c.l.b16 %v1147
        %v1356 = vunpack.c.l.b16 %v1148
        %v1357 = vunpack.c.h.b16 %v1148
        %v1358 = vunpack.c.l.b16 %v1149
        %v1359 = vpack.c.b16 %v1266, %v1263
        %v1360 = vpack.c.b16 %v1267, %v1264
        %v1361 = vpack.c.b16 %v1268, %v1265
        %v1362 = vpack.c.b16 %v1272, %v1269
        %v1363 = vpack.c.b16 %v1273, %v1270
        %v1364 = vpack.c.b16 %v1274, %v1271
        %v1365 = vpack.c.b16 %v1278, %v1275
        %v1366 = vpack.c.b16 %v1279, %v1276
        %v1367 = vpack.c.b16 %v1280, %v1277
        %v1368 = vpack.c.b16 %v1284, %v1281
        %v1369 = vpack.c.b16 %v1285, %v1282
        %v1370 = vpack.c.b16 %v1286, %v1283
        %v1371 = vpack.c.b16 %v1290, %v1287
        %v1372 = vpack.c.b16 %v1291, %v1288
        %v1373 = vpack.c.b16 %v1292, %v1289
        %v1374 = vpack.c.b16 %v1296, %v1293
        %v1375 = vpack.c.b16 %v1297, %v1294
        %v1376 = vpack.c.b16 %v1298, %v1295
        %v1377 = vpack.c.b16 %v1302, %v1299
        %v1378 = vpack.c.b16 %v1303, %v1300
        %v1379 = vpack.c.b16 %v1304, %v1301
        %v1380 = vpack.c.b16 %v1308, %v1305
        %v1381 = vpack.c.b16 %v1309, %v1306
        %v1382 = vpack.c.b16 %v1310, %v1307
        %v1383 = vpack.c.b16 %v1314, %v1311
        %v1384 = vpack.c.b16 %v1315, %v1312
        %v1385 = vpack.c.b16 %v1316, %v1313
        %v1386 = vpack.c.b16 %v1320, %v1317
        %v1387 = vpack.c.b16 %v1321, %v1318
        %v1388 = vpack.c.b16 %v1322, %v1319
        %v1389 = vpack.c.b16 %v1326, %v1323
        %v1390 = vpack.c.b16 %v1327, %v1324
        %v1391 = vpack.c.b16 %v1328, %v1325
        %v1392 = vpack.c.b16 %v1332, %v1329
        %v1393 = vpack.c.b16 %v1333, %v1330
        %v1394 = vpack.c.b16 %v1334, %v1331
        %v1395 = vpack.c.b16 %v1338, %v1335
        %v1396 = vpack.c.b16 %v1339, %v1336
        %v1397 = vpack.c.b16 %v1340, %v1337
        %v1398 = vpack.c.b16 %v1344, %v1341
        %v1399 = vpack.c.b16 %v1345, %v1342
        %v1400 = vpack.c.b16 %v1346, %v1343
        %v1401 = vpack.c.b16 %v1350, %v1347
        %v1402 = vpack.c.b16 %v1351, %v1348
        %v1403 = vpack.c.b16 %v1352, %v1349
        %v1404 = vpack.c.b16 %v1356, %v1353
        %v1405 = vpack.c.b16 %v1357, %v1354
        %v1406 = vpack.c.b16 %v1358, %v1355
        %v1503 = vunpack.c.l.b16 %v1151
        %v1504 = vunpack.c.l.b16 %v1152
        %v1505 = vunpack.c.l.b16 %v1153
        %v1506 = vunpack.c.l.b16 %v1154
        %v1507 = vunpack.c.l.b16 %v1155
        %v1508 = vunpack.c.l.b16 %v1156
        %v1509 = vunpack.c.l.b16 %v1157
        %v1510 = vunpack.c.l.b16 %v1158
        %v1511 = vunpack.c.l.b16 %v1159
        %v1512 = vunpack.c.l.b16 %v1160
        %v1513 = vunpack.c.l.b16 %v1161
        %v1514 = vunpack.c.l.b16 %v1162
        %v1515 = vunpack.c.l.b16 %v1163
        %v1516 = vunpack.c.l.b16 %v1164
        %v1517 = vunpack.c.l.b16 %v1165
        %v1518 = vunpack.c.l.b16 %v1166
        %v1519 = vunpack.c.l.b16 %v1167
        %v1520 = vunpack.c.l.b16 %v1168
        %v1521 = vunpack.c.l.b16 %v1169
        %v1522 = vunpack.c.l.b16 %v1170
        %v1523 = vunpack.c.l.b16 %v1171
        %v1524 = vunpack.c.l.b16 %v1172
        %v1525 = vunpack.c.l.b16 %v1173
        %v1526 = vunpack.c.l.b16 %v1174
        %v1527 = vunpack.c.l.b16 %v1175
        %v1528 = vunpack.c.l.b16 %v1176
        %v1529 = vunpack.c.l.b16 %v1177
        %v1530 = vunpack.c.l.b16 %v1178
        %v1531 = vunpack.c.l.b16 %v1179
        %v1532 = vunpack.c.l.b16 %v1180
        %v1533 = vunpack.c.l.b16 %v1181
        %v1534 = vunpack.c.l.b16 %v1182
        %v1535 = vunpack.c.l.b16 %v1183
        %v1536 = vunpack.c.l.b16 %v1184
        %v1537 = vunpack.c.l.b16 %v1185
        %v1538 = vunpack.c.l.b16 %v1186
        %v1539 = vunpack.c.l.b16 %v1187
        %v1540 = vunpack.c.l.b16 %v1188
        %v1541 = vunpack.c.l.b16 %v1189
        %v1542 = vunpack.c.l.b16 %v1190
        %v1543 = vunpack.c.l.b16 %v1191
        %v1544 = vunpack.c.l.b16 %v1192
        %v1545 = vunpack.c.l.b16 %v1193
        %v1546 = vunpack.c.l.b16 %v1194
        %v1547 = vunpack.c.l.b16 %v1195
        %v1548 = vunpack.c.l.b16 %v1196
        %v1549 = vunpack.c.l.b16 %v1197
        %v1550 = vunpack.c.l.b16 %v1198
        %v1551 = vpack.c.b16 %v1504, %v1503
        %v1552 = vpack.c.b16 %v1506, %v1505
        %v1553 = vpack.c.b16 %v1508, %v1507
        %v1554 = vpack.c.b16 %v1510, %v1509
        %v1555 = vpack.c.b16 %v1512, %v1511
        %v1556 = vpack.c.b16 %v1514, %v1513
        %v1557 = vpack.c.b16 %v1516, %v1515
        %v1558 = vpack.c.b16 %v1518, %v1517
        %v1559 = vpack.c.b16 %v1520, %v1519
        %v1560 = vpack.c.b16 %v1522, %v1521
        %v1561 = vpack.c.b16 %v1524, %v1523
        %v1562 = vpack.c.b16 %v1526, %v1525
        %v1563 = vpack.c.b16 %v1528, %v1527
        %v1564 = vpack.c.b16 %v1530, %v1529
        %v1565 = vpack.c.b16 %v1532, %v1531
        %v1566 = vpack.c.b16 %v1534, %v1533
        %v1567 = vpack.c.b16 %v1536, %v1535
        %v1568 = vpack.c.b16 %v1538, %v1537
        %v1569 = vpack.c.b16 %v1540, %v1539
        %v1570 = vpack.c.b16 %v1542, %v1541
        %v1571 = vpack.c.b16 %v1544, %v1543
        %v1572 = vpack.c.b16 %v1546, %v1545
        %v1573 = vpack.c.b16 %v1548, %v1547
        %v1574 = vpack.c.b16 %v1550, %v1549
        %1599 = vmatpush.bf16.msra.mxu0 %v1558
        %1600 = vmatpush.bf16.msra.mxu0 %v1557
        %1601 = vmatpush.bf16.msra.mxu0 %v1556
        %1602 = vmatpush.bf16.msra.mxu0 %v1555
        %1603 = vmatpush.bf16.msra.mxu0 %v1554
        %1604 = vmatpush.bf16.msra.mxu0 %v1553
        %1605 = vmatpush.bf16.msra.mxu0 %v1552
        %1606 = vmatpush.bf16.msra.mxu0 %v1551
        %1607 = vmatmul.bf16.gmra.mxu0 %v1359
        %v1608 = vpop.f32.mrf.mxu0
        %v1609 = vadd.f32 0.0, %v1608
        %v1610 = vpop.f32.mrf.mxu0
        %v1611 = vadd.f32 0.0, %v1610
        %1612 = vmatmul.bf16.gmra.mxu0 %v1362
        %v1613 = vpop.f32.mrf.mxu0
        %v1614 = vadd.f32 0.0, %v1613
        %v1615 = vpop.f32.mrf.mxu0
        %v1616 = vadd.f32 0.0, %v1615
        %1617 = vmatmul.bf16.gmra.mxu0 %v1365
        %v1618 = vpop.f32.mrf.mxu0
        %v1619 = vadd.f32 0.0, %v1618
        %v1620 = vpop.f32.mrf.mxu0
        %v1621 = vadd.f32 0.0, %v1620
        %1622 = vmatmul.bf16.gmra.mxu0 %v1368
        %v1623 = vpop.f32.mrf.mxu0
        %v1624 = vadd.f32 0.0, %v1623
        %v1625 = vpop.f32.mrf.mxu0
        %v1626 = vadd.f32 0.0, %v1625
        %1627 = vmatmul.bf16.gmra.mxu0 %v1371
        %v1628 = vpop.f32.mrf.mxu0
        %v1629 = vadd.f32 0.0, %v1628
        %v1630 = vpop.f32.mrf.mxu0
        %v1631 = vadd.f32 0.0, %v1630
        %1632 = vmatmul.bf16.gmra.mxu0 %v1374
        %v1633 = vpop.f32.mrf.mxu0
        %v1634 = vadd.f32 0.0, %v1633
        %v1635 = vpop.f32.mrf.mxu0
        %v1636 = vadd.f32 0.0, %v1635
        %1637 = vmatmul.bf16.gmra.mxu0 %v1377
        %v1638 = vpop.f32.mrf.mxu0
        %v1639 = vadd.f32 0.0, %v1638
        %v1640 = vpop.f32.mrf.mxu0
        %v1641 = vadd.f32 0.0, %v1640
        %1642 = vmatmul.bf16.gmra.mxu0 %v1380
        %v1643 = vpop.f32.mrf.mxu0
        %v1644 = vadd.f32 0.0, %v1643
        %v1645 = vpop.f32.mrf.mxu0
        %v1646 = vadd.f32 0.0, %v1645
        %1647 = vmatmul.bf16.gmra.mxu0 %v1383
        %v1648 = vpop.f32.mrf.mxu0
        %v1649 = vadd.f32 0.0, %v1648
        %v1650 = vpop.f32.mrf.mxu0
        %v1651 = vadd.f32 0.0, %v1650
        %1652 = vmatmul.bf16.gmra.mxu0 %v1386
        %v1653 = vpop.f32.mrf.mxu0
        %v1654 = vadd.f32 0.0, %v1653
        %v1655 = vpop.f32.mrf.mxu0
        %v1656 = vadd.f32 0.0, %v1655
        %1657 = vmatmul.bf16.gmra.mxu0 %v1389
        %v1658 = vpop.f32.mrf.mxu0
        %v1659 = vadd.f32 0.0, %v1658
        %v1660 = vpop.f32.mrf.mxu0
        %v1661 = vadd.f32 0.0, %v1660
        %1662 = vmatmul.bf16.gmra.mxu0 %v1392
        %v1663 = vpop.f32.mrf.mxu0
        %v1664 = vadd.f32 0.0, %v1663
        %v1665 = vpop.f32.mrf.mxu0
        %v1666 = vadd.f32 0.0, %v1665
        %1667 = vmatmul.bf16.gmra.mxu0 %v1395
        %v1668 = vpop.f32.mrf.mxu0
        %v1669 = vadd.f32 0.0, %v1668
        %v1670 = vpop.f32.mrf.mxu0
        %v1671 = vadd.f32 0.0, %v1670
        %1672 = vmatmul.bf16.gmra.mxu0 %v1398
        %v1673 = vpop.f32.mrf.mxu0
        %v1674 = vadd.f32 0.0, %v1673
        %v1675 = vpop.f32.mrf.mxu0
        %v1676 = vadd.f32 0.0, %v1675
        %1677 = vmatmul.bf16.gmra.mxu0 %v1401
        %v1678 = vpop.f32.mrf.mxu0
        %v1679 = vadd.f32 0.0, %v1678
        %v1680 = vpop.f32.mrf.mxu0
        %v1681 = vadd.f32 0.0, %v1680
        %1682 = vmatmul.bf16.gmra.mxu0 %v1404
        %v1683 = vpop.f32.mrf.mxu0
        %v1684 = vadd.f32 0.0, %v1683
        %v1685 = vpop.f32.mrf.mxu0
        %v1686 = vadd.f32 0.0, %v1685
        %1687 = vdwg.mxu0
        %1688 = vmatpush.bf16.msra.mxu0 %v1566
        %1689 = vmatpush.bf16.msra.mxu0 %v1565
        %1690 = vmatpush.bf16.msra.mxu0 %v1564
        %1691 = vmatpush.bf16.msra.mxu0 %v1563
        %1692 = vmatpush.bf16.msra.mxu0 %v1562
        %1693 = vmatpush.bf16.msra.mxu0 %v1561
        %1694 = vmatpush.bf16.msra.mxu0 %v1560
        %1695 = vmatpush.bf16.msra.mxu0 %v1559
        %1696 = vmatmul.bf16.gmra.mxu0 %v1360
        %v1697 = vpop.f32.mrf.mxu0
        %v1698 = vadd.f32 %v1609, %v1697
        %v1699 = vpop.f32.mrf.mxu0
        %v1700 = vadd.f32 %v1611, %v1699
        %1701 = vmatmul.bf16.gmra.mxu0 %v1363
        %v1702 = vpop.f32.mrf.mxu0
        %v1703 = vadd.f32 %v1614, %v1702
        %v1704 = vpop.f32.mrf.mxu0
        %v1705 = vadd.f32 %v1616, %v1704
        %1706 = vmatmul.bf16.gmra.mxu0 %v1366
        %v1707 = vpop.f32.mrf.mxu0
        %v1708 = vadd.f32 %v1619, %v1707
        %v1709 = vpop.f32.mrf.mxu0
        %v1710 = vadd.f32 %v1621, %v1709
        %1711 = vmatmul.bf16.gmra.mxu0 %v1369
        %v1712 = vpop.f32.mrf.mxu0
        %v1713 = vadd.f32 %v1624, %v1712
        %v1714 = vpop.f32.mrf.mxu0
        %v1715 = vadd.f32 %v1626, %v1714
        %1716 = vmatmul.bf16.gmra.mxu0 %v1372
        %v1717 = vpop.f32.mrf.mxu0
        %v1718 = vadd.f32 %v1629, %v1717
        %v1719 = vpop.f32.mrf.mxu0
        %v1720 = vadd.f32 %v1631, %v1719
        %1721 = vmatmul.bf16.gmra.mxu0 %v1375
        %v1722 = vpop.f32.mrf.mxu0
        %v1723 = vadd.f32 %v1634, %v1722
        %v1724 = vpop.f32.mrf.mxu0
        %v1725 = vadd.f32 %v1636, %v1724
        %1726 = vmatmul.bf16.gmra.mxu0 %v1378
        %v1727 = vpop.f32.mrf.mxu0
        %v1728 = vadd.f32 %v1639, %v1727
        %v1729 = vpop.f32.mrf.mxu0
        %v1730 = vadd.f32 %v1641, %v1729
        %1731 = vmatmul.bf16.gmra.mxu0 %v1381
        %v1732 = vpop.f32.mrf.mxu0
        %v1733 = vadd.f32 %v1644, %v1732
        %v1734 = vpop.f32.mrf.mxu0
        %v1735 = vadd.f32 %v1646, %v1734
        %1736 = vmatmul.bf16.gmra.mxu0 %v1384
        %v1737 = vpop.f32.mrf.mxu0
        %v1738 = vadd.f32 %v1649, %v1737
        %v1739 = vpop.f32.mrf.mxu0
        %v1740 = vadd.f32 %v1651, %v1739
        %1741 = vmatmul.bf16.gmra.mxu0 %v1387
        %v1742 = vpop.f32.mrf.mxu0
        %v1743 = vadd.f32 %v1654, %v1742
        %v1744 = vpop.f32.mrf.mxu0
        %v1745 = vadd.f32 %v1656, %v1744
        %1746 = vmatmul.bf16.gmra.mxu0 %v1390
        %v1747 = vpop.f32.mrf.mxu0
        %v1748 = vadd.f32 %v1659, %v1747
        %v1749 = vpop.f32.mrf.mxu0
        %v1750 = vadd.f32 %v1661, %v1749
        %1751 = vmatmul.bf16.gmra.mxu0 %v1393
        %v1752 = vpop.f32.mrf.mxu0
        %v1753 = vadd.f32 %v1664, %v1752
        %v1754 = vpop.f32.mrf.mxu0
        %v1755 = vadd.f32 %v1666, %v1754
        %1756 = vmatmul.bf16.gmra.mxu0 %v1396
        %v1757 = vpop.f32.mrf.mxu0
        %v1758 = vadd.f32 %v1669, %v1757
        %v1759 = vpop.f32.mrf.mxu0
        %v1760 = vadd.f32 %v1671, %v1759
        %1761 = vmatmul.bf16.gmra.mxu0 %v1399
        %v1762 = vpop.f32.mrf.mxu0
        %v1763 = vadd.f32 %v1674, %v1762
        %v1764 = vpop.f32.mrf.mxu0
        %v1765 = vadd.f32 %v1676, %v1764
        %1766 = vmatmul.bf16.gmra.mxu0 %v1402
        %v1767 = vpop.f32.mrf.mxu0
        %v1768 = vadd.f32 %v1679, %v1767
        %v1769 = vpop.f32.mrf.mxu0
        %v1770 = vadd.f32 %v1681, %v1769
        %1771 = vmatmul.bf16.gmra.mxu0 %v1405
        %v1772 = vpop.f32.mrf.mxu0
        %v1773 = vadd.f32 %v1684, %v1772
        %v1774 = vpop.f32.mrf.mxu0
        %v1775 = vadd.f32 %v1686, %v1774
        %1776 = vdwg.mxu0
        %1777 = vmatpush.bf16.msra.mxu0 %v1574
        %1778 = vmatpush.bf16.msra.mxu0 %v1573
        %1779 = vmatpush.bf16.msra.mxu0 %v1572
        %1780 = vmatpush.bf16.msra.mxu0 %v1571
        %1781 = vmatpush.bf16.msra.mxu0 %v1570
        %1782 = vmatpush.bf16.msra.mxu0 %v1569
        %1783 = vmatpush.bf16.msra.mxu0 %v1568
        %1784 = vmatpush.bf16.msra.mxu0 %v1567
        %1785 = vmatmul.bf16.gmra.mxu0 %v1361
        %v1786 = vpop.f32.mrf.mxu0
        %v1787 = vadd.f32 %v1698, %v1786
        %v1788 = vpop.f32.mrf.mxu0
        %v1789 = vadd.f32 %v1700, %v1788
        %1790 = vmatmul.bf16.gmra.mxu0 %v1364
        %v1791 = vpop.f32.mrf.mxu0
        %v1792 = vadd.f32 %v1703, %v1791
        %v1793 = vpop.f32.mrf.mxu0
        %v1794 = vadd.f32 %v1705, %v1793
        %1795 = vmatmul.bf16.gmra.mxu0 %v1367
        %v1796 = vpop.f32.mrf.mxu0
        %v1797 = vadd.f32 %v1708, %v1796
        %v1798 = vpop.f32.mrf.mxu0
        %v1799 = vadd.f32 %v1710, %v1798
        %1800 = vmatmul.bf16.gmra.mxu0 %v1370
        %v1801 = vpop.f32.mrf.mxu0
        %v1802 = vadd.f32 %v1713, %v1801
        %v1803 = vpop.f32.mrf.mxu0
        %v1804 = vadd.f32 %v1715, %v1803
        %1805 = vmatmul.bf16.gmra.mxu0 %v1373
        %v1806 = vpop.f32.mrf.mxu0
        %v1807 = vadd.f32 %v1718, %v1806
        %v1808 = vpop.f32.mrf.mxu0
        %v1809 = vadd.f32 %v1720, %v1808
        %1810 = vmatmul.bf16.gmra.mxu0 %v1376
        %v1811 = vpop.f32.mrf.mxu0
        %v1812 = vadd.f32 %v1723, %v1811
        %v1813 = vpop.f32.mrf.mxu0
        %v1814 = vadd.f32 %v1725, %v1813
        %1815 = vmatmul.bf16.gmra.mxu0 %v1379
        %v1816 = vpop.f32.mrf.mxu0
        %v1817 = vadd.f32 %v1728, %v1816
        %v1818 = vpop.f32.mrf.mxu0
        %v1819 = vadd.f32 %v1730, %v1818
        %1820 = vmatmul.bf16.gmra.mxu0 %v1382
        %v1821 = vpop.f32.mrf.mxu0
        %v1822 = vadd.f32 %v1733, %v1821
        %v1823 = vpop.f32.mrf.mxu0
        %v1824 = vadd.f32 %v1735, %v1823
        %1825 = vmatmul.bf16.gmra.mxu0 %v1385
        %v1826 = vpop.f32.mrf.mxu0
        %v1827 = vadd.f32 %v1738, %v1826
        %v1828 = vpop.f32.mrf.mxu0
        %v1829 = vadd.f32 %v1740, %v1828
        %1830 = vmatmul.bf16.gmra.mxu0 %v1388
        %v1831 = vpop.f32.mrf.mxu0
        %v1832 = vadd.f32 %v1743, %v1831
        %v1833 = vpop.f32.mrf.mxu0
        %v1834 = vadd.f32 %v1745, %v1833
        %1835 = vmatmul.bf16.gmra.mxu0 %v1391
        %v1836 = vpop.f32.mrf.mxu0
        %v1837 = vadd.f32 %v1748, %v1836
        %v1838 = vpop.f32.mrf.mxu0
        %v1839 = vadd.f32 %v1750, %v1838
        %1840 = vmatmul.bf16.gmra.mxu0 %v1394
        %v1841 = vpop.f32.mrf.mxu0
        %v1842 = vadd.f32 %v1753, %v1841
        %v1843 = vpop.f32.mrf.mxu0
        %v1844 = vadd.f32 %v1755, %v1843
        %1845 = vmatmul.bf16.gmra.mxu0 %v1397
        %v1846 = vpop.f32.mrf.mxu0
        %v1847 = vadd.f32 %v1758, %v1846
        %v1848 = vpop.f32.mrf.mxu0
        %v1849 = vadd.f32 %v1760, %v1848
        %1850 = vmatmul.bf16.gmra.mxu0 %v1400
        %v1851 = vpop.f32.mrf.mxu0
        %v1852 = vadd.f32 %v1763, %v1851
        %v1853 = vpop.f32.mrf.mxu0
        %v1854 = vadd.f32 %v1765, %v1853
        %1855 = vmatmul.bf16.gmra.mxu0 %v1403
        %v1856 = vpop.f32.mrf.mxu0
        %v1857 = vadd.f32 %v1768, %v1856
        %v1858 = vpop.f32.mrf.mxu0
        %v1859 = vadd.f32 %v1770, %v1858
        %1860 = vmatmul.bf16.gmra.mxu0 %v1406
        %v1861 = vpop.f32.mrf.mxu0
        %v1862 = vadd.f32 %v1773, %v1861
        %v1863 = vpop.f32.mrf.mxu0
        %v1864 = vadd.f32 %v1775, %v1863
        %1865 = vdwg.mxu0
        %v1930 = vunpack.c.l.b16 %v973
        %v1931 = vunpack.c.h.b16 %v973
        %v1932 = vunpack.c.l.b16 %v974
        %v1933 = vunpack.c.l.b16 %v975
        %v1934 = vunpack.c.h.b16 %v975
        %v1935 = vunpack.c.l.b16 %v976
        %v1936 = vunpack.c.l.b16 %v977
        %v1937 = vunpack.c.h.b16 %v977
        %v1938 = vunpack.c.l.b16 %v978
        %v1939 = vunpack.c.l.b16 %v979
        %v1940 = vunpack.c.h.b16 %v979
        %v1941 = vunpack.c.l.b16 %v980
        %v1942 = vunpack.c.l.b16 %v981
        %v1943 = vunpack.c.h.b16 %v981
        %v1944 = vunpack.c.l.b16 %v982
        %v1945 = vunpack.c.l.b16 %v983
        %v1946 = vunpack.c.h.b16 %v983
        %v1947 = vunpack.c.l.b16 %v984
        %v1948 = vunpack.c.l.b16 %v985
        %v1949 = vunpack.c.h.b16 %v985
        %v1950 = vunpack.c.l.b16 %v986
        %v1951 = vunpack.c.l.b16 %v987
        %v1952 = vunpack.c.h.b16 %v987
        %v1953 = vunpack.c.l.b16 %v988
        %v1954 = vunpack.c.l.b16 %v989
        %v1955 = vunpack.c.h.b16 %v989
        %v1956 = vunpack.c.l.b16 %v990
        %v1957 = vunpack.c.l.b16 %v991
        %v1958 = vunpack.c.h.b16 %v991
        %v1959 = vunpack.c.l.b16 %v992
        %v1960 = vunpack.c.l.b16 %v993
        %v1961 = vunpack.c.h.b16 %v993
        %v1962 = vunpack.c.l.b16 %v994
        %v1963 = vunpack.c.l.b16 %v995
        %v1964 = vunpack.c.h.b16 %v995
        %v1965 = vunpack.c.l.b16 %v996
        %v1966 = vunpack.c.l.b16 %v997
        %v1967 = vunpack.c.h.b16 %v997
        %v1968 = vunpack.c.l.b16 %v998
        %v1969 = vunpack.c.l.b16 %v999
        %v1970 = vunpack.c.h.b16 %v999
        %v1971 = vunpack.c.l.b16 %v1000
        %v1972 = vunpack.c.l.b16 %v1001
        %v1973 = vunpack.c.h.b16 %v1001
        %v1974 = vunpack.c.l.b16 %v1002
        %v1975 = vunpack.c.l.b16 %v1003
        %v1976 = vunpack.c.h.b16 %v1003
        %v1977 = vunpack.c.l.b16 %v1004
        %v1978 = vunpack.c.l.b16 %v1005
        %v1979 = vunpack.c.h.b16 %v1005
        %v1980 = vunpack.c.l.b16 %v1006
        %v1981 = vunpack.c.l.b16 %v1007
        %v1982 = vunpack.c.h.b16 %v1007
        %v1983 = vunpack.c.l.b16 %v1008
        %v1984 = vunpack.c.l.b16 %v1009
        %v1985 = vunpack.c.h.b16 %v1009
        %v1986 = vunpack.c.l.b16 %v1010
        %v1987 = vunpack.c.l.b16 %v1011
        %v1988 = vunpack.c.h.b16 %v1011
        %v1989 = vunpack.c.l.b16 %v1012
        %v1990 = vunpack.c.l.b16 %v1013
        %v1991 = vunpack.c.h.b16 %v1013
        %v1992 = vunpack.c.l.b16 %v1014
        %v1993 = vunpack.c.l.b16 %v1015
        %v1994 = vunpack.c.h.b16 %v1015
        %v1995 = vunpack.c.l.b16 %v1016
        %v1996 = vunpack.c.l.b16 %v1017
        %v1997 = vunpack.c.h.b16 %v1017
        %v1998 = vunpack.c.l.b16 %v1018
        %v1999 = vunpack.c.l.b16 %v1019
        %v2000 = vunpack.c.h.b16 %v1019
        %v2001 = vunpack.c.l.b16 %v1020
        %v2002 = vunpack.c.l.b16 %v1021
        %v2003 = vunpack.c.h.b16 %v1021
        %v2004 = vunpack.c.l.b16 %v1022
        %v2005 = vunpack.c.l.b16 %v1023
        %v2006 = vunpack.c.h.b16 %v1023
        %v2007 = vunpack.c.l.b16 %v1024
        %v2008 = vunpack.c.l.b16 %v1025
        %v2009 = vunpack.c.h.b16 %v1025
        %v2010 = vunpack.c.l.b16 %v1026
        %v2011 = vunpack.c.l.b16 %v1027
        %v2012 = vunpack.c.h.b16 %v1027
        %v2013 = vunpack.c.l.b16 %v1028
        %v2014 = vunpack.c.l.b16 %v1029
        %v2015 = vunpack.c.h.b16 %v1029
        %v2016 = vunpack.c.l.b16 %v1030
        %v2017 = vunpack.c.l.b16 %v1031
        %v2018 = vunpack.c.h.b16 %v1031
        %v2019 = vunpack.c.l.b16 %v1032
        %v2020 = vunpack.c.l.b16 %v1033
        %v2021 = vunpack.c.h.b16 %v1033
        %v2022 = vunpack.c.l.b16 %v1034
        %v2023 = vunpack.c.l.b16 %v1035
        %v2024 = vunpack.c.h.b16 %v1035
        %v2025 = vunpack.c.l.b16 %v1036
        %v2026 = vpack.c.b16 %v1933, %v1930
        %v2027 = vpack.c.b16 %v1934, %v1931
        %v2028 = vpack.c.b16 %v1935, %v1932
        %v2029 = vpack.c.b16 %v1939, %v1936
        %v2030 = vpack.c.b16 %v1940, %v1937
        %v2031 = vpack.c.b16 %v1941, %v1938
        %v2032 = vpack.c.b16 %v1945, %v1942
        %v2033 = vpack.c.b16 %v1946, %v1943
        %v2034 = vpack.c.b16 %v1947, %v1944
        %v2035 = vpack.c.b16 %v1951, %v1948
        %v2036 = vpack.c.b16 %v1952, %v1949
        %v2037 = vpack.c.b16 %v1953, %v1950
        %v2038 = vpack.c.b16 %v1957, %v1954
        %v2039 = vpack.c.b16 %v1958, %v1955
        %v2040 = vpack.c.b16 %v1959, %v1956
        %v2041 = vpack.c.b16 %v1963, %v1960
        %v2042 = vpack.c.b16 %v1964, %v1961
        %v2043 = vpack.c.b16 %v1965, %v1962
        %v2044 = vpack.c.b16 %v1969, %v1966
        %v2045 = vpack.c.b16 %v1970, %v1967
        %v2046 = vpack.c.b16 %v1971, %v1968
        %v2047 = vpack.c.b16 %v1975, %v1972
        %v2048 = vpack.c.b16 %v1976, %v1973
        %v2049 = vpack.c.b16 %v1977, %v1974
        %v2050 = vpack.c.b16 %v1981, %v1978
        %v2051 = vpack.c.b16 %v1982, %v1979
        %v2052 = vpack.c.b16 %v1983, %v1980
        %v2053 = vpack.c.b16 %v1987, %v1984
        %v2054 = vpack.c.b16 %v1988, %v1985
        %v2055 = vpack.c.b16 %v1989, %v1986
        %v2056 = vpack.c.b16 %v1993, %v1990
        %v2057 = vpack.c.b16 %v1994, %v1991
        %v2058 = vpack.c.b16 %v1995, %v1992
        %v2059 = vpack.c.b16 %v1999, %v1996
        %v2060 = vpack.c.b16 %v2000, %v1997
        %v2061 = vpack.c.b16 %v2001, %v1998
        %v2062 = vpack.c.b16 %v2005, %v2002
        %v2063 = vpack.c.b16 %v2006, %v2003
        %v2064 = vpack.c.b16 %v2007, %v2004
        %v2065 = vpack.c.b16 %v2011, %v2008
        %v2066 = vpack.c.b16 %v2012, %v2009
        %v2067 = vpack.c.b16 %v2013, %v2010
        %v2068 = vpack.c.b16 %v2017, %v2014
        %v2069 = vpack.c.b16 %v2018, %v2015
        %v2070 = vpack.c.b16 %v2019, %v2016
        %v2071 = vpack.c.b16 %v2023, %v2020
        %v2072 = vpack.c.b16 %v2024, %v2021
        %v2073 = vpack.c.b16 %v2025, %v2022
        %v2170 = vunpack.c.l.b16 %v1037
        %v2171 = vunpack.c.l.b16 %v1038
        %v2172 = vunpack.c.l.b16 %v1039
        %v2173 = vunpack.c.l.b16 %v1040
        %v2174 = vunpack.c.l.b16 %v1041
        %v2175 = vunpack.c.l.b16 %v1042
        %v2176 = vunpack.c.l.b16 %v1043
        %v2177 = vunpack.c.l.b16 %v1044
        %v2178 = vunpack.c.l.b16 %v1045
        %v2179 = vunpack.c.l.b16 %v1046
        %v2180 = vunpack.c.l.b16 %v1047
        %v2181 = vunpack.c.l.b16 %v1048
        %v2182 = vunpack.c.l.b16 %v1049
        %v2183 = vunpack.c.l.b16 %v1050
        %v2184 = vunpack.c.l.b16 %v1051
        %v2185 = vunpack.c.l.b16 %v1052
        %v2186 = vunpack.c.l.b16 %v1053
        %v2187 = vunpack.c.l.b16 %v1054
        %v2188 = vunpack.c.l.b16 %v1055
        %v2189 = vunpack.c.l.b16 %v1056
        %v2190 = vunpack.c.l.b16 %v1057
        %v2191 = vunpack.c.l.b16 %v1058
        %v2192 = vunpack.c.l.b16 %v1059
        %v2193 = vunpack.c.l.b16 %v1060
        %v2194 = vunpack.c.l.b16 %v1061
        %v2195 = vunpack.c.l.b16 %v1062
        %v2196 = vunpack.c.l.b16 %v1063
        %v2197 = vunpack.c.l.b16 %v1064
        %v2198 = vunpack.c.l.b16 %v1065
        %v2199 = vunpack.c.l.b16 %v1066
        %v2200 = vunpack.c.l.b16 %v1067
        %v2201 = vunpack.c.l.b16 %v1068
        %v2202 = vunpack.c.l.b16 %v1069
        %v2203 = vunpack.c.l.b16 %v1070
        %v2204 = vunpack.c.l.b16 %v1071
        %v2205 = vunpack.c.l.b16 %v1072
        %v2206 = vunpack.c.l.b16 %v1073
        %v2207 = vunpack.c.l.b16 %v1074
        %v2208 = vunpack.c.l.b16 %v1075
        %v2209 = vunpack.c.l.b16 %v1076
        %v2210 = vunpack.c.l.b16 %v1077
        %v2211 = vunpack.c.l.b16 %v1078
        %v2212 = vunpack.c.l.b16 %v1079
        %v2213 = vunpack.c.l.b16 %v1080
        %v2214 = vunpack.c.l.b16 %v1081
        %v2215 = vunpack.c.l.b16 %v1082
        %v2216 = vunpack.c.l.b16 %v1083
        %v2217 = vunpack.c.l.b16 %v1084
        %v2218 = vpack.c.b16 %v2171, %v2170
        %v2219 = vpack.c.b16 %v2173, %v2172
        %v2220 = vpack.c.b16 %v2175, %v2174
        %v2221 = vpack.c.b16 %v2177, %v2176
        %v2222 = vpack.c.b16 %v2179, %v2178
        %v2223 = vpack.c.b16 %v2181, %v2180
        %v2224 = vpack.c.b16 %v2183, %v2182
        %v2225 = vpack.c.b16 %v2185, %v2184
        %v2226 = vpack.c.b16 %v2187, %v2186
        %v2227 = vpack.c.b16 %v2189, %v2188
        %v2228 = vpack.c.b16 %v2191, %v2190
        %v2229 = vpack.c.b16 %v2193, %v2192
        %v2230 = vpack.c.b16 %v2195, %v2194
        %v2231 = vpack.c.b16 %v2197, %v2196
        %v2232 = vpack.c.b16 %v2199, %v2198
        %v2233 = vpack.c.b16 %v2201, %v2200
        %v2234 = vpack.c.b16 %v2203, %v2202
        %v2235 = vpack.c.b16 %v2205, %v2204
        %v2236 = vpack.c.b16 %v2207, %v2206
        %v2237 = vpack.c.b16 %v2209, %v2208
        %v2238 = vpack.c.b16 %v2211, %v2210
        %v2239 = vpack.c.b16 %v2213, %v2212
        %v2240 = vpack.c.b16 %v2215, %v2214
        %v2241 = vpack.c.b16 %v2217, %v2216
        %2266 = vmatpush.bf16.msra.mxu0 %v2225
        %2267 = vmatpush.bf16.msra.mxu0 %v2224
        %2268 = vmatpush.bf16.msra.mxu0 %v2223
        %2269 = vmatpush.bf16.msra.mxu0 %v2222
        %2270 = vmatpush.bf16.msra.mxu0 %v2221
        %2271 = vmatpush.bf16.msra.mxu0 %v2220
        %2272 = vmatpush.bf16.msra.mxu0 %v2219
        %2273 = vmatpush.bf16.msra.mxu0 %v2218
        %2274 = vmatmul.bf16.gmra.mxu0 %v2026
        %v2275 = vpop.f32.mrf.mxu0
        %v2276 = vadd.f32 %v1787, %v2275
        %v2277 = vpop.f32.mrf.mxu0
        %v2278 = vadd.f32 %v1789, %v2277
        %2279 = vmatmul.bf16.gmra.mxu0 %v2029
        %v2280 = vpop.f32.mrf.mxu0
        %v2281 = vadd.f32 %v1792, %v2280
        %v2282 = vpop.f32.mrf.mxu0
        %v2283 = vadd.f32 %v1794, %v2282
        %2284 = vmatmul.bf16.gmra.mxu0 %v2032
        %v2285 = vpop.f32.mrf.mxu0
        %v2286 = vadd.f32 %v1797, %v2285
        %v2287 = vpop.f32.mrf.mxu0
        %v2288 = vadd.f32 %v1799, %v2287
        %2289 = vmatmul.bf16.gmra.mxu0 %v2035
        %v2290 = vpop.f32.mrf.mxu0
        %v2291 = vadd.f32 %v1802, %v2290
        %v2292 = vpop.f32.mrf.mxu0
        %v2293 = vadd.f32 %v1804, %v2292
        %2294 = vmatmul.bf16.gmra.mxu0 %v2038
        %v2295 = vpop.f32.mrf.mxu0
        %v2296 = vadd.f32 %v1807, %v2295
        %v2297 = vpop.f32.mrf.mxu0
        %v2298 = vadd.f32 %v1809, %v2297
        %2299 = vmatmul.bf16.gmra.mxu0 %v2041
        %v2300 = vpop.f32.mrf.mxu0
        %v2301 = vadd.f32 %v1812, %v2300
        %v2302 = vpop.f32.mrf.mxu0
        %v2303 = vadd.f32 %v1814, %v2302
        %2304 = vmatmul.bf16.gmra.mxu0 %v2044
        %v2305 = vpop.f32.mrf.mxu0
        %v2306 = vadd.f32 %v1817, %v2305
        %v2307 = vpop.f32.mrf.mxu0
        %v2308 = vadd.f32 %v1819, %v2307
        %2309 = vmatmul.bf16.gmra.mxu0 %v2047
        %v2310 = vpop.f32.mrf.mxu0
        %v2311 = vadd.f32 %v1822, %v2310
        %v2312 = vpop.f32.mrf.mxu0
        %v2313 = vadd.f32 %v1824, %v2312
        %2314 = vmatmul.bf16.gmra.mxu0 %v2050
        %v2315 = vpop.f32.mrf.mxu0
        %v2316 = vadd.f32 %v1827, %v2315
        %v2317 = vpop.f32.mrf.mxu0
        %v2318 = vadd.f32 %v1829, %v2317
        %2319 = vmatmul.bf16.gmra.mxu0 %v2053
        %v2320 = vpop.f32.mrf.mxu0
        %v2321 = vadd.f32 %v1832, %v2320
        %v2322 = vpop.f32.mrf.mxu0
        %v2323 = vadd.f32 %v1834, %v2322
        %2324 = vmatmul.bf16.gmra.mxu0 %v2056
        %v2325 = vpop.f32.mrf.mxu0
        %v2326 = vadd.f32 %v1837, %v2325
        %v2327 = vpop.f32.mrf.mxu0
        %v2328 = vadd.f32 %v1839, %v2327
        %2329 = vmatmul.bf16.gmra.mxu0 %v2059
        %v2330 = vpop.f32.mrf.mxu0
        %v2331 = vadd.f32 %v1842, %v2330
        %v2332 = vpop.f32.mrf.mxu0
        %v2333 = vadd.f32 %v1844, %v2332
        %2334 = vmatmul.bf16.gmra.mxu0 %v2062
        %v2335 = vpop.f32.mrf.mxu0
        %v2336 = vadd.f32 %v1847, %v2335
        %v2337 = vpop.f32.mrf.mxu0
        %v2338 = vadd.f32 %v1849, %v2337
        %2339 = vmatmul.bf16.gmra.mxu0 %v2065
        %v2340 = vpop.f32.mrf.mxu0
        %v2341 = vadd.f32 %v1852, %v2340
        %v2342 = vpop.f32.mrf.mxu0
        %v2343 = vadd.f32 %v1854, %v2342
        %2344 = vmatmul.bf16.gmra.mxu0 %v2068
        %v2345 = vpop.f32.mrf.mxu0
        %v2346 = vadd.f32 %v1857, %v2345
        %v2347 = vpop.f32.mrf.mxu0
        %v2348 = vadd.f32 %v1859, %v2347
        %2349 = vmatmul.bf16.gmra.mxu0 %v2071
        %v2350 = vpop.f32.mrf.mxu0
        %v2351 = vadd.f32 %v1862, %v2350
        %v2352 = vpop.f32.mrf.mxu0
        %v2353 = vadd.f32 %v1864, %v2352
        %2354 = vdwg.mxu0
        %2355 = vmatpush.bf16.msra.mxu0 %v2233
        %2356 = vmatpush.bf16.msra.mxu0 %v2232
        %2357 = vmatpush.bf16.msra.mxu0 %v2231
        %2358 = vmatpush.bf16.msra.mxu0 %v2230
        %2359 = vmatpush.bf16.msra.mxu0 %v2229
        %2360 = vmatpush.bf16.msra.mxu0 %v2228
        %2361 = vmatpush.bf16.msra.mxu0 %v2227
        %2362 = vmatpush.bf16.msra.mxu0 %v2226
        %2363 = vmatmul.bf16.gmra.mxu0 %v2027
        %v2364 = vpop.f32.mrf.mxu0
        %v2365 = vadd.f32 %v2276, %v2364
        %v2366 = vpop.f32.mrf.mxu0
        %v2367 = vadd.f32 %v2278, %v2366
        %2368 = vmatmul.bf16.gmra.mxu0 %v2030
        %v2369 = vpop.f32.mrf.mxu0
        %v2370 = vadd.f32 %v2281, %v2369
        %v2371 = vpop.f32.mrf.mxu0
        %v2372 = vadd.f32 %v2283, %v2371
        %2373 = vmatmul.bf16.gmra.mxu0 %v2033
        %v2374 = vpop.f32.mrf.mxu0
        %v2375 = vadd.f32 %v2286, %v2374
        %v2376 = vpop.f32.mrf.mxu0
        %v2377 = vadd.f32 %v2288, %v2376
        %2378 = vmatmul.bf16.gmra.mxu0 %v2036
        %v2379 = vpop.f32.mrf.mxu0
        %v2380 = vadd.f32 %v2291, %v2379
        %v2381 = vpop.f32.mrf.mxu0
        %v2382 = vadd.f32 %v2293, %v2381
        %2383 = vmatmul.bf16.gmra.mxu0 %v2039
        %v2384 = vpop.f32.mrf.mxu0
        %v2385 = vadd.f32 %v2296, %v2384
        %v2386 = vpop.f32.mrf.mxu0
        %v2387 = vadd.f32 %v2298, %v2386
        %2388 = vmatmul.bf16.gmra.mxu0 %v2042
        %v2389 = vpop.f32.mrf.mxu0
        %v2390 = vadd.f32 %v2301, %v2389
        %v2391 = vpop.f32.mrf.mxu0
        %v2392 = vadd.f32 %v2303, %v2391
        %2393 = vmatmul.bf16.gmra.mxu0 %v2045
        %v2394 = vpop.f32.mrf.mxu0
        %v2395 = vadd.f32 %v2306, %v2394
        %v2396 = vpop.f32.mrf.mxu0
        %v2397 = vadd.f32 %v2308, %v2396
        %2398 = vmatmul.bf16.gmra.mxu0 %v2048
        %v2399 = vpop.f32.mrf.mxu0
        %v2400 = vadd.f32 %v2311, %v2399
        %v2401 = vpop.f32.mrf.mxu0
        %v2402 = vadd.f32 %v2313, %v2401
        %2403 = vmatmul.bf16.gmra.mxu0 %v2051
        %v2404 = vpop.f32.mrf.mxu0
        %v2405 = vadd.f32 %v2316, %v2404
        %v2406 = vpop.f32.mrf.mxu0
        %v2407 = vadd.f32 %v2318, %v2406
        %2408 = vmatmul.bf16.gmra.mxu0 %v2054
        %v2409 = vpop.f32.mrf.mxu0
        %v2410 = vadd.f32 %v2321, %v2409
        %v2411 = vpop.f32.mrf.mxu0
        %v2412 = vadd.f32 %v2323, %v2411
        %2413 = vmatmul.bf16.gmra.mxu0 %v2057
        %v2414 = vpop.f32.mrf.mxu0
        %v2415 = vadd.f32 %v2326, %v2414
        %v2416 = vpop.f32.mrf.mxu0
        %v2417 = vadd.f32 %v2328, %v2416
        %2418 = vmatmul.bf16.gmra.mxu0 %v2060
        %v2419 = vpop.f32.mrf.mxu0
        %v2420 = vadd.f32 %v2331, %v2419
        %v2421 = vpop.f32.mrf.mxu0
        %v2422 = vadd.f32 %v2333, %v2421
        %2423 = vmatmul.bf16.gmra.mxu0 %v2063
        %v2424 = vpop.f32.mrf.mxu0
        %v2425 = vadd.f32 %v2336, %v2424
        %v2426 = vpop.f32.mrf.mxu0
        %v2427 = vadd.f32 %v2338, %v2426
        %2428 = vmatmul.bf16.gmra.mxu0 %v2066
        %v2429 = vpop.f32.mrf.mxu0
        %v2430 = vadd.f32 %v2341, %v2429
        %v2431 = vpop.f32.mrf.mxu0
        %v2432 = vadd.f32 %v2343, %v2431
        %2433 = vmatmul.bf16.gmra.mxu0 %v2069
        %v2434 = vpop.f32.mrf.mxu0
        %v2435 = vadd.f32 %v2346, %v2434
        %v2436 = vpop.f32.mrf.mxu0
        %v2437 = vadd.f32 %v2348, %v2436
        %2438 = vmatmul.bf16.gmra.mxu0 %v2072
        %v2439 = vpop.f32.mrf.mxu0
        %v2440 = vadd.f32 %v2351, %v2439
        %v2441 = vpop.f32.mrf.mxu0
        %v2442 = vadd.f32 %v2353, %v2441
        %2443 = vdwg.mxu0
        %2444 = vmatpush.bf16.msra.mxu0 %v2241
        %2445 = vmatpush.bf16.msra.mxu0 %v2240
        %2446 = vmatpush.bf16.msra.mxu0 %v2239
        %2447 = vmatpush.bf16.msra.mxu0 %v2238
        %2448 = vmatpush.bf16.msra.mxu0 %v2237
        %2449 = vmatpush.bf16.msra.mxu0 %v2236
        %2450 = vmatpush.bf16.msra.mxu0 %v2235
        %2451 = vmatpush.bf16.msra.mxu0 %v2234
        %2452 = vmatmul.bf16.gmra.mxu0 %v2028
        %v2453 = vpop.f32.mrf.mxu0
        %v2454 = vadd.f32 %v2365, %v2453
        %v2455 = vpop.f32.mrf.mxu0
        %v2456 = vadd.f32 %v2367, %v2455
        %2457 = vmatmul.bf16.gmra.mxu0 %v2031
        %v2458 = vpop.f32.mrf.mxu0
        %v2459 = vadd.f32 %v2370, %v2458
        %v2460 = vpop.f32.mrf.mxu0
        %v2461 = vadd.f32 %v2372, %v2460
        %2462 = vmatmul.bf16.gmra.mxu0 %v2034
        %v2463 = vpop.f32.mrf.mxu0
        %v2464 = vadd.f32 %v2375, %v2463
        %v2465 = vpop.f32.mrf.mxu0
        %v2466 = vadd.f32 %v2377, %v2465
        %2467 = vmatmul.bf16.gmra.mxu0 %v2037
        %v2468 = vpop.f32.mrf.mxu0
        %v2469 = vadd.f32 %v2380, %v2468
        %v2470 = vpop.f32.mrf.mxu0
        %v2471 = vadd.f32 %v2382, %v2470
        %2472 = vmatmul.bf16.gmra.mxu0 %v2040
        %v2473 = vpop.f32.mrf.mxu0
        %v2474 = vadd.f32 %v2385, %v2473
        %v2475 = vpop.f32.mrf.mxu0
        %v2476 = vadd.f32 %v2387, %v2475
        %2477 = vmatmul.bf16.gmra.mxu0 %v2043
        %v2478 = vpop.f32.mrf.mxu0
        %v2479 = vadd.f32 %v2390, %v2478
        %v2480 = vpop.f32.mrf.mxu0
        %v2481 = vadd.f32 %v2392, %v2480
        %2482 = vmatmul.bf16.gmra.mxu0 %v2046
        %v2483 = vpop.f32.mrf.mxu0
        %v2484 = vadd.f32 %v2395, %v2483
        %v2485 = vpop.f32.mrf.mxu0
        %v2486 = vadd.f32 %v2397, %v2485
        %2487 = vmatmul.bf16.gmra.mxu0 %v2049
        %v2488 = vpop.f32.mrf.mxu0
        %v2489 = vadd.f32 %v2400, %v2488
        %v2490 = vpop.f32.mrf.mxu0
        %v2491 = vadd.f32 %v2402, %v2490
        %2492 = vmatmul.bf16.gmra.mxu0 %v2052
        %v2493 = vpop.f32.mrf.mxu0
        %v2494 = vadd.f32 %v2405, %v2493
        %v2495 = vpop.f32.mrf.mxu0
        %v2496 = vadd.f32 %v2407, %v2495
        %2497 = vmatmul.bf16.gmra.mxu0 %v2055
        %v2498 = vpop.f32.mrf.mxu0
        %v2499 = vadd.f32 %v2410, %v2498
        %v2500 = vpop.f32.mrf.mxu0
        %v2501 = vadd.f32 %v2412, %v2500
        %2502 = vmatmul.bf16.gmra.mxu0 %v2058
        %v2503 = vpop.f32.mrf.mxu0
        %v2504 = vadd.f32 %v2415, %v2503
        %v2505 = vpop.f32.mrf.mxu0
        %v2506 = vadd.f32 %v2417, %v2505
        %2507 = vmatmul.bf16.gmra.mxu0 %v2061
        %v2508 = vpop.f32.mrf.mxu0
        %v2509 = vadd.f32 %v2420, %v2508
        %v2510 = vpop.f32.mrf.mxu0
        %v2511 = vadd.f32 %v2422, %v2510
        %2512 = vmatmul.bf16.gmra.mxu0 %v2064
        %v2513 = vpop.f32.mrf.mxu0
        %v2514 = vadd.f32 %v2425, %v2513
        %v2515 = vpop.f32.mrf.mxu0
        %v2516 = vadd.f32 %v2427, %v2515
        %2517 = vmatmul.bf16.gmra.mxu0 %v2067
        %v2518 = vpop.f32.mrf.mxu0
        %v2519 = vadd.f32 %v2430, %v2518
        %v2520 = vpop.f32.mrf.mxu0
        %v2521 = vadd.f32 %v2432, %v2520
        %2522 = vmatmul.bf16.gmra.mxu0 %v2070
        %v2523 = vpop.f32.mrf.mxu0
        %v2524 = vadd.f32 %v2435, %v2523
        %v2525 = vpop.f32.mrf.mxu0
        %v2526 = vadd.f32 %v2437, %v2525
        %2527 = vmatmul.bf16.gmra.mxu0 %v2073
        %v2528 = vpop.f32.mrf.mxu0
        %v2529 = vadd.f32 %v2440, %v2528
        %v2530 = vpop.f32.mrf.mxu0
        %v2531 = vadd.f32 %v2442, %v2530
        %2532 = vdwg.mxu0
        %s2533 = scalar_lea.vmem [#allocation2], 48
        %v2534 = vld [vmem:[%s2533] sm:$0xff]
        %v2535 = vld [vmem:[%s2533 + $0x8] sm:$0xf]
        %v2536 = vld [vmem:[%s2533 + $0xc] sm:$0xff]
        %v2537 = vld [vmem:[%s2533 + $0x14] sm:$0xf]
        %v2538 = vld [vmem:[%s2533 + $0x18] sm:$0xff]
        %v2539 = vld [vmem:[%s2533 + $0x20] sm:$0xf]
        %v2540 = vld [vmem:[%s2533 + $0x24] sm:$0xff]
        %v2541 = vld [vmem:[%s2533 + $0x2c] sm:$0xf]
        %v2542 = vld [vmem:[%s2533 + $0x30] sm:$0xff]
        %v2543 = vld [vmem:[%s2533 + $0x38] sm:$0xf]
        %v2544 = vld [vmem:[%s2533 + $0x3c] sm:$0xff]
        %v2545 = vld [vmem:[%s2533 + $0x44] sm:$0xf]
        %v2546 = vld [vmem:[%s2533 + $0x48] sm:$0xff]
        %v2547 = vld [vmem:[%s2533 + $0x50] sm:$0xf]
        %v2548 = vld [vmem:[%s2533 + $0x54] sm:$0xff]
        %v2549 = vld [vmem:[%s2533 + $0x5c] sm:$0xf]
        %v2550 = vld [vmem:[%s2533 + $0x60] sm:$0xff]
        %v2551 = vld [vmem:[%s2533 + $0x68] sm:$0xf]
        %v2552 = vld [vmem:[%s2533 + $0x6c] sm:$0xff]
        %v2553 = vld [vmem:[%s2533 + $0x74] sm:$0xf]
        %v2554 = vld [vmem:[%s2533 + $0x78] sm:$0xff]
        %v2555 = vld [vmem:[%s2533 + $0x80] sm:$0xf]
        %v2556 = vld [vmem:[%s2533 + $0x84] sm:$0xff]
        %v2557 = vld [vmem:[%s2533 + $0x8c] sm:$0xf]
        %v2558 = vld [vmem:[%s2533 + $0x90] sm:$0xff]
        %v2559 = vld [vmem:[%s2533 + $0x98] sm:$0xf]
        %v2560 = vld [vmem:[%s2533 + $0x9c] sm:$0xff]
        %v2561 = vld [vmem:[%s2533 + $0xa4] sm:$0xf]
        %v2562 = vld [vmem:[%s2533 + $0xa8] sm:$0xff]
        %v2563 = vld [vmem:[%s2533 + $0xb0] sm:$0xf]
        %v2564 = vld [vmem:[%s2533 + $0xb4] sm:$0xff]
        %v2565 = vld [vmem:[%s2533 + $0xbc] sm:$0xf]
        %v2566 = vld [vmem:[%s2533 + $0xc0] sm:$0xff]
        %v2567 = vld [vmem:[%s2533 + $0xc8] sm:$0xf]
        %v2568 = vld [vmem:[%s2533 + $0xcc] sm:$0xff]
        %v2569 = vld [vmem:[%s2533 + $0xd4] sm:$0xf]
        %v2570 = vld [vmem:[%s2533 + $0xd8] sm:$0xff]
        %v2571 = vld [vmem:[%s2533 + $0xe0] sm:$0xf]
        %v2572 = vld [vmem:[%s2533 + $0xe4] sm:$0xff]
        %v2573 = vld [vmem:[%s2533 + $0xec] sm:$0xf]
        %v2574 = vld [vmem:[%s2533 + $0xf0] sm:$0xff]
        %v2575 = vld [vmem:[%s2533 + $0xf8] sm:$0xf]
        %v2576 = vld [vmem:[%s2533 + $0xfc] sm:$0xff]
        %v2577 = vld [vmem:[%s2533 + $0x104] sm:$0xf]
        %v2578 = vld [vmem:[%s2533 + $0x108] sm:$0xff]
        %v2579 = vld [vmem:[%s2533 + $0x110] sm:$0xf]
        %v2580 = vld [vmem:[%s2533 + $0x114] sm:$0xff]
        %v2581 = vld [vmem:[%s2533 + $0x11c] sm:$0xf]
        %v2582 = vld [vmem:[%s2533 + $0x120] sm:$0xff]
        %v2583 = vld [vmem:[%s2533 + $0x128] sm:$0xf]
        %v2584 = vld [vmem:[%s2533 + $0x12c] sm:$0xff]
        %v2585 = vld [vmem:[%s2533 + $0x134] sm:$0xf]
        %v2586 = vld [vmem:[%s2533 + $0x138] sm:$0xff]
        %v2587 = vld [vmem:[%s2533 + $0x140] sm:$0xf]
        %v2588 = vld [vmem:[%s2533 + $0x144] sm:$0xff]
        %v2589 = vld [vmem:[%s2533 + $0x14c] sm:$0xf]
        %v2590 = vld [vmem:[%s2533 + $0x150] sm:$0xff]
        %v2591 = vld [vmem:[%s2533 + $0x158] sm:$0xf]
        %v2592 = vld [vmem:[%s2533 + $0x15c] sm:$0xff]
        %v2593 = vld [vmem:[%s2533 + $0x164] sm:$0xf]
        %v2594 = vld [vmem:[%s2533 + $0x168] sm:$0xff]
        %v2595 = vld [vmem:[%s2533 + $0x170] sm:$0xf]
        %v2596 = vld [vmem:[%s2533 + $0x174] sm:$0xff]
        %v2597 = vld [vmem:[%s2533 + $0x17c] sm:$0xf]
        %s2598 = scalar_lea.vmem [#allocation9], 384
        %v2599 = vld [vmem:[%s2598] sm:$0xf]
        %v2600 = vld [vmem:[%s2598 + $0x4] sm:$0xf]
        %v2601 = vld [vmem:[%s2598 + $0x8] sm:$0xf]
        %v2602 = vld [vmem:[%s2598 + $0xc] sm:$0xf]
        %v2603 = vld [vmem:[%s2598 + $0x10] sm:$0xf]
        %v2604 = vld [vmem:[%s2598 + $0x14] sm:$0xf]
        %v2605 = vld [vmem:[%s2598 + $0x18] sm:$0xf]
        %v2606 = vld [vmem:[%s2598 + $0x1c] sm:$0xf]
        %v2607 = vld [vmem:[%s2598 + $0x20] sm:$0xf]
        %v2608 = vld [vmem:[%s2598 + $0x24] sm:$0xf]
        %v2609 = vld [vmem:[%s2598 + $0x28] sm:$0xf]
        %v2610 = vld [vmem:[%s2598 + $0x2c] sm:$0xf]
        %v2611 = vld [vmem:[%s2598 + $0x30] sm:$0xf]
        %v2612 = vld [vmem:[%s2598 + $0x34] sm:$0xf]
        %v2613 = vld [vmem:[%s2598 + $0x38] sm:$0xf]
        %v2614 = vld [vmem:[%s2598 + $0x3c] sm:$0xf]
        %v2615 = vld [vmem:[%s2598 + $0x40] sm:$0xf]
        %v2616 = vld [vmem:[%s2598 + $0x44] sm:$0xf]
        %v2617 = vld [vmem:[%s2598 + $0x48] sm:$0xf]
        %v2618 = vld [vmem:[%s2598 + $0x4c] sm:$0xf]
        %v2619 = vld [vmem:[%s2598 + $0x50] sm:$0xf]
        %v2620 = vld [vmem:[%s2598 + $0x54] sm:$0xf]
        %v2621 = vld [vmem:[%s2598 + $0x58] sm:$0xf]
        %v2622 = vld [vmem:[%s2598 + $0x5c] sm:$0xf]
        %v2623 = vld [vmem:[%s2598 + $0x60] sm:$0xf]
        %v2624 = vld [vmem:[%s2598 + $0x64] sm:$0xf]
        %v2625 = vld [vmem:[%s2598 + $0x68] sm:$0xf]
        %v2626 = vld [vmem:[%s2598 + $0x6c] sm:$0xf]
        %v2627 = vld [vmem:[%s2598 + $0x70] sm:$0xf]
        %v2628 = vld [vmem:[%s2598 + $0x74] sm:$0xf]
        %v2629 = vld [vmem:[%s2598 + $0x78] sm:$0xf]
        %v2630 = vld [vmem:[%s2598 + $0x7c] sm:$0xf]
        %v2631 = vld [vmem:[%s2598 + $0x80] sm:$0xf]
        %v2632 = vld [vmem:[%s2598 + $0x84] sm:$0xf]
        %v2633 = vld [vmem:[%s2598 + $0x88] sm:$0xf]
        %v2634 = vld [vmem:[%s2598 + $0x8c] sm:$0xf]
        %v2635 = vld [vmem:[%s2598 + $0x90] sm:$0xf]
        %v2636 = vld [vmem:[%s2598 + $0x94] sm:$0xf]
        %v2637 = vld [vmem:[%s2598 + $0x98] sm:$0xf]
        %v2638 = vld [vmem:[%s2598 + $0x9c] sm:$0xf]
        %v2639 = vld [vmem:[%s2598 + $0xa0] sm:$0xf]
        %v2640 = vld [vmem:[%s2598 + $0xa4] sm:$0xf]
        %v2641 = vld [vmem:[%s2598 + $0xa8] sm:$0xf]
        %v2642 = vld [vmem:[%s2598 + $0xac] sm:$0xf]
        %v2643 = vld [vmem:[%s2598 + $0xb0] sm:$0xf]
        %v2644 = vld [vmem:[%s2598 + $0xb4] sm:$0xf]
        %v2645 = vld [vmem:[%s2598 + $0xb8] sm:$0xf]
        %v2646 = vld [vmem:[%s2598 + $0xbc] sm:$0xf]
        %v2711 = vunpack.c.l.b16 %v2534
        %v2712 = vunpack.c.h.b16 %v2534
        %v2713 = vunpack.c.l.b16 %v2535
        %v2714 = vunpack.c.l.b16 %v2536
        %v2715 = vunpack.c.h.b16 %v2536
        %v2716 = vunpack.c.l.b16 %v2537
        %v2717 = vunpack.c.l.b16 %v2538
        %v2718 = vunpack.c.h.b16 %v2538
        %v2719 = vunpack.c.l.b16 %v2539
        %v2720 = vunpack.c.l.b16 %v2540
        %v2721 = vunpack.c.h.b16 %v2540
        %v2722 = vunpack.c.l.b16 %v2541
        %v2723 = vunpack.c.l.b16 %v2542
        %v2724 = vunpack.c.h.b16 %v2542
        %v2725 = vunpack.c.l.b16 %v2543
        %v2726 = vunpack.c.l.b16 %v2544
        %v2727 = vunpack.c.h.b16 %v2544
        %v2728 = vunpack.c.l.b16 %v2545
        %v2729 = vunpack.c.l.b16 %v2546
        %v2730 = vunpack.c.h.b16 %v2546
        %v2731 = vunpack.c.l.b16 %v2547
        %v2732 = vunpack.c.l.b16 %v2548
        %v2733 = vunpack.c.h.b16 %v2548
        %v2734 = vunpack.c.l.b16 %v2549
        %v2735 = vunpack.c.l.b16 %v2550
        %v2736 = vunpack.c.h.b16 %v2550
        %v2737 = vunpack.c.l.b16 %v2551
        %v2738 = vunpack.c.l.b16 %v2552
        %v2739 = vunpack.c.h.b16 %v2552
        %v2740 = vunpack.c.l.b16 %v2553
        %v2741 = vunpack.c.l.b16 %v2554
        %v2742 = vunpack.c.h.b16 %v2554
        %v2743 = vunpack.c.l.b16 %v2555
        %v2744 = vunpack.c.l.b16 %v2556
        %v2745 = vunpack.c.h.b16 %v2556
        %v2746 = vunpack.c.l.b16 %v2557
        %v2747 = vunpack.c.l.b16 %v2558
        %v2748 = vunpack.c.h.b16 %v2558
        %v2749 = vunpack.c.l.b16 %v2559
        %v2750 = vunpack.c.l.b16 %v2560
        %v2751 = vunpack.c.h.b16 %v2560
        %v2752 = vunpack.c.l.b16 %v2561
        %v2753 = vunpack.c.l.b16 %v2562
        %v2754 = vunpack.c.h.b16 %v2562
        %v2755 = vunpack.c.l.b16 %v2563
        %v2756 = vunpack.c.l.b16 %v2564
        %v2757 = vunpack.c.h.b16 %v2564
        %v2758 = vunpack.c.l.b16 %v2565
        %v2759 = vunpack.c.l.b16 %v2566
        %v2760 = vunpack.c.h.b16 %v2566
        %v2761 = vunpack.c.l.b16 %v2567
        %v2762 = vunpack.c.l.b16 %v2568
        %v2763 = vunpack.c.h.b16 %v2568
        %v2764 = vunpack.c.l.b16 %v2569
        %v2765 = vunpack.c.l.b16 %v2570
        %v2766 = vunpack.c.h.b16 %v2570
        %v2767 = vunpack.c.l.b16 %v2571
        %v2768 = vunpack.c.l.b16 %v2572
        %v2769 = vunpack.c.h.b16 %v2572
        %v2770 = vunpack.c.l.b16 %v2573
        %v2771 = vunpack.c.l.b16 %v2574
        %v2772 = vunpack.c.h.b16 %v2574
        %v2773 = vunpack.c.l.b16 %v2575
        %v2774 = vunpack.c.l.b16 %v2576
        %v2775 = vunpack.c.h.b16 %v2576
        %v2776 = vunpack.c.l.b16 %v2577
        %v2777 = vunpack.c.l.b16 %v2578
        %v2778 = vunpack.c.h.b16 %v2578
        %v2779 = vunpack.c.l.b16 %v2579
        %v2780 = vunpack.c.l.b16 %v2580
        %v2781 = vunpack.c.h.b16 %v2580
        %v2782 = vunpack.c.l.b16 %v2581
        %v2783 = vunpack.c.l.b16 %v2582
        %v2784 = vunpack.c.h.b16 %v2582
        %v2785 = vunpack.c.l.b16 %v2583
        %v2786 = vunpack.c.l.b16 %v2584
        %v2787 = vunpack.c.h.b16 %v2584
        %v2788 = vunpack.c.l.b16 %v2585
        %v2789 = vunpack.c.l.b16 %v2586
        %v2790 = vunpack.c.h.b16 %v2586
        %v2791 = vunpack.c.l.b16 %v2587
        %v2792 = vunpack.c.l.b16 %v2588
        %v2793 = vunpack.c.h.b16 %v2588
        %v2794 = vunpack.c.l.b16 %v2589
        %v2795 = vunpack.c.l.b16 %v2590
        %v2796 = vunpack.c.h.b16 %v2590
        %v2797 = vunpack.c.l.b16 %v2591
        %v2798 = vunpack.c.l.b16 %v2592
        %v2799 = vunpack.c.h.b16 %v2592
        %v2800 = vunpack.c.l.b16 %v2593
        %v2801 = vunpack.c.l.b16 %v2594
        %v2802 = vunpack.c.h.b16 %v2594
        %v2803 = vunpack.c.l.b16 %v2595
        %v2804 = vunpack.c.l.b16 %v2596
        %v2805 = vunpack.c.h.b16 %v2596
        %v2806 = vunpack.c.l.b16 %v2597
        %v2807 = vpack.c.b16 %v2714, %v2711
        %v2808 = vpack.c.b16 %v2715, %v2712
        %v2809 = vpack.c.b16 %v2716, %v2713
        %v2810 = vpack.c.b16 %v2720, %v2717
        %v2811 = vpack.c.b16 %v2721, %v2718
        %v2812 = vpack.c.b16 %v2722, %v2719
        %v2813 = vpack.c.b16 %v2726, %v2723
        %v2814 = vpack.c.b16 %v2727, %v2724
        %v2815 = vpack.c.b16 %v2728, %v2725
        %v2816 = vpack.c.b16 %v2732, %v2729
        %v2817 = vpack.c.b16 %v2733, %v2730
        %v2818 = vpack.c.b16 %v2734, %v2731
        %v2819 = vpack.c.b16 %v2738, %v2735
        %v2820 = vpack.c.b16 %v2739, %v2736
        %v2821 = vpack.c.b16 %v2740, %v2737
        %v2822 = vpack.c.b16 %v2744, %v2741
        %v2823 = vpack.c.b16 %v2745, %v2742
        %v2824 = vpack.c.b16 %v2746, %v2743
        %v2825 = vpack.c.b16 %v2750, %v2747
        %v2826 = vpack.c.b16 %v2751, %v2748
        %v2827 = vpack.c.b16 %v2752, %v2749
        %v2828 = vpack.c.b16 %v2756, %v2753
        %v2829 = vpack.c.b16 %v2757, %v2754
        %v2830 = vpack.c.b16 %v2758, %v2755
        %v2831 = vpack.c.b16 %v2762, %v2759
        %v2832 = vpack.c.b16 %v2763, %v2760
        %v2833 = vpack.c.b16 %v2764, %v2761
        %v2834 = vpack.c.b16 %v2768, %v2765
        %v2835 = vpack.c.b16 %v2769, %v2766
        %v2836 = vpack.c.b16 %v2770, %v2767
        %v2837 = vpack.c.b16 %v2774, %v2771
        %v2838 = vpack.c.b16 %v2775, %v2772
        %v2839 = vpack.c.b16 %v2776, %v2773
        %v2840 = vpack.c.b16 %v2780, %v2777
        %v2841 = vpack.c.b16 %v2781, %v2778
        %v2842 = vpack.c.b16 %v2782, %v2779
        %v2843 = vpack.c.b16 %v2786, %v2783
        %v2844 = vpack.c.b16 %v2787, %v2784
        %v2845 = vpack.c.b16 %v2788, %v2785
        %v2846 = vpack.c.b16 %v2792, %v2789
        %v2847 = vpack.c.b16 %v2793, %v2790
        %v2848 = vpack.c.b16 %v2794, %v2791
        %v2849 = vpack.c.b16 %v2798, %v2795
        %v2850 = vpack.c.b16 %v2799, %v2796
        %v2851 = vpack.c.b16 %v2800, %v2797
        %v2852 = vpack.c.b16 %v2804, %v2801
        %v2853 = vpack.c.b16 %v2805, %v2802
        %v2854 = vpack.c.b16 %v2806, %v2803
        %v2951 = vunpack.c.l.b16 %v2599
        %v2952 = vunpack.c.l.b16 %v2600
        %v2953 = vunpack.c.l.b16 %v2601
        %v2954 = vunpack.c.l.b16 %v2602
        %v2955 = vunpack.c.l.b16 %v2603
        %v2956 = vunpack.c.l.b16 %v2604
        %v2957 = vunpack.c.l.b16 %v2605
        %v2958 = vunpack.c.l.b16 %v2606
        %v2959 = vunpack.c.l.b16 %v2607
        %v2960 = vunpack.c.l.b16 %v2608
        %v2961 = vunpack.c.l.b16 %v2609
        %v2962 = vunpack.c.l.b16 %v2610
        %v2963 = vunpack.c.l.b16 %v2611
        %v2964 = vunpack.c.l.b16 %v2612
        %v2965 = vunpack.c.l.b16 %v2613
        %v2966 = vunpack.c.l.b16 %v2614
        %v2967 = vunpack.c.l.b16 %v2615
        %v2968 = vunpack.c.l.b16 %v2616
        %v2969 = vunpack.c.l.b16 %v2617
        %v2970 = vunpack.c.l.b16 %v2618
        %v2971 = vunpack.c.l.b16 %v2619
        %v2972 = vunpack.c.l.b16 %v2620
        %v2973 = vunpack.c.l.b16 %v2621
        %v2974 = vunpack.c.l.b16 %v2622
        %v2975 = vunpack.c.l.b16 %v2623
        %v2976 = vunpack.c.l.b16 %v2624
        %v2977 = vunpack.c.l.b16 %v2625
        %v2978 = vunpack.c.l.b16 %v2626
        %v2979 = vunpack.c.l.b16 %v2627
        %v2980 = vunpack.c.l.b16 %v2628
        %v2981 = vunpack.c.l.b16 %v2629
        %v2982 = vunpack.c.l.b16 %v2630
        %v2983 = vunpack.c.l.b16 %v2631
        %v2984 = vunpack.c.l.b16 %v2632
        %v2985 = vunpack.c.l.b16 %v2633
        %v2986 = vunpack.c.l.b16 %v2634
        %v2987 = vunpack.c.l.b16 %v2635
        %v2988 = vunpack.c.l.b16 %v2636
        %v2989 = vunpack.c.l.b16 %v2637
        %v2990 = vunpack.c.l.b16 %v2638
        %v2991 = vunpack.c.l.b16 %v2639
        %v2992 = vunpack.c.l.b16 %v2640
        %v2993 = vunpack.c.l.b16 %v2641
        %v2994 = vunpack.c.l.b16 %v2642
        %v2995 = vunpack.c.l.b16 %v2643
        %v2996 = vunpack.c.l.b16 %v2644
        %v2997 = vunpack.c.l.b16 %v2645
        %v2998 = vunpack.c.l.b16 %v2646
        %v2999 = vpack.c.b16 %v2952, %v2951
        %v3000 = vpack.c.b16 %v2954, %v2953
        %v3001 = vpack.c.b16 %v2956, %v2955
        %v3002 = vpack.c.b16 %v2958, %v2957
        %v3003 = vpack.c.b16 %v2960, %v2959
        %v3004 = vpack.c.b16 %v2962, %v2961
        %v3005 = vpack.c.b16 %v2964, %v2963
        %v3006 = vpack.c.b16 %v2966, %v2965
        %v3007 = vpack.c.b16 %v2968, %v2967
        %v3008 = vpack.c.b16 %v2970, %v2969
        %v3009 = vpack.c.b16 %v2972, %v2971
        %v3010 = vpack.c.b16 %v2974, %v2973
        %v3011 = vpack.c.b16 %v2976, %v2975
        %v3012 = vpack.c.b16 %v2978, %v2977
        %v3013 = vpack.c.b16 %v2980, %v2979
        %v3014 = vpack.c.b16 %v2982, %v2981
        %v3015 = vpack.c.b16 %v2984, %v2983
        %v3016 = vpack.c.b16 %v2986, %v2985
        %v3017 = vpack.c.b16 %v2988, %v2987
        %v3018 = vpack.c.b16 %v2990, %v2989
        %v3019 = vpack.c.b16 %v2992, %v2991
        %v3020 = vpack.c.b16 %v2994, %v2993
        %v3021 = vpack.c.b16 %v2996, %v2995
        %v3022 = vpack.c.b16 %v2998, %v2997
        %3047 = vmatpush.bf16.msra.mxu0 %v3006
        %3048 = vmatpush.bf16.msra.mxu0 %v3005
        %3049 = vmatpush.bf16.msra.mxu0 %v3004
        %3050 = vmatpush.bf16.msra.mxu0 %v3003
        %3051 = vmatpush.bf16.msra.mxu0 %v3002
        %3052 = vmatpush.bf16.msra.mxu0 %v3001
        %3053 = vmatpush.bf16.msra.mxu0 %v3000
        %3054 = vmatpush.bf16.msra.mxu0 %v2999
        %3055 = vmatmul.bf16.gmra.mxu0 %v2807
        %v3056 = vpop.f32.mrf.mxu0
        %v3057 = vadd.f32 0.0, %v3056
        %v3058 = vpop.f32.mrf.mxu0
        %v3059 = vadd.f32 0.0, %v3058
        %3060 = vmatmul.bf16.gmra.mxu0 %v2810
        %v3061 = vpop.f32.mrf.mxu0
        %v3062 = vadd.f32 0.0, %v3061
        %v3063 = vpop.f32.mrf.mxu0
        %v3064 = vadd.f32 0.0, %v3063
        %3065 = vmatmul.bf16.gmra.mxu0 %v2813
        %v3066 = vpop.f32.mrf.mxu0
        %v3067 = vadd.f32 0.0, %v3066
        %v3068 = vpop.f32.mrf.mxu0
        %v3069 = vadd.f32 0.0, %v3068
        %3070 = vmatmul.bf16.gmra.mxu0 %v2816
        %v3071 = vpop.f32.mrf.mxu0
        %v3072 = vadd.f32 0.0, %v3071
        %v3073 = vpop.f32.mrf.mxu0
        %v3074 = vadd.f32 0.0, %v3073
        %3075 = vmatmul.bf16.gmra.mxu0 %v2819
        %v3076 = vpop.f32.mrf.mxu0
        %v3077 = vadd.f32 0.0, %v3076
        %v3078 = vpop.f32.mrf.mxu0
        %v3079 = vadd.f32 0.0, %v3078
        %3080 = vmatmul.bf16.gmra.mxu0 %v2822
        %v3081 = vpop.f32.mrf.mxu0
        %v3082 = vadd.f32 0.0, %v3081
        %v3083 = vpop.f32.mrf.mxu0
        %v3084 = vadd.f32 0.0, %v3083
        %3085 = vmatmul.bf16.gmra.mxu0 %v2825
        %v3086 = vpop.f32.mrf.mxu0
        %v3087 = vadd.f32 0.0, %v3086
        %v3088 = vpop.f32.mrf.mxu0
        %v3089 = vadd.f32 0.0, %v3088
        %3090 = vmatmul.bf16.gmra.mxu0 %v2828
        %v3091 = vpop.f32.mrf.mxu0
        %v3092 = vadd.f32 0.0, %v3091
        %v3093 = vpop.f32.mrf.mxu0
        %v3094 = vadd.f32 0.0, %v3093
        %3095 = vmatmul.bf16.gmra.mxu0 %v2831
        %v3096 = vpop.f32.mrf.mxu0
        %v3097 = vadd.f32 0.0, %v3096
        %v3098 = vpop.f32.mrf.mxu0
        %v3099 = vadd.f32 0.0, %v3098
        %3100 = vmatmul.bf16.gmra.mxu0 %v2834
        %v3101 = vpop.f32.mrf.mxu0
        %v3102 = vadd.f32 0.0, %v3101
        %v3103 = vpop.f32.mrf.mxu0
        %v3104 = vadd.f32 0.0, %v3103
        %3105 = vmatmul.bf16.gmra.mxu0 %v2837
        %v3106 = vpop.f32.mrf.mxu0
        %v3107 = vadd.f32 0.0, %v3106
        %v3108 = vpop.f32.mrf.mxu0
        %v3109 = vadd.f32 0.0, %v3108
        %3110 = vmatmul.bf16.gmra.mxu0 %v2840
        %v3111 = vpop.f32.mrf.mxu0
        %v3112 = vadd.f32 0.0, %v3111
        %v3113 = vpop.f32.mrf.mxu0
        %v3114 = vadd.f32 0.0, %v3113
        %3115 = vmatmul.bf16.gmra.mxu0 %v2843
        %v3116 = vpop.f32.mrf.mxu0
        %v3117 = vadd.f32 0.0, %v3116
        %v3118 = vpop.f32.mrf.mxu0
        %v3119 = vadd.f32 0.0, %v3118
        %3120 = vmatmul.bf16.gmra.mxu0 %v2846
        %v3121 = vpop.f32.mrf.mxu0
        %v3122 = vadd.f32 0.0, %v3121
        %v3123 = vpop.f32.mrf.mxu0
        %v3124 = vadd.f32 0.0, %v3123
        %3125 = vmatmul.bf16.gmra.mxu0 %v2849
        %v3126 = vpop.f32.mrf.mxu0
        %v3127 = vadd.f32 0.0, %v3126
        %v3128 = vpop.f32.mrf.mxu0
        %v3129 = vadd.f32 0.0, %v3128
        %3130 = vmatmul.bf16.gmra.mxu0 %v2852
        %v3131 = vpop.f32.mrf.mxu0
        %v3132 = vadd.f32 0.0, %v3131
        %v3133 = vpop.f32.mrf.mxu0
        %v3134 = vadd.f32 0.0, %v3133
        %3135 = vdwg.mxu0
        %3136 = vmatpush.bf16.msra.mxu0 %v3014
        %3137 = vmatpush.bf16.msra.mxu0 %v3013
        %3138 = vmatpush.bf16.msra.mxu0 %v3012
        %3139 = vmatpush.bf16.msra.mxu0 %v3011
        %3140 = vmatpush.bf16.msra.mxu0 %v3010
        %3141 = vmatpush.bf16.msra.mxu0 %v3009
        %3142 = vmatpush.bf16.msra.mxu0 %v3008
        %3143 = vmatpush.bf16.msra.mxu0 %v3007
        %3144 = vmatmul.bf16.gmra.mxu0 %v2808
        %v3145 = vpop.f32.mrf.mxu0
        %v3146 = vadd.f32 %v3057, %v3145
        %v3147 = vpop.f32.mrf.mxu0
        %v3148 = vadd.f32 %v3059, %v3147
        %3149 = vmatmul.bf16.gmra.mxu0 %v2811
        %v3150 = vpop.f32.mrf.mxu0
        %v3151 = vadd.f32 %v3062, %v3150
        %v3152 = vpop.f32.mrf.mxu0
        %v3153 = vadd.f32 %v3064, %v3152
        %3154 = vmatmul.bf16.gmra.mxu0 %v2814
        %v3155 = vpop.f32.mrf.mxu0
        %v3156 = vadd.f32 %v3067, %v3155
        %v3157 = vpop.f32.mrf.mxu0
        %v3158 = vadd.f32 %v3069, %v3157
        %3159 = vmatmul.bf16.gmra.mxu0 %v2817
        %v3160 = vpop.f32.mrf.mxu0
        %v3161 = vadd.f32 %v3072, %v3160
        %v3162 = vpop.f32.mrf.mxu0
        %v3163 = vadd.f32 %v3074, %v3162
        %3164 = vmatmul.bf16.gmra.mxu0 %v2820
        %v3165 = vpop.f32.mrf.mxu0
        %v3166 = vadd.f32 %v3077, %v3165
        %v3167 = vpop.f32.mrf.mxu0
        %v3168 = vadd.f32 %v3079, %v3167
        %3169 = vmatmul.bf16.gmra.mxu0 %v2823
        %v3170 = vpop.f32.mrf.mxu0
        %v3171 = vadd.f32 %v3082, %v3170
        %v3172 = vpop.f32.mrf.mxu0
        %v3173 = vadd.f32 %v3084, %v3172
        %3174 = vmatmul.bf16.gmra.mxu0 %v2826
        %v3175 = vpop.f32.mrf.mxu0
        %v3176 = vadd.f32 %v3087, %v3175
        %v3177 = vpop.f32.mrf.mxu0
        %v3178 = vadd.f32 %v3089, %v3177
        %3179 = vmatmul.bf16.gmra.mxu0 %v2829
        %v3180 = vpop.f32.mrf.mxu0
        %v3181 = vadd.f32 %v3092, %v3180
        %v3182 = vpop.f32.mrf.mxu0
        %v3183 = vadd.f32 %v3094, %v3182
        %3184 = vmatmul.bf16.gmra.mxu0 %v2832
        %v3185 = vpop.f32.mrf.mxu0
        %v3186 = vadd.f32 %v3097, %v3185
        %v3187 = vpop.f32.mrf.mxu0
        %v3188 = vadd.f32 %v3099, %v3187
        %3189 = vmatmul.bf16.gmra.mxu0 %v2835
        %v3190 = vpop.f32.mrf.mxu0
        %v3191 = vadd.f32 %v3102, %v3190
        %v3192 = vpop.f32.mrf.mxu0
        %v3193 = vadd.f32 %v3104, %v3192
        %3194 = vmatmul.bf16.gmra.mxu0 %v2838
        %v3195 = vpop.f32.mrf.mxu0
        %v3196 = vadd.f32 %v3107, %v3195
        %v3197 = vpop.f32.mrf.mxu0
        %v3198 = vadd.f32 %v3109, %v3197
        %3199 = vmatmul.bf16.gmra.mxu0 %v2841
        %v3200 = vpop.f32.mrf.mxu0
        %v3201 = vadd.f32 %v3112, %v3200
        %v3202 = vpop.f32.mrf.mxu0
        %v3203 = vadd.f32 %v3114, %v3202
        %3204 = vmatmul.bf16.gmra.mxu0 %v2844
        %v3205 = vpop.f32.mrf.mxu0
        %v3206 = vadd.f32 %v3117, %v3205
        %v3207 = vpop.f32.mrf.mxu0
        %v3208 = vadd.f32 %v3119, %v3207
        %3209 = vmatmul.bf16.gmra.mxu0 %v2847
        %v3210 = vpop.f32.mrf.mxu0
        %v3211 = vadd.f32 %v3122, %v3210
        %v3212 = vpop.f32.mrf.mxu0
        %v3213 = vadd.f32 %v3124, %v3212
        %3214 = vmatmul.bf16.gmra.mxu0 %v2850
        %v3215 = vpop.f32.mrf.mxu0
        %v3216 = vadd.f32 %v3127, %v3215
        %v3217 = vpop.f32.mrf.mxu0
        %v3218 = vadd.f32 %v3129, %v3217
        %3219 = vmatmul.bf16.gmra.mxu0 %v2853
        %v3220 = vpop.f32.mrf.mxu0
        %v3221 = vadd.f32 %v3132, %v3220
        %v3222 = vpop.f32.mrf.mxu0
        %v3223 = vadd.f32 %v3134, %v3222
        %3224 = vdwg.mxu0
        %3225 = vmatpush.bf16.msra.mxu0 %v3022
        %3226 = vmatpush.bf16.msra.mxu0 %v3021
        %3227 = vmatpush.bf16.msra.mxu0 %v3020
        %3228 = vmatpush.bf16.msra.mxu0 %v3019
        %3229 = vmatpush.bf16.msra.mxu0 %v3018
        %3230 = vmatpush.bf16.msra.mxu0 %v3017
        %3231 = vmatpush.bf16.msra.mxu0 %v3016
        %3232 = vmatpush.bf16.msra.mxu0 %v3015
        %3233 = vmatmul.bf16.gmra.mxu0 %v2809
        %v3234 = vpop.f32.mrf.mxu0
        %v3235 = vadd.f32 %v3146, %v3234
        %v3236 = vpop.f32.mrf.mxu0
        %v3237 = vadd.f32 %v3148, %v3236
        %3238 = vmatmul.bf16.gmra.mxu0 %v2812
        %v3239 = vpop.f32.mrf.mxu0
        %v3240 = vadd.f32 %v3151, %v3239
        %v3241 = vpop.f32.mrf.mxu0
        %v3242 = vadd.f32 %v3153, %v3241
        %3243 = vmatmul.bf16.gmra.mxu0 %v2815
        %v3244 = vpop.f32.mrf.mxu0
        %v3245 = vadd.f32 %v3156, %v3244
        %v3246 = vpop.f32.mrf.mxu0
        %v3247 = vadd.f32 %v3158, %v3246
        %3248 = vmatmul.bf16.gmra.mxu0 %v2818
        %v3249 = vpop.f32.mrf.mxu0
        %v3250 = vadd.f32 %v3161, %v3249
        %v3251 = vpop.f32.mrf.mxu0
        %v3252 = vadd.f32 %v3163, %v3251
        %3253 = vmatmul.bf16.gmra.mxu0 %v2821
        %v3254 = vpop.f32.mrf.mxu0
        %v3255 = vadd.f32 %v3166, %v3254
        %v3256 = vpop.f32.mrf.mxu0
        %v3257 = vadd.f32 %v3168, %v3256
        %3258 = vmatmul.bf16.gmra.mxu0 %v2824
        %v3259 = vpop.f32.mrf.mxu0
        %v3260 = vadd.f32 %v3171, %v3259
        %v3261 = vpop.f32.mrf.mxu0
        %v3262 = vadd.f32 %v3173, %v3261
        %3263 = vmatmul.bf16.gmra.mxu0 %v2827
        %v3264 = vpop.f32.mrf.mxu0
        %v3265 = vadd.f32 %v3176, %v3264
        %v3266 = vpop.f32.mrf.mxu0
        %v3267 = vadd.f32 %v3178, %v3266
        %3268 = vmatmul.bf16.gmra.mxu0 %v2830
        %v3269 = vpop.f32.mrf.mxu0
        %v3270 = vadd.f32 %v3181, %v3269
        %v3271 = vpop.f32.mrf.mxu0
        %v3272 = vadd.f32 %v3183, %v3271
        %3273 = vmatmul.bf16.gmra.mxu0 %v2833
        %v3274 = vpop.f32.mrf.mxu0
        %v3275 = vadd.f32 %v3186, %v3274
        %v3276 = vpop.f32.mrf.mxu0
        %v3277 = vadd.f32 %v3188, %v3276
        %3278 = vmatmul.bf16.gmra.mxu0 %v2836
        %v3279 = vpop.f32.mrf.mxu0
        %v3280 = vadd.f32 %v3191, %v3279
        %v3281 = vpop.f32.mrf.mxu0
        %v3282 = vadd.f32 %v3193, %v3281
        %3283 = vmatmul.bf16.gmra.mxu0 %v2839
        %v3284 = vpop.f32.mrf.mxu0
        %v3285 = vadd.f32 %v3196, %v3284
        %v3286 = vpop.f32.mrf.mxu0
        %v3287 = vadd.f32 %v3198, %v3286
        %3288 = vmatmul.bf16.gmra.mxu0 %v2842
        %v3289 = vpop.f32.mrf.mxu0
        %v3290 = vadd.f32 %v3201, %v3289
        %v3291 = vpop.f32.mrf.mxu0
        %v3292 = vadd.f32 %v3203, %v3291
        %3293 = vmatmul.bf16.gmra.mxu0 %v2845
        %v3294 = vpop.f32.mrf.mxu0
        %v3295 = vadd.f32 %v3206, %v3294
        %v3296 = vpop.f32.mrf.mxu0
        %v3297 = vadd.f32 %v3208, %v3296
        %3298 = vmatmul.bf16.gmra.mxu0 %v2848
        %v3299 = vpop.f32.mrf.mxu0
        %v3300 = vadd.f32 %v3211, %v3299
        %v3301 = vpop.f32.mrf.mxu0
        %v3302 = vadd.f32 %v3213, %v3301
        %3303 = vmatmul.bf16.gmra.mxu0 %v2851
        %v3304 = vpop.f32.mrf.mxu0
        %v3305 = vadd.f32 %v3216, %v3304
        %v3306 = vpop.f32.mrf.mxu0
        %v3307 = vadd.f32 %v3218, %v3306
        %3308 = vmatmul.bf16.gmra.mxu0 %v2854
        %v3309 = vpop.f32.mrf.mxu0
        %v3310 = vadd.f32 %v3221, %v3309
        %v3311 = vpop.f32.mrf.mxu0
        %v3312 = vadd.f32 %v3223, %v3311
        %3313 = vdwg.mxu0
        %v3314 = vadd.f32 %v2454, %v3235
        %v3315 = vadd.f32 %v2456, %v3237
        %v3316 = vadd.f32 %v2459, %v3240
        %v3317 = vadd.f32 %v2461, %v3242
        %v3318 = vadd.f32 %v2464, %v3245
        %v3319 = vadd.f32 %v2466, %v3247
        %v3320 = vadd.f32 %v2469, %v3250
        %v3321 = vadd.f32 %v2471, %v3252
        %v3322 = vadd.f32 %v2474, %v3255
        %v3323 = vadd.f32 %v2476, %v3257
        %v3324 = vadd.f32 %v2479, %v3260
        %v3325 = vadd.f32 %v2481, %v3262
        %v3326 = vadd.f32 %v2484, %v3265
        %v3327 = vadd.f32 %v2486, %v3267
        %v3328 = vadd.f32 %v2489, %v3270
        %v3329 = vadd.f32 %v2491, %v3272
        %v3330 = vadd.f32 %v2494, %v3275
        %v3331 = vadd.f32 %v2496, %v3277
        %v3332 = vadd.f32 %v2499, %v3280
        %v3333 = vadd.f32 %v2501, %v3282
        %v3334 = vadd.f32 %v2504, %v3285
        %v3335 = vadd.f32 %v2506, %v3287
        %v3336 = vadd.f32 %v2509, %v3290
        %v3337 = vadd.f32 %v2511, %v3292
        %v3338 = vadd.f32 %v2514, %v3295
        %v3339 = vadd.f32 %v2516, %v3297
        %v3340 = vadd.f32 %v2519, %v3300
        %v3341 = vadd.f32 %v2521, %v3302
        %v3342 = vadd.f32 %v2524, %v3305
        %v3343 = vadd.f32 %v2526, %v3307
        %v3344 = vadd.f32 %v2529, %v3310
        %v3345 = vadd.f32 %v2531, %v3312
        %v3346 = vld [vmem:[%s470] sm:$0x1]
        %v3348 = vperm.slane %v3346, 0
        %v3350 = vmul.f32 %v3314, %v3348
        %v3351 = vmul.f32 %v3315, %v3348
        %v3352 = vmul.f32 %v3316, %v3348
        %v3353 = vmul.f32 %v3317, %v3348
        %v3354 = vmul.f32 %v3318, %v3348
        %v3355 = vmul.f32 %v3319, %v3348
        %v3356 = vmul.f32 %v3320, %v3348
        %v3357 = vmul.f32 %v3321, %v3348
        %v3358 = vmul.f32 %v3322, %v3348
        %v3359 = vmul.f32 %v3323, %v3348
        %v3360 = vmul.f32 %v3324, %v3348
        %v3361 = vmul.f32 %v3325, %v3348
        %v3362 = vmul.f32 %v3326, %v3348
        %v3363 = vmul.f32 %v3327, %v3348
        %v3364 = vmul.f32 %v3328, %v3348
        %v3365 = vmul.f32 %v3329, %v3348
        %v3366 = vmul.f32 %v3330, %v3348
        %v3367 = vmul.f32 %v3331, %v3348
        %v3368 = vmul.f32 %v3332, %v3348
        %v3369 = vmul.f32 %v3333, %v3348
        %v3370 = vmul.f32 %v3334, %v3348
        %v3371 = vmul.f32 %v3335, %v3348
        %v3372 = vmul.f32 %v3336, %v3348
        %v3373 = vmul.f32 %v3337, %v3348
        %v3374 = vmul.f32 %v3338, %v3348
        %v3375 = vmul.f32 %v3339, %v3348
        %v3376 = vmul.f32 %v3340, %v3348
        %v3377 = vmul.f32 %v3341, %v3348
        %v3378 = vmul.f32 %v3342, %v3348
        %v3379 = vmul.f32 %v3343, %v3348
        %v3380 = vmul.f32 %v3344, %v3348
        %v3381 = vmul.f32 %v3345, %v3348
        %v3382 = vld [vmem:[%s473] sm:$0x1]
        %v3384 = vperm.slane %v3382, 0
        %v3386 = vadd.f32 %v3350, %v3384
        %v3387 = vadd.f32 %v3351, %v3384
        %v3388 = vadd.f32 %v3352, %v3384
        %v3389 = vadd.f32 %v3353, %v3384
        %v3390 = vadd.f32 %v3354, %v3384
        %v3391 = vadd.f32 %v3355, %v3384
        %v3392 = vadd.f32 %v3356, %v3384
        %v3393 = vadd.f32 %v3357, %v3384
        %v3394 = vadd.f32 %v3358, %v3384
        %v3395 = vadd.f32 %v3359, %v3384
        %v3396 = vadd.f32 %v3360, %v3384
        %v3397 = vadd.f32 %v3361, %v3384
        %v3398 = vadd.f32 %v3362, %v3384
        %v3399 = vadd.f32 %v3363, %v3384
        %v3400 = vadd.f32 %v3364, %v3384
        %v3401 = vadd.f32 %v3365, %v3384
        %v3402 = vadd.f32 %v3366, %v3384
        %v3403 = vadd.f32 %v3367, %v3384
        %v3404 = vadd.f32 %v3368, %v3384
        %v3405 = vadd.f32 %v3369, %v3384
        %v3406 = vadd.f32 %v3370, %v3384
        %v3407 = vadd.f32 %v3371, %v3384
        %v3408 = vadd.f32 %v3372, %v3384
        %v3409 = vadd.f32 %v3373, %v3384
        %v3410 = vadd.f32 %v3374, %v3384
        %v3411 = vadd.f32 %v3375, %v3384
        %v3412 = vadd.f32 %v3376, %v3384
        %v3413 = vadd.f32 %v3377, %v3384
        %v3414 = vadd.f32 %v3378, %v3384
        %v3415 = vadd.f32 %v3379, %v3384
        %v3416 = vadd.f32 %v3380, %v3384
        %v3417 = vadd.f32 %v3381, %v3384
        %v3418 = vmax.f32 %v3386, 0.0
        %v3419 = vmax.f32 %v3387, 0.0
        %v3420 = vmax.f32 %v3388, 0.0
        %v3421 = vmax.f32 %v3389, 0.0
        %v3422 = vmax.f32 %v3390, 0.0
        %v3423 = vmax.f32 %v3391, 0.0
        %v3424 = vmax.f32 %v3392, 0.0
        %v3425 = vmax.f32 %v3393, 0.0
        %v3426 = vmax.f32 %v3394, 0.0
        %v3427 = vmax.f32 %v3395, 0.0
        %v3428 = vmax.f32 %v3396, 0.0
        %v3429 = vmax.f32 %v3397, 0.0
        %v3430 = vmax.f32 %v3398, 0.0
        %v3431 = vmax.f32 %v3399, 0.0
        %v3432 = vmax.f32 %v3400, 0.0
        %v3433 = vmax.f32 %v3401, 0.0
        %v3434 = vmax.f32 %v3402, 0.0
        %v3435 = vmax.f32 %v3403, 0.0
        %v3436 = vmax.f32 %v3404, 0.0
        %v3437 = vmax.f32 %v3405, 0.0
        %v3438 = vmax.f32 %v3406, 0.0
        %v3439 = vmax.f32 %v3407, 0.0
        %v3440 = vmax.f32 %v3408, 0.0
        %v3441 = vmax.f32 %v3409, 0.0
        %v3442 = vmax.f32 %v3410, 0.0
        %v3443 = vmax.f32 %v3411, 0.0
        %v3444 = vmax.f32 %v3412, 0.0
        %v3445 = vmax.f32 %v3413, 0.0
        %v3446 = vmax.f32 %v3414, 0.0
        %v3447 = vmax.f32 %v3415, 0.0
        %v3448 = vmax.f32 %v3416, 0.0
        %v3449 = vmax.f32 %v3417, 0.0
        %v3450 = vpack.c.bf16 %v3418, %v3418
        %v3451 = vpack.c.bf16 %v3419, %v3419
        %v3452 = vpack.c.bf16 %v3420, %v3420
        %v3453 = vpack.c.bf16 %v3421, %v3421
        %v3454 = vpack.c.bf16 %v3422, %v3422
        %v3455 = vpack.c.bf16 %v3423, %v3423
        %v3456 = vpack.c.bf16 %v3424, %v3424
        %v3457 = vpack.c.bf16 %v3425, %v3425
        %v3458 = vpack.c.bf16 %v3426, %v3426
        %v3459 = vpack.c.bf16 %v3427, %v3427
        %v3460 = vpack.c.bf16 %v3428, %v3428
        %v3461 = vpack.c.bf16 %v3429, %v3429
        %v3462 = vpack.c.bf16 %v3430, %v3430
        %v3463 = vpack.c.bf16 %v3431, %v3431
        %v3464 = vpack.c.bf16 %v3432, %v3432
        %v3465 = vpack.c.bf16 %v3433, %v3433
        %v3466 = vpack.c.bf16 %v3434, %v3434
        %v3467 = vpack.c.bf16 %v3435, %v3435
        %v3468 = vpack.c.bf16 %v3436, %v3436
        %v3469 = vpack.c.bf16 %v3437, %v3437
        %v3470 = vpack.c.bf16 %v3438, %v3438
        %v3471 = vpack.c.bf16 %v3439, %v3439
        %v3472 = vpack.c.bf16 %v3440, %v3440
        %v3473 = vpack.c.bf16 %v3441, %v3441
        %v3474 = vpack.c.bf16 %v3442, %v3442
        %v3475 = vpack.c.bf16 %v3443, %v3443
        %v3476 = vpack.c.bf16 %v3444, %v3444
        %v3477 = vpack.c.bf16 %v3445, %v3445
        %v3478 = vpack.c.bf16 %v3446, %v3446
        %v3479 = vpack.c.bf16 %v3447, %v3447
        %v3480 = vpack.c.bf16 %v3448, %v3448
        %v3481 = vpack.c.bf16 %v3449, %v3449
        %3482 = vst [vmem:[%s458] sm:$0xf] %v3450
        %3483 = vst [vmem:[%s458 + $0x4] sm:$0xf] %v3451
        %3484 = vst [vmem:[%s458 + $0x8] sm:$0xf] %v3452
        %3485 = vst [vmem:[%s458 + $0xc] sm:$0xf] %v3453
        %3486 = vst [vmem:[%s458 + $0x10] sm:$0xf] %v3454
        %3487 = vst [vmem:[%s458 + $0x14] sm:$0xf] %v3455
        %3488 = vst [vmem:[%s458 + $0x18] sm:$0xf] %v3456
        %3489 = vst [vmem:[%s458 + $0x1c] sm:$0xf] %v3457
        %3490 = vst [vmem:[%s458 + $0x20] sm:$0xf] %v3458
        %3491 = vst [vmem:[%s458 + $0x24] sm:$0xf] %v3459
        %3492 = vst [vmem:[%s458 + $0x28] sm:$0xf] %v3460
        %3493 = vst [vmem:[%s458 + $0x2c] sm:$0xf] %v3461
        %3494 = vst [vmem:[%s458 + $0x30] sm:$0xf] %v3462
        %3495 = vst [vmem:[%s458 + $0x34] sm:$0xf] %v3463
        %3496 = vst [vmem:[%s458 + $0x38] sm:$0xf] %v3464
        %3497 = vst [vmem:[%s458 + $0x3c] sm:$0xf] %v3465
        %3498 = vst [vmem:[%s458 + $0x40] sm:$0xf] %v3466
        %3499 = vst [vmem:[%s458 + $0x44] sm:$0xf] %v3467
        %3500 = vst [vmem:[%s458 + $0x48] sm:$0xf] %v3468
        %3501 = vst [vmem:[%s458 + $0x4c] sm:$0xf] %v3469
        %3502 = vst [vmem:[%s458 + $0x50] sm:$0xf] %v3470
        %3503 = vst [vmem:[%s458 + $0x54] sm:$0xf] %v3471
        %3504 = vst [vmem:[%s458 + $0x58] sm:$0xf] %v3472
        %3505 = vst [vmem:[%s458 + $0x5c] sm:$0xf] %v3473
        %3506 = vst [vmem:[%s458 + $0x60] sm:$0xf] %v3474
        %3507 = vst [vmem:[%s458 + $0x64] sm:$0xf] %v3475
        %3508 = vst [vmem:[%s458 + $0x68] sm:$0xf] %v3476
        %3509 = vst [vmem:[%s458 + $0x6c] sm:$0xf] %v3477
        %3510 = vst [vmem:[%s458 + $0x70] sm:$0xf] %v3478
        %3511 = vst [vmem:[%s458 + $0x74] sm:$0xf] %v3479
        %3512 = vst [vmem:[%s458 + $0x78] sm:$0xf] %v3480
        %3513 = vst [vmem:[%s458 + $0x7c] sm:$0xf] %v3481
        %s3514 = sand.u32 %s236, 1
        %s3515 = scalar_lea.sflag [#allocation5], %s3514
        %s3516 = sand.u32 %s236, 1
        %s3517 = smul.addr %s3516, 128
        %s3518 = scalar_lea.vmem [#allocation11], %s3517
        // Predicated region
        $region61: #{tpu_custom_call.1} parent=43 // pred_check
          %p3519 = pneg %p246
        $region62: #{tpu_custom_call.1} parent=43 // pred_check_branch
          %3521 = sbr.rel (%p3519) target = $region64
        $region63: #{tpu_custom_call.1} parent=43 // pred_region
          %s3522 = smul.u32 16, %s33
          %3524 = vsyncadd %s3515, 0
          %s3525 = smul.addr %s3522, 2
          %s3526 = sadd.s32 %s34, %s3525
          %s3527 = smul.addr %s32, 32
          %s3528 = sadd.s32 %s3526, %s3527
          %s3529 = smul.addr %s3528, 4
          %s3530 = scalar_lea.hbm %s6, %s3529
          %s3531 = sshll.u32 %s3518, 4
          %s3532 = int_to_ptr.vmem [resolvable:$true] %s3531
          %s3533 = sshll.u32 %s3530, 4
          %s3534 = int_to_ptr.hbm [resolvable:$true] %s3533
          %3539 = dma.vmem_to_hbm [thread:$0]  %s3532, 2048, %s3534, %s3515, 64, 64, 4
        $region64: #{tpu_custom_call.1} parent=43 // pred_fallthru
          _
      $region44: #{tpu_custom_call.1} parent=5 // pred_fallthru
        _
      %p3540 = scmp.le.s32.totalorder 2, %s22
      // Predicated region
      $region65: #{tpu_custom_call.1} parent=5 // pred_check
        %p3541 = pneg %p3540
      $region66: #{tpu_custom_call.1} parent=5 // pred_check_branch
        %3543 = sbr.rel (%p3541) target = $region68
      $region67: #{tpu_custom_call.1} parent=5 // pred_region
        %s3544 = ssub.s32 %s22, 2
        // Predicated region
        $region69: #{tpu_custom_call.1} parent=67 // pred_check
          %p3545 = pneg %p252
        $region70: #{tpu_custom_call.1} parent=67 // pred_check_branch
          %3547 = sbr.rel (%p3545) target = $region72
        $region71: #{tpu_custom_call.1} parent=67 // pred_region
          %s3548 = sand.u32 %s237, 1
          %s3549 = scalar_lea.sflag [#allocation5], %s3548
          %s3550 = sand.u32 %s237, 1
          %s3551 = smul.addr %s3550, 128
          %s3552 = scalar_lea.vmem [#allocation11], %s3551
          %3554 = dma.done %s3549, 2048
        $region72: #{tpu_custom_call.1} parent=67 // pred_fallthru
          _
      $region68: #{tpu_custom_call.1} parent=5 // pred_fallthru
        _
    $region6: #{tpu_custom_call.1} parent=1 // loop_footer
      %s26 = sadd.s32 1, %s22
    $region7: #{tpu_custom_call.1} parent=1 // loop_footer_branch
      %21 = sbr.rel target = $region3
    $region8: #{tpu_custom_call.1} parent=1 // loop_exit
      _
    %3555 = vsyncpa [#allocation4], 1
    %s3556 = scalar_lea.sflag [#allocation4], 1
    %3557 = vsyncpa %s3556, 1
    %3558 = vsyncpa [#allocation7], 1
    %s3559 = scalar_lea.sflag [#allocation7], 1
    %3560 = vsyncpa %s3559, 1
    %3561 = vsyncpa [#allocation10], 1
    %3562 = vsyncpa [#allocation5], 1
    %s3563 = scalar_lea.sflag [#allocation5], 1
    %3564 = vsyncpa %s3563, 1

</llo_original>
